<compile_context>
chip_gen: v6e
topology: v6e:2x2x1
jax: 0.10.0
libtpu: 0.0.40
codegen_flags: <defaults>
</compile_context>

<pallas_src>
import math
import functools

import numpy as np
import jax
import jax.numpy as jnp
from jax import lax
from jax.experimental import pallas as pl
from jax.experimental.pallas import tpu as pltpu


# ----------------------------- config --------------------------------------

# bf16 MXU operands (f32 accumulation) on every TPU generation.
MXU_DTYPE = jnp.bfloat16


def _vmem_limit_bytes():
    # Generation-aware scoped-VMEM cap: v7x has 64 MiB physical (leave
    # double-buffer + compiler headroom), v5e / v6e have 128 MiB.
    try:
        kind = jax.devices()[0].device_kind.lower()
    except Exception:
        return None
    if "v7" in kind or "7x" in kind:
        return 48 * 1024 * 1024
    if "v5" in kind or "v6" in kind:
        return 100 * 1024 * 1024
    return None


def _compiler_params():
    kw = dict(dimension_semantics=("arbitrary",))   # layer axis is a carried loop
    vl = _vmem_limit_bytes()
    if vl is not None:
        kw["vmem_limit_bytes"] = vl
    return pltpu.CompilerParams(**kw)


# ----------------------------- in-kernel math -------------------------------

def _elu(x):
    # torch.nn.ELU(alpha=1)
    return jnp.where(x > 0, x, jnp.exp(jnp.minimum(x, 0.0)) - 1.0)


def _silu(x):
    return x * jax.nn.sigmoid(x)


def _gelu_exact(x):
    # torch.nn.GELU() default (approximate='none')
    return 0.5 * x * (1.0 + lax.erf(x * (1.0 / math.sqrt(2.0))))


def _mxdot(a, b):
    """MXU matmul: bf16 operands, f32 accumulation."""
    return jnp.dot(a.astype(MXU_DTYPE), b.astype(MXU_DTYPE),
                   preferred_element_type=jnp.float32)


def _rmsnorm(x, alpha, beta, eps):
    # Matches torch: x / (x.std(keepdim=True) + eps) * alpha + beta
    # (std over ALL elements, unbiased).  Single pass, exact reciprocal
    # (one (1, E) divide per norm -> precision over approx).
    cnt = x.size
    s1 = jnp.sum(x)
    s2 = jnp.sum(x * x)
    var = (s2 - s1 * s1 / cnt) / (cnt - 1)
    std = jnp.sqrt(var)
    return x * (alpha / (std + eps)) + beta


def _embed_series(x3, w1, b1, w2, b2):
    # Embedding: Linear(1->depth) -> ELU -> Linear(depth->E); x3: (B, S, 1)
    B, S = x3.shape[0], x3.shape[1]
    h = _elu(x3 * w1 + b1)                                    # (B, S, depth)
    e = _mxdot(h.reshape(B * S, h.shape[-1]), w2) + b2        # (B*S, E)
    return e.reshape(B, S, -1)


def _deembed(x, dw1, db1, dw2, db2):
    # DeEmbedding: Linear(E->depth) -> ELU -> Linear(depth->1) -> Flatten(-2)
    # written so the output is lane-dense (B, T) instead of (B*T, 1).
    B, T, E = x.shape
    h = _elu(_mxdot(x.reshape(B * T, E), dw1) + db1)          # (B*T, depth)
    h3 = h.reshape(B, T, -1)
    return jnp.sum(h3 * dw2[:, 0][None, None, :], axis=-1) + db2[0, 0]   # (B, T)


# ----------------------------- decoder block (one layer) --------------------

def _decoder_body(x, s, wqkv, bqkv, wo, bo, w1, b1, w2, b2, norm,
                  dft_q, dft_k, dft_inv_t, *, num_heads, self_attn):
    B, Sx, E = x.shape
    Ss = s.shape[1]
    n = E // num_heads

    x2 = x.reshape(B * Sx, E)
    if self_attn:
        qkv2 = _mxdot(x2, wqkv) + bqkv                        # (B*Sx, 3E)
        q3 = qkv2[:, :E].reshape(B, Sx, E)
        k3 = qkv2[:, E:2 * E].reshape(B, Sx, E)
        v3 = qkv2[:, 2 * E:].reshape(B, Sx, E)
        Sq = Sx
    else:
        s2 = s.reshape(B * Ss, E)
        qk2 = _mxdot(s2, wqkv[:, :2 * E]) + bqkv[:, :2 * E]   # (B*Ss, 2E)
        q3 = qk2[:, :E].reshape(B, Ss, E)
        k3 = qk2[:, E:].reshape(B, Ss, E)
        v3 = (_mxdot(x2, wqkv[:, 2 * E:]) + bqkv[:, 2 * E:]).reshape(B, Sx, E)
        Sq = Ss

    # Per-head FFT attention.  The re/im swizzle lives in the constant DFT
    # matrices, so the loop body is: two aligned lane slices, two row stacks,
    # four matmuls, one magnitude.  wo is accumulated per head (no concat).
    acc = jnp.zeros((B * Sx, E), jnp.float32)
    for hi in range(num_heads):
        sl = slice(hi * n, (hi + 1) * n)
        q_h = q3[:, :, sl]                                    # (B, Sq, n)
        k_h = k3[:, :, sl]
        v_h = v3[:, :, sl]                                    # (B, Sx, n)

        # forward DFT (f32, precision-sensitive); lanes already swizzled:
        #   qf = [qf_re | qf_im | -qf_im | qf_re],  kf = [kf_re | kf_im]
        qf = jnp.dot(q_h.reshape(B * Sq, n), dft_q,
                     preferred_element_type=jnp.float32).reshape(B, Sq, 4 * n)
        kf = jnp.dot(k_h.reshape(B * Sq, n), dft_k,
                     preferred_element_type=jnp.float32).reshape(B, Sq, 2 * n)
        QQ = jnp.concatenate([qf[:, :, :2 * n], qf[:, :, 2 * n:]], axis=1)  # (B,2Sq,2n)
        KK = jnp.concatenate([kf[:, :, :n], kf[:, :, n:]], axis=1)          # (B,2Sq,n)

        # complex score (transposed), ONE batched matmul, 2*Sq-deep contraction
        a_t = lax.dot_general(KK, QQ, (((1,), (1,)), ((0,), (0,))),
                              preferred_element_type=jnp.float32)           # (B,n,2n)
        # inverse DFT in one matmul, then magnitude: mag_t[b, j', m] = |w[m, j']|
        bm = jnp.dot(a_t.reshape(B * n, 2 * n), dft_inv_t,
                     preferred_element_type=jnp.float32).reshape(B, n, 2 * n)
        mag_t = jnp.sqrt(bm[:, :, :n] ** 2 + bm[:, :, n:] ** 2)             # (B,n,n)

        # apply to values, result directly in natural (B, Sx, n) layout
        o_h = lax.dot_general(v_h.astype(MXU_DTYPE), mag_t.astype(MXU_DTYPE),
                              (((2,), (1,)), ((0,), (0,))),
                              preferred_element_type=jnp.float32)           # (B,Sx,n)
        # head-merge folded into the wo projection (per-head accumulate)
        acc = acc + _mxdot(o_h.reshape(B * Sx, n), wo[sl, :])               # (B*Sx,E)

    attn = (acc + bo).reshape(B, Sx, E) + x
    attn = _rmsnorm(attn, norm[0:1], norm[1:2], norm[2:3])
    # dropout: identity (eval semantics / p=0)

    hid = _gelu_exact(_mxdot(attn.reshape(B * Sx, E), w1) + b1)
    out = (_mxdot(hid, w2) + b2).reshape(B, Sx, E) + attn
    return _rmsnorm(out, norm[3:4], norm[4:5], norm[5:6])


# ----------------------------- fused stack kernels --------------------------

def encoder_stack_kernel(src_ref, sw1_ref, sb1_ref, sw2_ref, sb2_ref, pe_ref,
                         wqkv_ref, bqkv_ref, wo_ref, bo_ref,
                         w1_ref, b1_ref, w2_ref, b2_ref, norm_ref,
                         dftq_ref, dftk_ref, dfti_ref,
                         o_ref, act_ref, *, num_heads):
    l = pl.program_id(0)

    @pl.when(l == 0)
    def _():
        # fused: src Embedding (1 -> depth -> E) + positional encoding
        e = _embed_series(src_ref[...], sw1_ref[...], sb1_ref[...],
                          sw2_ref[...], sb2_ref[...])
        act_ref[...] = e + pe_ref[...][None]

    x = act_ref[...]
    y = _decoder_body(x, x, wqkv_ref[...], bqkv_ref[...], wo_ref[...], bo_ref[...],
                      w1_ref[...], b1_ref[...], w2_ref[...], b2_ref[...],
                      norm_ref[...], dftq_ref[...], dftk_ref[...], dfti_ref[...],
                      num_heads=num_heads, self_attn=True)
    act_ref[...] = y

    @pl.when(l == pl.num_programs(0) - 1)
    def _():
        o_ref[...] = y


def decoder_stack_kernel(trg_ref, lw1_ref, lb1_ref, lw2_ref, lb2_ref,
                         ew1_ref, eb1_ref, ew2_ref, eb2_ref, pe_ref, s_ref,
                         wqkv_ref, bqkv_ref, wo_ref, bo_ref,
                         w1_ref, b1_ref, w2_ref, b2_ref, norm_ref,
                         dftq_ref, dftk_ref, dfti_ref,
                         dw1_ref, db1_ref, dw2_ref, db2_ref,
                         o_ref, act_ref, *, num_heads):
    l = pl.program_id(0)

    @pl.when(l == 0)
    def _():
        # fused: tgt_linear (tgt -> hidden -> T) + trg Embedding + positional enc.
        t = _silu(_mxdot(trg_ref[...], lw1_ref[...]) + lb1_ref[...])
        t = _mxdot(t, lw2_ref[...]) + lb2_ref[...]            # (B, T)
        e = _embed_series(t[:, :, None], ew1_ref[...], eb1_ref[...],
                          ew2_ref[...], eb2_ref[...])
        act_ref[...] = e + pe_ref[...][None]

    y = _decoder_body(act_ref[...], s_ref[...],
                      wqkv_ref[...], bqkv_ref[...], wo_ref[...], bo_ref[...],
                      w1_ref[...], b1_ref[...], w2_ref[...], b2_ref[...],
                      norm_ref[...], dftq_ref[...], dftk_ref[...], dfti_ref[...],
                      num_heads=num_heads, self_attn=False)
    act_ref[...] = y

    @pl.when(l == pl.num_programs(0) - 1)
    def _():
        # fused DeEmbedding -> lane-dense (B, T) output
        o_ref[...] = _deembed(y, dw1_ref[...], db1_ref[...],
                              dw2_ref[...], db2_ref[...])


# ----------------------------- pallas_call wrappers --------------------------

def _const_spec(a):
    zeros = (0,) * a.ndim
    return pl.BlockSpec(tuple(a.shape), lambda l, _z=zeros: _z)


def _layer_spec(a):
    rest = tuple(a.shape[1:])
    zeros = (0,) * len(rest)
    return pl.BlockSpec((None,) + rest, lambda l, _z=zeros: (l,) + _z)


def _stack_cost(L, B, Sx, Ss, E, H, nh):
    n = E // nh
    per_layer = 2 * B * (
        Ss * E * 2 * E              # q, k projections
        + Sx * E * E                # v projection
        + nh * Ss * n * 6 * n       # forward DFTs (q -> 4n, k -> 2n)
        + nh * 2 * Ss * 2 * n * n   # complex score
        + nh * n * 2 * n * 2 * n    # inverse DFT
        + nh * Sx * n * n           # apply to values
        + Sx * E * E                # wo
        + 2 * Sx * E * H)           # MLP
    trans = B * Sx * (H + E) + B * nh * n * n
    weights_bytes = 4 * (4 * E * E + 2 * E * H + 11 * E)
    act_bytes = 4 * B * (Sx + Ss) * E
    return pl.CostEstimate(flops=int(L * per_layer),
                           transcendentals=int(L * trans),
                           bytes_accessed=int(L * weights_bytes + 2 * act_bytes))


def encoder_stack(src3, params, pe_src):
    enc = params['encoders']
    dq, dk, di = params['dft']
    se_w1, se_b1, se_w2, se_b2 = params['src_embed']
    nh = params['n_heads']
    B, S, _ = src3.shape
    E = params['embed_size']
    L = enc['wqkv'].shape[0]
    H = enc['w1'].shape[2]

    const_ops = (src3, se_w1, se_b1, se_w2, se_b2, pe_src)
    layer_ops = (enc['wqkv'], enc['bqkv'], enc['wo'], enc['bo'],
                 enc['w1'], enc['b1'], enc['w2'], enc['b2'], enc['norm'])
    tail_ops = (dq, dk, di)
    in_specs = ([_const_spec(a) for a in const_ops]
                + [_layer_spec(a) for a in layer_ops]
                + [_const_spec(a) for a in tail_ops])

    return pl.pallas_call(
        functools.partial(encoder_stack_kernel, num_heads=nh),
        out_shape=jax.ShapeDtypeStruct((B, S, E), jnp.float32),
        grid=(L,),
        in_specs=in_specs,
        out_specs=pl.BlockSpec((B, S, E), lambda l: (0, 0, 0)),
        scratch_shapes=[pltpu.VMEM((B, S, E), jnp.float32)],
        compiler_params=_compiler_params(),
        cost_estimate=_stack_cost(L, B, S, S, E, H, nh),
    )(*const_ops, *layer_ops, *tail_ops)


def decoder_stack(trg, src_out, params, pe_trg):
    dec = params['decoders']
    dq, dk, di = params['dft']
    lw1, lb1, lw2, lb2 = params['tgt_linear']
    ew1, eb1, ew2, eb2 = params['trg_embed']
    dw1, db1, dw2, db2 = params['de_embed']
    nh = params['n_heads']
    B = trg.shape[0]
    S = src_out.shape[1]
    E = params['embed_size']
    T = lw2.shape[1]
    L = dec['wqkv'].shape[0]
    H = dec['w1'].shape[2]

    const_ops = (trg, lw1, lb1, lw2, lb2, ew1, eb1, ew2, eb2, pe_trg, src_out)
    layer_ops = (dec['wqkv'], dec['bqkv'], dec['wo'], dec['bo'],
                 dec['w1'], dec['b1'], dec['w2'], dec['b2'], dec['norm'])
    tail_ops = (dq, dk, di, dw1, db1, dw2, db2)
    in_specs = ([_const_spec(a) for a in const_ops]
                + [_layer_spec(a) for a in layer_ops]
                + [_const_spec(a) for a in tail_ops])

    return pl.pallas_call(
        functools.partial(decoder_stack_kernel, num_heads=nh),
        out_shape=jax.ShapeDtypeStruct((B, T), jnp.float32),
        grid=(L,),
        in_specs=in_specs,
        out_specs=pl.BlockSpec((B, T), lambda l: (0, 0)),
        scratch_shapes=[pltpu.VMEM((B, T, E), jnp.float32)],
        compiler_params=_compiler_params(),
        cost_estimate=_stack_cost(L, B, T, S, E, H, nh),
    )(*const_ops, *layer_ops, *tail_ops)


# ----------------------------- parameters ----------------------------------

def linear_init(key, din, dout):
    kw, kb = jax.random.split(key)
    bound = 1.0 / math.sqrt(din)
    w = jax.random.uniform(kw, (din, dout), jnp.float32, -bound, bound)
    b = jax.random.uniform(kb, (1, dout), jnp.float32, -bound, bound)
    return w, b


def _layer_params(key, embed_dim, hidden_dim):
    ks = jax.random.split(key, 6)
    wq, bq = linear_init(ks[0], embed_dim, embed_dim)
    wk, bk = linear_init(ks[1], embed_dim, embed_dim)
    wv, bv = linear_init(ks[2], embed_dim, embed_dim)
    wo, bo = linear_init(ks[3], embed_dim, embed_dim)
    w1, b1 = linear_init(ks[4], embed_dim, hidden_dim)
    w2, b2 = linear_init(ks[5], hidden_dim, embed_dim)
    ones = jnp.ones((1, embed_dim), jnp.float32)
    zeros = jnp.zeros((1, embed_dim), jnp.float32)
    eps = jnp.full((1, embed_dim), 1e-6, jnp.float32)
    # rows: attn_norm (alpha, beta, eps), mlp_norm (alpha, beta, eps), 2 pad rows
    norm = jnp.concatenate([ones, zeros, eps, ones, zeros, eps, zeros, zeros], 0)
    return dict(wqkv=jnp.concatenate([wq, wk, wv], axis=1),
                bqkv=jnp.concatenate([bq, bk, bv], axis=1),
                wo=wo, bo=bo, w1=w1, b1=b1, w2=w2, b2=b2, norm=norm)


def _stack(layer_dicts):
    return {k: jnp.stack([d[k] for d in layer_dicts], axis=0)
            for k in layer_dicts[0].keys()}


def _dft_matrices(n):
    jk = np.arange(n)[:, None] * np.arange(n)[None, :]
    ang = 2.0 * np.pi * jk / n
    cos = np.cos(ang).astype(np.float32)
    sin = np.sin(ang).astype(np.float32)
    # q-forward with folded swizzle: q @ [cos|-sin|sin|cos] = [re|im|-im|re]
    dft_q = np.concatenate([cos, -sin, sin, cos], axis=1)                  # (n, 4n)
    # k-forward: k @ [cos|-sin] = [re|im]
    dft_k = np.concatenate([cos, -sin], axis=1)                            # (n, 2n)
    # transposed inverse DFT applied to [score_re ; score_im] stacked lanes
    dft_inv_t = np.concatenate(
        [np.concatenate([cos, sin], axis=1),
         np.concatenate([-sin, cos], axis=1)], axis=0) / n                 # (2n, 2n)
    return (jnp.asarray(dft_q), jnp.asarray(dft_k),
            jnp.asarray(dft_inv_t, jnp.float32))


def positional_encoding(max_pos, d_model):
    pe = np.zeros((max_pos, d_model), np.float32)
    position = np.arange(0, max_pos, dtype=np.float32)[:, None]
    div_term = np.exp(np.arange(0, d_model, 2, dtype=np.float32)
                      * (-np.log(10000.0) / d_model))
    pe[:, 0::2] = np.sin(position * div_term)
    pe[:, 1::2] = np.cos(position * div_term)
    return jnp.asarray(pe[None])   # (1, max_pos, d_model)


def transformer_params(key, *, embed_size, hidden_size, n_heads, embed_depth,
                       pe_size, tgt_size, output_size, n_encoders, n_decoders):
    keys = jax.random.split(key, 8 + n_encoders + n_decoders)
    se_w1, se_b1 = linear_init(keys[0], 1, embed_depth)          # src_embed
    se_w2, se_b2 = linear_init(keys[1], embed_depth, embed_size)
    tl_w1, tl_b1 = linear_init(keys[2], tgt_size, hidden_size)   # tgt_linear
    tl_w2, tl_b2 = linear_init(keys[3], hidden_size, output_size)
    te_w1, te_b1 = linear_init(keys[4], 1, embed_depth)          # trg_embed
    te_w2, te_b2 = linear_init(keys[5], embed_depth, embed_size)
    de_w1, de_b1 = linear_init(keys[6], embed_size, embed_depth) # de_embed
    de_w2, de_b2 = linear_init(keys[7], embed_depth, 1)
    enc = [_layer_params(keys[8 + i], embed_size, hidden_size)
           for i in range(n_encoders)]
    dec = [_layer_params(keys[8 + n_encoders + i], embed_size, hidden_size)
           for i in range(n_decoders)]
    return dict(
        src_embed=(se_w1, se_b1, se_w2, se_b2),
        tgt_linear=(tl_w1, tl_b1, tl_w2, tl_b2),
        trg_embed=(te_w1, te_b1, te_w2, te_b2),
        de_embed=(de_w1, de_b1, de_w2, de_b2),
        encoders=_stack(enc), decoders=_stack(dec),
        dft=_dft_matrices(embed_size // n_heads),
        pe=positional_encoding(pe_size, embed_size),
        n_heads=n_heads, embed_size=embed_size)


# ----------------------------- forward (glue) ------------------------------

def transformer_forward(params, src, trg):
    B, S = src.shape
    T = params['tgt_linear'][2].shape[1]
    pe = params['pe']                                          # (1, P, E)
    # one pallas_call for the whole encoder stack (src embed + PE fused in)
    src_out = encoder_stack(src[..., None], params, pe[0, :S])
    # one pallas_call for the whole decoder stack (trg path + de-embed fused in)
    return decoder_stack(trg, src_out, params, pe[0, :T])


# ----------------------------- pure-JAX f32 reference ----------------------

def _ref_rmsnorm(x, alpha, beta, eps):
    mu = jnp.mean(x)
    var = jnp.sum((x - mu) ** 2) / (x.size - 1)
    return x / (jnp.sqrt(var) + eps) * alpha + beta


def _ref_decoder(x, s, lp, num_heads):
    B, Sx, E = x.shape
    n = E // num_heads
    wqkv, bqkv = lp['wqkv'], lp['bqkv']
    q = s @ wqkv[:, :E] + bqkv[0, :E]
    k = s @ wqkv[:, E:2 * E] + bqkv[0, E:2 * E]
    v = x @ wqkv[:, 2 * E:] + bqkv[0, 2 * E:]

    def heads(t):
        return jnp.swapaxes(t, 1, 2).reshape(B, num_heads, n, t.shape[1])

    q4, k4, v4 = heads(q), heads(k), heads(v)
    qf = jnp.fft.fft(q4, axis=-2)
    kf = jnp.fft.fft(k4, axis=-2)
    score = jnp.einsum('bhnd,bhmd->bhnm', qf, kf)
    w = jnp.abs(jnp.fft.ifft(score, axis=-2))
    o = jnp.einsum('bhnm,bhmd->bhnd', w, v4)
    o = jnp.swapaxes(o.reshape(B, E, Sx), 1, 2)
    attn = o @ lp['wo'] + lp['bo'][0] + x
    attn = _ref_rmsnorm(attn, lp['norm'][0], lp['norm'][1], lp['norm'][2])
    hid = _gelu_exact(attn @ lp['w1'] + lp['b1'][0])
    out = hid @ lp['w2'] + lp['b2'][0] + attn
    return _ref_rmsnorm(out, lp['norm'][3], lp['norm'][4], lp['norm'][5])


def reference_forward(params, src, trg):
    nh = params['n_heads']
    B, S = src.shape
    pe = params['pe']

    def embed(x, w1, b1, w2, b2):
        h = _elu(x[..., None] * w1[0] + b1[0])
        return h @ w2 + b2[0]

    se = embed(src, *params['src_embed']) + pe[0, :S]
    lw1, lb1, lw2, lb2 = params['tgt_linear']
    t = _silu(trg @ lw1 + lb1[0]) @ lw2 + lb2[0]
    T = t.shape[1]
    te = embed(t, *params['trg_embed']) + pe[0, :T]

    def layer(stack, li):
        return {k: v[li] for k, v in stack.items()}

    out = se
    for li in range(params['encoders']['wqkv'].shape[0]):
        out = _ref_decoder(out, out, layer(params['encoders'], li), nh)
    src_out = out
    out = te
    for li in range(params['decoders']['wqkv'].shape[0]):
        out = _ref_decoder(out, src_out, layer(params['decoders'], li), nh)

    dw1, db1, dw2, db2 = params['de_embed']
    h = _elu(out @ dw1 + db1[0])
    return (h @ dw2 + db2[0])[..., 0]


# ----------------------------- main -----------------------------------------

if __name__ == "__main__":
    B = 2
    S_SRC = 8
    EMBED_SIZE = 8
    HIDDEN_SIZE = 16
    N_HEADS = 2
    EMBED_DEPTH = 16
    TGT_SIZE = 12
    OUTPUT_SIZE = 4
    PE_SIZE = 16          # PositionalEncoding "batch_size" arg == max positions
    N_ENC = 2             # exercise the fused layer-stack grid (carry across layers)
    N_DEC = 2

    key = jax.random.PRNGKey(0)
    k_src, k_trg, k_par = jax.random.split(key, 3)
    src = jax.random.normal(k_src, (B, S_SRC), jnp.float32)
    trg = jax.random.normal(k_trg, (B, TGT_SIZE), jnp.float32)

    params = transformer_params(
        k_par, embed_size=EMBED_SIZE, hidden_size=HIDDEN_SIZE, n_heads=N_HEADS,
        embed_depth=EMBED_DEPTH, pe_size=PE_SIZE, tgt_size=TGT_SIZE,
        output_size=OUTPUT_SIZE, n_encoders=N_ENC, n_decoders=N_DEC)

    out = transformer_forward(params, src, trg)
    out = jax.block_until_ready(out)
    assert out.shape == (B, OUTPUT_SIZE), out.shape
    assert bool(jnp.all(jnp.isfinite(out)))

    # validate against an independent pure-JAX f32 reference (uses jnp.fft);
    # relative check (with an absolute floor) sized for the bf16 MXU-operand
    # path accumulated over 4 layers.
    ref = reference_forward(params, src, trg)
    scale = max(1.0, float(jnp.max(jnp.abs(ref))))
    err = float(jnp.max(jnp.abs(out - ref)))
    assert err <= 0.25 * scale, f"kernel/reference mismatch: err {err}, scale {scale}"

    print("KERNEL_OK")
</pallas_src>

<mosaic_0001>
module attributes {stable_mosaic.version = 11 : i64} {
  func.func @encoder_stack_kernel(%arg0: i32, %arg1: memref<2x8x1xf32, #tpu.memory_space<vmem>>, %arg2: memref<1x16xf32, #tpu.memory_space<vmem>>, %arg3: memref<1x16xf32, #tpu.memory_space<vmem>>, %arg4: memref<16x8xf32, #tpu.memory_space<vmem>>, %arg5: memref<1x8xf32, #tpu.memory_space<vmem>>, %arg6: memref<8x8xf32, #tpu.memory_space<vmem>>, %arg7: memref<1x8x24xf32, #tpu.memory_space<vmem>>, %arg8: memref<1x1x24xf32, #tpu.memory_space<vmem>>, %arg9: memref<1x8x8xf32, #tpu.memory_space<vmem>>, %arg10: memref<1x1x8xf32, #tpu.memory_space<vmem>>, %arg11: memref<1x8x16xf32, #tpu.memory_space<vmem>>, %arg12: memref<1x1x16xf32, #tpu.memory_space<vmem>>, %arg13: memref<1x16x8xf32, #tpu.memory_space<vmem>>, %arg14: memref<1x1x8xf32, #tpu.memory_space<vmem>>, %arg15: memref<1x8x8xf32, #tpu.memory_space<vmem>>, %arg16: memref<4x16xf32, #tpu.memory_space<vmem>>, %arg17: memref<4x8xf32, #tpu.memory_space<vmem>>, %arg18: memref<8x8xf32, #tpu.memory_space<vmem>>, %arg19: memref<2x8x8xf32, #tpu.memory_space<vmem>>, %arg20: memref<2x8x8xf32, #tpu.memory_space<vmem>>) attributes {dimension_semantics = [#tpu.dimension_semantics<arbitrary>], iteration_bounds = array<i64: 2>, scalar_prefetch = 0 : i64, scratch_operands = 1 : i64, tpu.core_type = #tpu.core_type<tc>, window_params = [{pipeline_mode = #tpu.pipeline_mode<synchronous>, transform_indices = @transform_0, window_bounds = array<i64: 2, 8, 1>}, {pipeline_mode = #tpu.pipeline_mode<synchronous>, transform_indices = @transform_1, window_bounds = array<i64: 1, 16>}, {pipeline_mode = #tpu.pipeline_mode<synchronous>, transform_indices = @transform_2, window_bounds = array<i64: 1, 16>}, {pipeline_mode = #tpu.pipeline_mode<synchronous>, transform_indices = @transform_3, window_bounds = array<i64: 16, 8>}, {pipeline_mode = #tpu.pipeline_mode<synchronous>, transform_indices = @transform_4, window_bounds = array<i64: 1, 8>}, {pipeline_mode = #tpu.pipeline_mode<synchronous>, transform_indices = @transform_5, window_bounds = array<i64: 8, 8>}, {transform_indices = @transform_6, window_bounds = array<i64: 1, 8, 24>}, {transform_indices = @transform_7, window_bounds = array<i64: 1, 1, 24>}, {transform_indices = @transform_8, window_bounds = array<i64: 1, 8, 8>}, {transform_indices = @transform_9, window_bounds = array<i64: 1, 1, 8>}, {transform_indices = @transform_10, window_bounds = array<i64: 1, 8, 16>}, {transform_indices = @transform_11, window_bounds = array<i64: 1, 1, 16>}, {transform_indices = @transform_12, window_bounds = array<i64: 1, 16, 8>}, {transform_indices = @transform_13, window_bounds = array<i64: 1, 1, 8>}, {transform_indices = @transform_14, window_bounds = array<i64: 1, 8, 8>}, {pipeline_mode = #tpu.pipeline_mode<synchronous>, transform_indices = @transform_15, window_bounds = array<i64: 4, 16>}, {pipeline_mode = #tpu.pipeline_mode<synchronous>, transform_indices = @transform_16, window_bounds = array<i64: 4, 8>}, {pipeline_mode = #tpu.pipeline_mode<synchronous>, transform_indices = @transform_17, window_bounds = array<i64: 8, 8>}, {pipeline_mode = #tpu.pipeline_mode<synchronous>, transform_indices = @transform_18, window_bounds = array<i64: 2, 8, 8>}]} {
    %c0_i32 = arith.constant 0 : i32
    %0 = arith.cmpi eq, %arg0, %c0_i32 : i32
    %1 = arith.extui %0 : i1 to i32
    %c0_i32_0 = arith.constant 0 : i32
    %2 = arith.cmpi ne, %1, %c0_i32_0 : i32
    scf.if %2 {
      %c0_66 = arith.constant 0 : index
      %c0_67 = arith.constant 0 : index
      %c0_68 = arith.constant 0 : index
      %187 = vector.load %arg1[%c0_66, %c0_67, %c0_68] : memref<2x8x1xf32, #tpu.memory_space<vmem>>, vector<2x8x1xf32>
      %c0_69 = arith.constant 0 : index
      %c0_70 = arith.constant 0 : index
      %188 = vector.load %arg2[%c0_69, %c0_70] : memref<1x16xf32, #tpu.memory_space<vmem>>, vector<1x16xf32>
      %c0_71 = arith.constant 0 : index
      %c0_72 = arith.constant 0 : index
      %189 = vector.load %arg3[%c0_71, %c0_72] : memref<1x16xf32, #tpu.memory_space<vmem>>, vector<1x16xf32>
      %c0_73 = arith.constant 0 : index
      %c0_74 = arith.constant 0 : index
      %190 = vector.load %arg4[%c0_73, %c0_74] : memref<16x8xf32, #tpu.memory_space<vmem>>, vector<16x8xf32>
      %c0_75 = arith.constant 0 : index
      %c0_76 = arith.constant 0 : index
      %191 = vector.load %arg5[%c0_75, %c0_76] : memref<1x8xf32, #tpu.memory_space<vmem>>, vector<1x8xf32>
      %192 = vector.shape_cast %188 : vector<1x16xf32> to vector<1x1x16xf32>
      %193 = vector.broadcast %187 : vector<2x8x1xf32> to vector<2x8x16xf32>
      %194 = vector.broadcast %192 : vector<1x1x16xf32> to vector<2x8x16xf32>
      %195 = arith.mulf %193, %194 : vector<2x8x16xf32>
      %196 = vector.shape_cast %189 : vector<1x16xf32> to vector<1x1x16xf32>
      %197 = vector.broadcast %196 : vector<1x1x16xf32> to vector<2x8x16xf32>
      %198 = arith.addf %195, %197 : vector<2x8x16xf32>
      %cst_77 = arith.constant 0.000000e+00 : f32
      %199 = vector.broadcast %cst_77 : f32 to vector<2x8x16xf32>
      %200 = arith.cmpf ogt, %198, %199 : vector<2x8x16xf32>
      %cst_78 = arith.constant 0.000000e+00 : f32
      %201 = vector.broadcast %cst_78 : f32 to vector<2x8x16xf32>
      %202 = arith.minimumf %198, %201 : vector<2x8x16xf32>
      %203 = math.exp %202 : vector<2x8x16xf32>
      %cst_79 = arith.constant 1.000000e+00 : f32
      %204 = vector.broadcast %cst_79 : f32 to vector<2x8x16xf32>
      %205 = arith.subf %203, %204 : vector<2x8x16xf32>
      %206 = arith.select %200, %198, %205 : vector<2x8x16xi1>, vector<2x8x16xf32>
      %207 = vector.shape_cast %206 : vector<2x8x16xf32> to vector<16x16xf32>
      %208 = arith.truncf %207 : vector<16x16xf32> to vector<16x16xbf16>
      %209 = arith.truncf %190 : vector<16x8xf32> to vector<16x8xbf16>
      %cst_80 = arith.constant dense<0.000000e+00> : vector<16x8xf32>
      %210 = tpu.matmul %208, %209, %cst_80 {dimension_numbers = #tpu.dot_dimension_numbers<[1], [0], [0], [1], [0, 0, 1, 1], [], []>} : vector<16x16xbf16>, vector<16x8xbf16>, vector<16x8xf32> -> vector<16x8xf32>
      %211 = vector.broadcast %191 : vector<1x8xf32> to vector<16x8xf32>
      %212 = arith.addf %210, %211 : vector<16x8xf32>
      %213 = vector.shape_cast %212 : vector<16x8xf32> to vector<2x8x8xf32>
      %c0_81 = arith.constant 0 : index
      %c0_82 = arith.constant 0 : index
      %214 = vector.load %arg6[%c0_81, %c0_82] : memref<8x8xf32, #tpu.memory_space<vmem>>, vector<8x8xf32>
      %215 = vector.shape_cast %214 : vector<8x8xf32> to vector<1x8x8xf32>
      %216 = vector.broadcast %215 : vector<1x8x8xf32> to vector<2x8x8xf32>
      %217 = arith.addf %213, %216 : vector<2x8x8xf32>
      %c0_83 = arith.constant 0 : index
      %c0_84 = arith.constant 0 : index
      %c0_85 = arith.constant 0 : index
      %218 = vector.load %arg20[%c0_83, %c0_84, %c0_85] : memref<2x8x8xf32, #tpu.memory_space<vmem>>, vector<2x8x8xf32>
      tpu.vector_store %arg20[%c0_83, %c0_84, %c0_85], %217 {strides = array<i32>} : memref<2x8x8xf32, #tpu.memory_space<vmem>>, vector<2x8x8xf32>,
    } else {
    }
    %c0 = arith.constant 0 : index
    %c0_1 = arith.constant 0 : index
    %c0_2 = arith.constant 0 : index
    %3 = vector.load %arg20[%c0, %c0_1, %c0_2] : memref<2x8x8xf32, #tpu.memory_space<vmem>>, vector<2x8x8xf32>
    %c0_3 = arith.constant 0 : index
    %c0_4 = arith.constant 0 : index
    %c0_5 = arith.constant 0 : index
    %4 = vector.load %arg7[%c0_3, %c0_4, %c0_5] : memref<1x8x24xf32, #tpu.memory_space<vmem>>, vector<1x8x24xf32>
    %5 = vector.shape_cast %4 : vector<1x8x24xf32> to vector<8x24xf32>
    %c0_6 = arith.constant 0 : index
    %c0_7 = arith.constant 0 : index
    %c0_8 = arith.constant 0 : index
    %6 = vector.load %arg8[%c0_6, %c0_7, %c0_8] : memref<1x1x24xf32, #tpu.memory_space<vmem>>, vector<1x1x24xf32>
    %7 = vector.shape_cast %6 : vector<1x1x24xf32> to vector<1x24xf32>
    %c0_9 = arith.constant 0 : index
    %c0_10 = arith.constant 0 : index
    %c0_11 = arith.constant 0 : index
    %8 = vector.load %arg9[%c0_9, %c0_10, %c0_11] : memref<1x8x8xf32, #tpu.memory_space<vmem>>, vector<1x8x8xf32>
    %9 = vector.shape_cast %8 : vector<1x8x8xf32> to vector<8x8xf32>
    %c0_12 = arith.constant 0 : index
    %c0_13 = arith.constant 0 : index
    %c0_14 = arith.constant 0 : index
    %10 = vector.load %arg10[%c0_12, %c0_13, %c0_14] : memref<1x1x8xf32, #tpu.memory_space<vmem>>, vector<1x1x8xf32>
    %11 = vector.shape_cast %10 : vector<1x1x8xf32> to vector<1x8xf32>
    %c0_15 = arith.constant 0 : index
    %c0_16 = arith.constant 0 : index
    %c0_17 = arith.constant 0 : index
    %12 = vector.load %arg11[%c0_15, %c0_16, %c0_17] : memref<1x8x16xf32, #tpu.memory_space<vmem>>, vector<1x8x16xf32>
    %13 = vector.shape_cast %12 : vector<1x8x16xf32> to vector<8x16xf32>
    %c0_18 = arith.constant 0 : index
    %c0_19 = arith.constant 0 : index
    %c0_20 = arith.constant 0 : index
    %14 = vector.load %arg12[%c0_18, %c0_19, %c0_20] : memref<1x1x16xf32, #tpu.memory_space<vmem>>, vector<1x1x16xf32>
    %15 = vector.shape_cast %14 : vector<1x1x16xf32> to vector<1x16xf32>
    %c0_21 = arith.constant 0 : index
    %c0_22 = arith.constant 0 : index
    %c0_23 = arith.constant 0 : index
    %16 = vector.load %arg13[%c0_21, %c0_22, %c0_23] : memref<1x16x8xf32, #tpu.memory_space<vmem>>, vector<1x16x8xf32>
    %17 = vector.shape_cast %16 : vector<1x16x8xf32> to vector<16x8xf32>
    %c0_24 = arith.constant 0 : index
    %c0_25 = arith.constant 0 : index
    %c0_26 = arith.constant 0 : index
    %18 = vector.load %arg14[%c0_24, %c0_25, %c0_26] : memref<1x1x8xf32, #tpu.memory_space<vmem>>, vector<1x1x8xf32>
    %19 = vector.shape_cast %18 : vector<1x1x8xf32> to vector<1x8xf32>
    %c0_27 = arith.constant 0 : index
    %c0_28 = arith.constant 0 : index
    %c0_29 = arith.constant 0 : index
    %20 = vector.load %arg15[%c0_27, %c0_28, %c0_29] : memref<1x8x8xf32, #tpu.memory_space<vmem>>, vector<1x8x8xf32>
    %21 = vector.shape_cast %20 : vector<1x8x8xf32> to vector<8x8xf32>
    %c0_30 = arith.constant 0 : index
    %c0_31 = arith.constant 0 : index
    %22 = vector.load %arg16[%c0_30, %c0_31] : memref<4x16xf32, #tpu.memory_space<vmem>>, vector<4x16xf32>
    %c0_32 = arith.constant 0 : index
    %c0_33 = arith.constant 0 : index
    %23 = vector.load %arg17[%c0_32, %c0_33] : memref<4x8xf32, #tpu.memory_space<vmem>>, vector<4x8xf32>
    %c0_34 = arith.constant 0 : index
    %c0_35 = arith.constant 0 : index
    %24 = vector.load %arg18[%c0_34, %c0_35] : memref<8x8xf32, #tpu.memory_space<vmem>>, vector<8x8xf32>
    %25 = vector.shape_cast %3 : vector<2x8x8xf32> to vector<16x8xf32>
    %26 = arith.truncf %25 : vector<16x8xf32> to vector<16x8xbf16>
    %27 = arith.truncf %5 : vector<8x24xf32> to vector<8x24xbf16>
    %cst = arith.constant dense<0.000000e+00> : vector<16x24xf32>
    %28 = tpu.matmul %26, %27, %cst {dimension_numbers = #tpu.dot_dimension_numbers<[1], [0], [0], [1], [0, 0, 1, 1], [], []>} : vector<16x8xbf16>, vector<8x24xbf16>, vector<16x24xf32> -> vector<16x24xf32>
    %29 = vector.broadcast %7 : vector<1x24xf32> to vector<16x24xf32>
    %30 = arith.addf %28, %29 : vector<16x24xf32>
    %31 = vector.extract_strided_slice %30 {offsets = [0, 0], sizes = [16, 8], strides = [1, 1]} : vector<16x24xf32> to vector<16x8xf32>
    %32 = vector.shape_cast %31 : vector<16x8xf32> to vector<2x8x8xf32>
    %33 = vector.extract_strided_slice %30 {offsets = [0, 8], sizes = [16, 8], strides = [1, 1]} : vector<16x24xf32> to vector<16x8xf32>
    %34 = vector.shape_cast %33 : vector<16x8xf32> to vector<2x8x8xf32>
    %35 = vector.extract_strided_slice %30 {offsets = [0, 16], sizes = [16, 8], strides = [1, 1]} : vector<16x24xf32> to vector<16x8xf32>
    %36 = vector.shape_cast %35 : vector<16x8xf32> to vector<2x8x8xf32>
    %cst_36 = arith.constant 0.000000e+00 : f32
    %37 = vector.broadcast %cst_36 : f32 to vector<16x8xf32>
    %38 = vector.extract_strided_slice %32 {offsets = [0, 0, 0], sizes = [2, 8, 4], strides = [1, 1, 1]} : vector<2x8x8xf32> to vector<2x8x4xf32>
    %39 = vector.extract_strided_slice %34 {offsets = [0, 0, 0], sizes = [2, 8, 4], strides = [1, 1, 1]} : vector<2x8x8xf32> to vector<2x8x4xf32>
    %40 = vector.extract_strided_slice %36 {offsets = [0, 0, 0], sizes = [2, 8, 4], strides = [1, 1, 1]} : vector<2x8x8xf32> to vector<2x8x4xf32>
    %41 = vector.shape_cast %38 : vector<2x8x4xf32> to vector<16x4xf32>
    %cst_37 = arith.constant dense<0.000000e+00> : vector<16x16xf32>
    %42 = tpu.matmul %41, %22, %cst_37 {dimension_numbers = #tpu.dot_dimension_numbers<[1], [0], [0], [1], [0, 0, 1, 1], [], []>} : vector<16x4xf32>, vector<4x16xf32>, vector<16x16xf32> -> vector<16x16xf32>
    %43 = vector.shape_cast %42 : vector<16x16xf32> to vector<2x8x16xf32>
    %44 = vector.shape_cast %39 : vector<2x8x4xf32> to vector<16x4xf32>
    %cst_38 = arith.constant dense<0.000000e+00> : vector<16x8xf32>
    %45 = tpu.matmul %44, %23, %cst_38 {dimension_numbers = #tpu.dot_dimension_numbers<[1], [0], [0], [1], [0, 0, 1, 1], [], []>} : vector<16x4xf32>, vector<4x8xf32>, vector<16x8xf32> -> vector<16x8xf32>
    %46 = vector.shape_cast %45 : vector<16x8xf32> to vector<2x8x8xf32>
    %47 = vector.extract_strided_slice %43 {offsets = [0, 0, 0], sizes = [2, 8, 8], strides = [1, 1, 1]} : vector<2x8x16xf32> to vector<2x8x8xf32>
    %48 = vector.extract_strided_slice %43 {offsets = [0, 0, 8], sizes = [2, 8, 8], strides = [1, 1, 1]} : vector<2x8x16xf32> to vector<2x8x8xf32>
    %49 = tpu.concatenate %47, %48 in 1 : vector<2x8x8xf32>, vector<2x8x8xf32> -> vector<2x16x8xf32>
    %50 = vector.extract_strided_slice %46 {offsets = [0, 0, 0], sizes = [2, 8, 4], strides = [1, 1, 1]} : vector<2x8x8xf32> to vector<2x8x4xf32>
    %51 = vector.extract_strided_slice %46 {offsets = [0, 0, 4], sizes = [2, 8, 4], strides = [1, 1, 1]} : vector<2x8x8xf32> to vector<2x8x4xf32>
    %52 = tpu.concatenate %50, %51 in 1 : vector<2x8x4xf32>, vector<2x8x4xf32> -> vector<2x16x4xf32>
    %cst_39 = arith.constant dense<0.000000e+00> : vector<2x4x8xf32>
    %53 = tpu.matmul %52, %49, %cst_39 {dimension_numbers = #tpu.dot_dimension_numbers<[1], [1], [2], [2], [0, 0, 0, 2, 1, 2], [0], [0]>} : vector<2x16x4xf32>, vector<2x16x8xf32>, vector<2x4x8xf32> -> vector<2x4x8xf32>
    %54 = vector.shape_cast %53 : vector<2x4x8xf32> to vector<8x8xf32>
    %cst_40 = arith.constant dense<0.000000e+00> : vector<8x8xf32>
    %55 = tpu.matmul %54, %24, %cst_40 {dimension_numbers = #tpu.dot_dimension_numbers<[1], [0], [0], [1], [0, 0, 1, 1], [], []>} : vector<8x8xf32>, vector<8x8xf32>, vector<8x8xf32> -> vector<8x8xf32>
    %56 = vector.shape_cast %55 : vector<8x8xf32> to vector<2x4x8xf32>
    %57 = vector.extract_strided_slice %56 {offsets = [0, 0, 0], sizes = [2, 4, 4], strides = [1, 1, 1]} : vector<2x4x8xf32> to vector<2x4x4xf32>
    %58 = arith.mulf %57, %57 : vector<2x4x4xf32>
    %59 = vector.extract_strided_slice %56 {offsets = [0, 0, 4], sizes = [2, 4, 4], strides = [1, 1, 1]} : vector<2x4x8xf32> to vector<2x4x4xf32>
    %60 = arith.mulf %59, %59 : vector<2x4x4xf32>
    %61 = arith.addf %58, %60 : vector<2x4x4xf32>
    %62 = math.sqrt %61 : vector<2x4x4xf32>
    %63 = arith.truncf %40 : vector<2x8x4xf32> to vector<2x8x4xbf16>
    %64 = arith.truncf %62 : vector<2x4x4xf32> to vector<2x4x4xbf16>
    %cst_41 = arith.constant dense<0.000000e+00> : vector<2x8x4xf32>
    %65 = tpu.matmul %63, %64, %cst_41 {dimension_numbers = #tpu.dot_dimension_numbers<[2], [1], [1], [2], [0, 0, 0, 1, 1, 2], [0], [0]>} : vector<2x8x4xbf16>, vector<2x4x4xbf16>, vector<2x8x4xf32> -> vector<2x8x4xf32>
    %66 = vector.shape_cast %65 : vector<2x8x4xf32> to vector<16x4xf32>
    %67 = vector.extract_strided_slice %9 {offsets = [0, 0], sizes = [4, 8], strides = [1, 1]} : vector<8x8xf32> to vector<4x8xf32>
    %68 = arith.truncf %66 : vector<16x4xf32> to vector<16x4xbf16>
    %69 = arith.truncf %67 : vector<4x8xf32> to vector<4x8xbf16>
    %cst_42 = arith.constant dense<0.000000e+00> : vector<16x8xf32>
    %70 = tpu.matmul %68, %69, %cst_42 {dimension_numbers = #tpu.dot_dimension_numbers<[1], [0], [0], [1], [0, 0, 1, 1], [], []>} : vector<16x4xbf16>, vector<4x8xbf16>, vector<16x8xf32> -> vector<16x8xf32>
    %71 = arith.addf %37, %70 : vector<16x8xf32>
    %72 = vector.extract_strided_slice %32 {offsets = [0, 0, 4], sizes = [2, 8, 4], strides = [1, 1, 1]} : vector<2x8x8xf32> to vector<2x8x4xf32>
    %73 = vector.extract_strided_slice %34 {offsets = [0, 0, 4], sizes = [2, 8, 4], strides = [1, 1, 1]} : vector<2x8x8xf32> to vector<2x8x4xf32>
    %74 = vector.extract_strided_slice %36 {offsets = [0, 0, 4], sizes = [2, 8, 4], strides = [1, 1, 1]} : vector<2x8x8xf32> to vector<2x8x4xf32>
    %75 = vector.shape_cast %72 : vector<2x8x4xf32> to vector<16x4xf32>
    %cst_43 = arith.constant dense<0.000000e+00> : vector<16x16xf32>
    %76 = tpu.matmul %75, %22, %cst_43 {dimension_numbers = #tpu.dot_dimension_numbers<[1], [0], [0], [1], [0, 0, 1, 1], [], []>} : vector<16x4xf32>, vector<4x16xf32>, vector<16x16xf32> -> vector<16x16xf32>
    %77 = vector.shape_cast %76 : vector<16x16xf32> to vector<2x8x16xf32>
    %78 = vector.shape_cast %73 : vector<2x8x4xf32> to vector<16x4xf32>
    %cst_44 = arith.constant dense<0.000000e+00> : vector<16x8xf32>
    %79 = tpu.matmul %78, %23, %cst_44 {dimension_numbers = #tpu.dot_dimension_numbers<[1], [0], [0], [1], [0, 0, 1, 1], [], []>} : vector<16x4xf32>, vector<4x8xf32>, vector<16x8xf32> -> vector<16x8xf32>
    %80 = vector.shape_cast %79 : vector<16x8xf32> to vector<2x8x8xf32>
    %81 = vector.extract_strided_slice %77 {offsets = [0, 0, 0], sizes = [2, 8, 8], strides = [1, 1, 1]} : vector<2x8x16xf32> to vector<2x8x8xf32>
    %82 = vector.extract_strided_slice %77 {offsets = [0, 0, 8], sizes = [2, 8, 8], strides = [1, 1, 1]} : vector<2x8x16xf32> to vector<2x8x8xf32>
    %83 = tpu.concatenate %81, %82 in 1 : vector<2x8x8xf32>, vector<2x8x8xf32> -> vector<2x16x8xf32>
    %84 = vector.extract_strided_slice %80 {offsets = [0, 0, 0], sizes = [2, 8, 4], strides = [1, 1, 1]} : vector<2x8x8xf32> to vector<2x8x4xf32>
    %85 = vector.extract_strided_slice %80 {offsets = [0, 0, 4], sizes = [2, 8, 4], strides = [1, 1, 1]} : vector<2x8x8xf32> to vector<2x8x4xf32>
    %86 = tpu.concatenate %84, %85 in 1 : vector<2x8x4xf32>, vector<2x8x4xf32> -> vector<2x16x4xf32>
    %cst_45 = arith.constant dense<0.000000e+00> : vector<2x4x8xf32>
    %87 = tpu.matmul %86, %83, %cst_45 {dimension_numbers = #tpu.dot_dimension_numbers<[1], [1], [2], [2], [0, 0, 0, 2, 1, 2], [0], [0]>} : vector<2x16x4xf32>, vector<2x16x8xf32>, vector<2x4x8xf32> -> vector<2x4x8xf32>
    %88 = vector.shape_cast %87 : vector<2x4x8xf32> to vector<8x8xf32>
    %cst_46 = arith.constant dense<0.000000e+00> : vector<8x8xf32>
    %89 = tpu.matmul %88, %24, %cst_46 {dimension_numbers = #tpu.dot_dimension_numbers<[1], [0], [0], [1], [0, 0, 1, 1], [], []>} : vector<8x8xf32>, vector<8x8xf32>, vector<8x8xf32> -> vector<8x8xf32>
    %90 = vector.shape_cast %89 : vector<8x8xf32> to vector<2x4x8xf32>
    %91 = vector.extract_strided_slice %90 {offsets = [0, 0, 0], sizes = [2, 4, 4], strides = [1, 1, 1]} : vector<2x4x8xf32> to vector<2x4x4xf32>
    %92 = arith.mulf %91, %91 : vector<2x4x4xf32>
    %93 = vector.extract_strided_slice %90 {offsets = [0, 0, 4], sizes = [2, 4, 4], strides = [1, 1, 1]} : vector<2x4x8xf32> to vector<2x4x4xf32>
    %94 = arith.mulf %93, %93 : vector<2x4x4xf32>
    %95 = arith.addf %92, %94 : vector<2x4x4xf32>
    %96 = math.sqrt %95 : vector<2x4x4xf32>
    %97 = arith.truncf %74 : vector<2x8x4xf32> to vector<2x8x4xbf16>
    %98 = arith.truncf %96 : vector<2x4x4xf32> to vector<2x4x4xbf16>
    %cst_47 = arith.constant dense<0.000000e+00> : vector<2x8x4xf32>
    %99 = tpu.matmul %97, %98, %cst_47 {dimension_numbers = #tpu.dot_dimension_numbers<[2], [1], [1], [2], [0, 0, 0, 1, 1, 2], [0], [0]>} : vector<2x8x4xbf16>, vector<2x4x4xbf16>, vector<2x8x4xf32> -> vector<2x8x4xf32>
    %100 = vector.shape_cast %99 : vector<2x8x4xf32> to vector<16x4xf32>
    %101 = vector.extract_strided_slice %9 {offsets = [4, 0], sizes = [4, 8], strides = [1, 1]} : vector<8x8xf32> to vector<4x8xf32>
    %102 = arith.truncf %100 : vector<16x4xf32> to vector<16x4xbf16>
    %103 = arith.truncf %101 : vector<4x8xf32> to vector<4x8xbf16>
    %cst_48 = arith.constant dense<0.000000e+00> : vector<16x8xf32>
    %104 = tpu.matmul %102, %103, %cst_48 {dimension_numbers = #tpu.dot_dimension_numbers<[1], [0], [0], [1], [0, 0, 1, 1], [], []>} : vector<16x4xbf16>, vector<4x8xbf16>, vector<16x8xf32> -> vector<16x8xf32>
    %105 = arith.addf %71, %104 : vector<16x8xf32>
    %106 = vector.broadcast %11 : vector<1x8xf32> to vector<16x8xf32>
    %107 = arith.addf %105, %106 : vector<16x8xf32>
    %108 = vector.shape_cast %107 : vector<16x8xf32> to vector<2x8x8xf32>
    %109 = arith.addf %108, %3 : vector<2x8x8xf32>
    %110 = vector.extract_strided_slice %21 {offsets = [0, 0], sizes = [1, 8], strides = [1, 1]} : vector<8x8xf32> to vector<1x8xf32>
    %111 = vector.extract_strided_slice %21 {offsets = [1, 0], sizes = [1, 8], strides = [1, 1]} : vector<8x8xf32> to vector<1x8xf32>
    %112 = vector.extract_strided_slice %21 {offsets = [2, 0], sizes = [1, 8], strides = [1, 1]} : vector<8x8xf32> to vector<1x8xf32>
    %113 = vector.shape_cast %109 : vector<2x8x8xf32> to vector<1x2x8x8xf32>
    %cst_49 = arith.constant dense<0.000000e+00> : vector<1xf32>
    %114 = vector.multi_reduction <add>, %113, %cst_49 [1, 2, 3] : vector<1x2x8x8xf32> to vector<1xf32>
    %115 = vector.shape_cast %114 : vector<1xf32> to vector<1x1x1x1xf32>
    %116 = vector.extract %115[0, 0, 0, 0] : f32 from vector<1x1x1x1xf32>
    %117 = arith.mulf %109, %109 : vector<2x8x8xf32>
    %118 = vector.shape_cast %117 : vector<2x8x8xf32> to vector<1x2x8x8xf32>
    %cst_50 = arith.constant dense<0.000000e+00> : vector<1xf32>
    %119 = vector.multi_reduction <add>, %118, %cst_50 [1, 2, 3] : vector<1x2x8x8xf32> to vector<1xf32>
    %120 = vector.shape_cast %119 : vector<1xf32> to vector<1x1x1x1xf32>
    %121 = vector.extract %120[0, 0, 0, 0] : f32 from vector<1x1x1x1xf32>
    %122 = arith.mulf %116, %116 : f32
    %cst_51 = arith.constant 1.280000e+02 : f32
    %123 = arith.divf %122, %cst_51 : f32
    %124 = arith.subf %121, %123 : f32
    %cst_52 = arith.constant 1.270000e+02 : f32
    %125 = arith.divf %124, %cst_52 : f32
    %126 = math.sqrt %125 : f32
    %127 = vector.broadcast %126 : f32 to vector<1x8xf32>
    %128 = arith.addf %127, %112 : vector<1x8xf32>
    %129 = arith.divf %110, %128 : vector<1x8xf32>
    %130 = vector.shape_cast %129 : vector<1x8xf32> to vector<1x1x8xf32>
    %131 = vector.broadcast %130 : vector<1x1x8xf32> to vector<2x8x8xf32>
    %132 = arith.mulf %109, %131 : vector<2x8x8xf32>
    %133 = vector.shape_cast %111 : vector<1x8xf32> to vector<1x1x8xf32>
    %134 = vector.broadcast %133 : vector<1x1x8xf32> to vector<2x8x8xf32>
    %135 = arith.addf %132, %134 : vector<2x8x8xf32>
    %136 = vector.shape_cast %135 : vector<2x8x8xf32> to vector<16x8xf32>
    %137 = arith.truncf %136 : vector<16x8xf32> to vector<16x8xbf16>
    %138 = arith.truncf %13 : vector<8x16xf32> to vector<8x16xbf16>
    %cst_53 = arith.constant dense<0.000000e+00> : vector<16x16xf32>
    %139 = tpu.matmul %137, %138, %cst_53 {dimension_numbers = #tpu.dot_dimension_numbers<[1], [0], [0], [1], [0, 0, 1, 1], [], []>} : vector<16x8xbf16>, vector<8x16xbf16>, vector<16x16xf32> -> vector<16x16xf32>
    %140 = vector.broadcast %15 : vector<1x16xf32> to vector<16x16xf32>
    %141 = arith.addf %139, %140 : vector<16x16xf32>
    %cst_54 = arith.constant 5.000000e-01 : f32
    %142 = vector.broadcast %cst_54 : f32 to vector<16x16xf32>
    %143 = arith.mulf %142, %141 : vector<16x16xf32>
    %cst_55 = arith.constant 0.707106769 : f32
    %144 = vector.broadcast %cst_55 : f32 to vector<16x16xf32>
    %145 = arith.mulf %141, %144 : vector<16x16xf32>
    %146 = math.erf %145 : vector<16x16xf32>
    %cst_56 = arith.constant 1.000000e+00 : f32
    %147 = vector.broadcast %cst_56 : f32 to vector<16x16xf32>
    %148 = arith.addf %147, %146 : vector<16x16xf32>
    %149 = arith.mulf %143, %148 : vector<16x16xf32>
    %150 = arith.truncf %149 : vector<16x16xf32> to vector<16x16xbf16>
    %151 = arith.truncf %17 : vector<16x8xf32> to vector<16x8xbf16>
    %cst_57 = arith.constant dense<0.000000e+00> : vector<16x8xf32>
    %152 = tpu.matmul %150, %151, %cst_57 {dimension_numbers = #tpu.dot_dimension_numbers<[1], [0], [0], [1], [0, 0, 1, 1], [], []>} : vector<16x16xbf16>, vector<16x8xbf16>, vector<16x8xf32> -> vector<16x8xf32>
    %153 = vector.broadcast %19 : vector<1x8xf32> to vector<16x8xf32>
    %154 = arith.addf %152, %153 : vector<16x8xf32>
    %155 = vector.shape_cast %154 : vector<16x8xf32> to vector<2x8x8xf32>
    %156 = arith.addf %155, %135 : vector<2x8x8xf32>
    %157 = vector.extract_strided_slice %21 {offsets = [3, 0], sizes = [1, 8], strides = [1, 1]} : vector<8x8xf32> to vector<1x8xf32>
    %158 = vector.extract_strided_slice %21 {offsets = [4, 0], sizes = [1, 8], strides = [1, 1]} : vector<8x8xf32> to vector<1x8xf32>
    %159 = vector.extract_strided_slice %21 {offsets = [5, 0], sizes = [1, 8], strides = [1, 1]} : vector<8x8xf32> to vector<1x8xf32>
    %160 = vector.shape_cast %156 : vector<2x8x8xf32> to vector<1x2x8x8xf32>
    %cst_58 = arith.constant dense<0.000000e+00> : vector<1xf32>
    %161 = vector.multi_reduction <add>, %160, %cst_58 [1, 2, 3] : vector<1x2x8x8xf32> to vector<1xf32>
    %162 = vector.shape_cast %161 : vector<1xf32> to vector<1x1x1x1xf32>
    %163 = vector.extract %162[0, 0, 0, 0] : f32 from vector<1x1x1x1xf32>
    %164 = arith.mulf %156, %156 : vector<2x8x8xf32>
    %165 = vector.shape_cast %164 : vector<2x8x8xf32> to vector<1x2x8x8xf32>
    %cst_59 = arith.constant dense<0.000000e+00> : vector<1xf32>
    %166 = vector.multi_reduction <add>, %165, %cst_59 [1, 2, 3] : vector<1x2x8x8xf32> to vector<1xf32>
    %167 = vector.shape_cast %166 : vector<1xf32> to vector<1x1x1x1xf32>
    %168 = vector.extract %167[0, 0, 0, 0] : f32 from vector<1x1x1x1xf32>
    %169 = arith.mulf %163, %163 : f32
    %cst_60 = arith.constant 1.280000e+02 : f32
    %170 = arith.divf %169, %cst_60 : f32
    %171 = arith.subf %168, %170 : f32
    %cst_61 = arith.constant 1.270000e+02 : f32
    %172 = arith.divf %171, %cst_61 : f32
    %173 = math.sqrt %172 : f32
    %174 = vector.broadcast %173 : f32 to vector<1x8xf32>
    %175 = arith.addf %174, %159 : vector<1x8xf32>
    %176 = arith.divf %157, %175 : vector<1x8xf32>
    %177 = vector.shape_cast %176 : vector<1x8xf32> to vector<1x1x8xf32>
    %178 = vector.broadcast %177 : vector<1x1x8xf32> to vector<2x8x8xf32>
    %179 = arith.mulf %156, %178 : vector<2x8x8xf32>
    %180 = vector.shape_cast %158 : vector<1x8xf32> to vector<1x1x8xf32>
    %181 = vector.broadcast %180 : vector<1x1x8xf32> to vector<2x8x8xf32>
    %182 = arith.addf %179, %181 : vector<2x8x8xf32>
    %c0_62 = arith.constant 0 : index
    %c0_63 = arith.constant 0 : index
    %c0_64 = arith.constant 0 : index
    %183 = vector.load %arg20[%c0_62, %c0_63, %c0_64] : memref<2x8x8xf32, #tpu.memory_space<vmem>>, vector<2x8x8xf32>
    tpu.vector_store %arg20[%c0_62, %c0_63, %c0_64], %182 {strides = array<i32>} : memref<2x8x8xf32, #tpu.memory_space<vmem>>, vector<2x8x8xf32>,
    %c1_i32 = arith.constant 1 : i32
    %184 = arith.cmpi eq, %arg0, %c1_i32 : i32
    %185 = arith.extui %184 : i1 to i32
    %c0_i32_65 = arith.constant 0 : i32
    %186 = arith.cmpi ne, %185, %c0_i32_65 : i32
    scf.if %186 {
      %c0_66 = arith.constant 0 : index
      %c0_67 = arith.constant 0 : index
      %c0_68 = arith.constant 0 : index
      %187 = vector.load %arg19[%c0_66, %c0_67, %c0_68] : memref<2x8x8xf32, #tpu.memory_space<vmem>>, vector<2x8x8xf32>
      tpu.vector_store %arg19[%c0_66, %c0_67, %c0_68], %182 {strides = array<i32>} : memref<2x8x8xf32, #tpu.memory_space<vmem>>, vector<2x8x8xf32>,
    } else {
    }
    return
  }
  func.func @transform_0(%arg0: i32) -> (i32, i32, i32) {
    %c0_i32 = arith.constant 0 : i32
    %c0_i32_0 = arith.constant 0 : i32
    %c0_i32_1 = arith.constant 0 : i32
    %c0_i32_2 = arith.constant 0 : i32
    return %c0_i32, %c0_i32_0, %c0_i32_1 : i32, i32, i32
  }
  func.func @transform_1(%arg0: i32) -> (i32, i32) {
    %c0_i32 = arith.constant 0 : i32
    %c0_i32_0 = arith.constant 0 : i32
    %c0_i32_1 = arith.constant 0 : i32
    return %c0_i32, %c0_i32_0 : i32, i32
  }
  func.func @transform_2(%arg0: i32) -> (i32, i32) {
    %c0_i32 = arith.constant 0 : i32
    %c0_i32_0 = arith.constant 0 : i32
    %c0_i32_1 = arith.constant 0 : i32
    return %c0_i32, %c0_i32_0 : i32, i32
  }
  func.func @transform_3(%arg0: i32) -> (i32, i32) {
    %c0_i32 = arith.constant 0 : i32
    %c0_i32_0 = arith.constant 0 : i32
    %c0_i32_1 = arith.constant 0 : i32
    return %c0_i32, %c0_i32_0 : i32, i32
  }
  func.func @transform_4(%arg0: i32) -> (i32, i32) {
    %c0_i32 = arith.constant 0 : i32
    %c0_i32_0 = arith.constant 0 : i32
    %c0_i32_1 = arith.constant 0 : i32
    return %c0_i32, %c0_i32_0 : i32, i32
  }
  func.func @transform_5(%arg0: i32) -> (i32, i32) {
    %c0_i32 = arith.constant 0 : i32
    %c0_i32_0 = arith.constant 0 : i32
    %c0_i32_1 = arith.constant 0 : i32
    return %c0_i32, %c0_i32_0 : i32, i32
  }
  func.func @transform_6(%arg0: i32) -> (i32, i32, i32) {
    %c0_i32 = arith.constant 0 : i32
    %c0_i32_0 = arith.constant 0 : i32
    %c0_i32_1 = arith.constant 0 : i32
    return %arg0, %c0_i32, %c0_i32_0 : i32, i32, i32
  }
  func.func @transform_7(%arg0: i32) -> (i32, i32, i32) {
    %c0_i32 = arith.constant 0 : i32
    %c0_i32_0 = arith.constant 0 : i32
    %c0_i32_1 = arith.constant 0 : i32
    return %arg0, %c0_i32, %c0_i32_0 : i32, i32, i32
  }
  func.func @transform_8(%arg0: i32) -> (i32, i32, i32) {
    %c0_i32 = arith.constant 0 : i32
    %c0_i32_0 = arith.constant 0 : i32
    %c0_i32_1 = arith.constant 0 : i32
    return %arg0, %c0_i32, %c0_i32_0 : i32, i32, i32
  }
  func.func @transform_9(%arg0: i32) -> (i32, i32, i32) {
    %c0_i32 = arith.constant 0 : i32
    %c0_i32_0 = arith.constant 0 : i32
    %c0_i32_1 = arith.constant 0 : i32
    return %arg0, %c0_i32, %c0_i32_0 : i32, i32, i32
  }
  func.func @transform_10(%arg0: i32) -> (i32, i32, i32) {
    %c0_i32 = arith.constant 0 : i32
    %c0_i32_0 = arith.constant 0 : i32
    %c0_i32_1 = arith.constant 0 : i32
    return %arg0, %c0_i32, %c0_i32_0 : i32, i32, i32
  }
  func.func @transform_11(%arg0: i32) -> (i32, i32, i32) {
    %c0_i32 = arith.constant 0 : i32
    %c0_i32_0 = arith.constant 0 : i32
    %c0_i32_1 = arith.constant 0 : i32
    return %arg0, %c0_i32, %c0_i32_0 : i32, i32, i32
  }
  func.func @transform_12(%arg0: i32) -> (i32, i32, i32) {
    %c0_i32 = arith.constant 0 : i32
    %c0_i32_0 = arith.constant 0 : i32
    %c0_i32_1 = arith.constant 0 : i32
    return %arg0, %c0_i32, %c0_i32_0 : i32, i32, i32
  }
  func.func @transform_13(%arg0: i32) -> (i32, i32, i32) {
    %c0_i32 = arith.constant 0 : i32
    %c0_i32_0 = arith.constant 0 : i32
    %c0_i32_1 = arith.constant 0 : i32
    return %arg0, %c0_i32, %c0_i32_0 : i32, i32, i32
  }
  func.func @transform_14(%arg0: i32) -> (i32, i32, i32) {
    %c0_i32 = arith.constant 0 : i32
    %c0_i32_0 = arith.constant 0 : i32
    %c0_i32_1 = arith.constant 0 : i32
    return %arg0, %c0_i32, %c0_i32_0 : i32, i32, i32
  }
  func.func @transform_15(%arg0: i32) -> (i32, i32) {
    %c0_i32 = arith.constant 0 : i32
    %c0_i32_0 = arith.constant 0 : i32
    %c0_i32_1 = arith.constant 0 : i32
    return %c0_i32, %c0_i32_0 : i32, i32
  }
  func.func @transform_16(%arg0: i32) -> (i32, i32) {
    %c0_i32 = arith.constant 0 : i32
    %c0_i32_0 = arith.constant 0 : i32
    %c0_i32_1 = arith.constant 0 : i32
    return %c0_i32, %c0_i32_0 : i32, i32
  }
  func.func @transform_17(%arg0: i32) -> (i32, i32) {
    %c0_i32 = arith.constant 0 : i32
    %c0_i32_0 = arith.constant 0 : i32
    %c0_i32_1 = arith.constant 0 : i32
    return %c0_i32, %c0_i32_0 : i32, i32
  }
  func.func @transform_18(%arg0: i32) -> (i32, i32, i32) {
    %c0_i32 = arith.constant 0 : i32
    %c0_i32_0 = arith.constant 0 : i32
    %c0_i32_1 = arith.constant 0 : i32
    %c0_i32_2 = arith.constant 0 : i32
    return %c0_i32, %c0_i32_0, %c0_i32_1 : i32, i32, i32
  }
}

</mosaic_0001>

<llo_original>
// kernel: tpu_custom_call.1
$region0: #{tpu_custom_call.1}
  #allocation0 [shape = 'u32[]', space=smem, size = 0x4, offset = 0x4, fixed_abs, tag = 'smem constant byte address 0x4 - core index']
  #allocation1 [shape = 'u32[144,128]{1,0:T(1,128)}', space=vmem, size = 0x12000, scoped, tag = 'internal scratch']
  #allocation2 [shape = 'f32[2,8,8]{2,1,0:T(8,128)}', space=vmem, size = 0x2000, scoped, tag = 'scratch operand']
  %s0 = inlined_call_operand.vmem [shape: f32[2,8,1], index: 0, kind: input, shape index: {}]
  %s1 = inlined_call_operand.hbm [shape: f32[1,16], index: 1, kind: input, shape index: {}]
  %s2 = inlined_call_operand.hbm [shape: f32[1,16], index: 2, kind: input, shape index: {}]
  %s3 = inlined_call_operand.vmem [shape: f32[16,8], index: 3, kind: input, shape index: {}]
  %s4 = inlined_call_operand.hbm [shape: f32[1,8], index: 4, kind: input, shape index: {}]
  %s5 = inlined_call_operand.vmem [shape: f32[8,8], index: 5, kind: input, shape index: {}]
  %s6 = inlined_call_operand.vmem [shape: f32[2,8,24], index: 6, kind: input, shape index: {}]
  %s7 = inlined_call_operand.hbm [shape: f32[2,1,24], index: 7, kind: input, shape index: {}]
  %s8 = inlined_call_operand.vmem [shape: f32[2,8,8], index: 8, kind: input, shape index: {}]
  %s9 = inlined_call_operand.hbm [shape: f32[2,1,8], index: 9, kind: input, shape index: {}]
  %s10 = inlined_call_operand.vmem [shape: f32[2,8,16], index: 10, kind: input, shape index: {}]
  %s11 = inlined_call_operand.hbm [shape: f32[2,1,16], index: 11, kind: input, shape index: {}]
  %s12 = inlined_call_operand.vmem [shape: f32[2,16,8], index: 12, kind: input, shape index: {}]
  %s13 = inlined_call_operand.hbm [shape: f32[2,1,8], index: 13, kind: input, shape index: {}]
  %s14 = inlined_call_operand.vmem [shape: f32[2,8,8], index: 14, kind: input, shape index: {}]
  %s15 = inlined_call_operand.vmem [shape: f32[4,16], index: 15, kind: input, shape index: {}]
  %s16 = inlined_call_operand.vmem [shape: f32[4,8], index: 16, kind: input, shape index: {}]
  %s17 = inlined_call_operand.vmem [shape: f32[8,8], index: 17, kind: input, shape index: {}]
  %s18 = inlined_call_operand.hbm [shape: f32[2,8,8], index: 18, kind: output, shape index: {}]
  %s19 = sld [smem:[#allocation0]]
  $region141: #{tpu_custom_call.1} parent=0
    _
  %s21 = ssub.s32 1, %s19
  %s22 = scalar_select 0, %s21, %s19
  $region1: #{tpu_custom_call.1} parent=0
    #allocation3 [shape = 'u8[512]{0}', space=vmem, size = 0x400, scoped, tag = 'input window, operand 1, single buffered']
    #allocation4 [shape = 's32[2]{0}', space=sflag, size = 0x8, scoped, tag = 'scoped memory for tpu_custom_call.1']
    #allocation5 [shape = 's32[2]{0}', space=sflag, size = 0x8, scoped, tag = 'scoped memory for tpu_custom_call.1']
    #allocation6 [shape = 'u8[512]{0}', space=vmem, size = 0x400, scoped, tag = 'input window, operand 2, single buffered']
    #allocation7 [shape = 's32[1]{0}', space=sflag, size = 0x4, scoped, tag = 'scoped memory for tpu_custom_call.1']
    #allocation8 [shape = 'u8[512]{0}', space=vmem, size = 0x400, scoped, tag = 'input window, operand 4, single buffered']
    #allocation9 [shape = 'u8[1024]{0}', space=vmem, size = 0x400, scoped, tag = 'input window, operand 7']
    #allocation10 [shape = 's32[2]{0}', space=sflag, size = 0x8, scoped, tag = 'scoped memory for tpu_custom_call.1']
    #allocation11 [shape = 'u8[1024]{0}', space=vmem, size = 0x400, scoped, tag = 'input window, operand 9']
    #allocation12 [shape = 'u8[1024]{0}', space=vmem, size = 0x400, scoped, tag = 'input window, operand 11']
    #allocation13 [shape = 's32[2]{0}', space=sflag, size = 0x8, scoped, tag = 'scoped memory for tpu_custom_call.1']
    #allocation14 [shape = 'u8[1024]{0}', space=vmem, size = 0x400, scoped, tag = 'input window, operand 13']
    #allocation15 [shape = 'u8[8192]{0}', space=vmem, size = 0x2000, scoped, tag = 'output window, operand 0, single buffered']
    %23 = vsyncpa [#allocation4], 0
    %24 = vsyncpa [#allocation7], 0
    %25 = vsyncpa [#allocation10], 0
    %s26 = scalar_lea.sflag [#allocation10], 1
    %27 = vsyncpa %s26, 0
    %28 = vsyncpa [#allocation13], 0
    %s29 = scalar_lea.sflag [#allocation13], 1
    %30 = vsyncpa %s29, 0
    %31 = vsyncpa [#allocation5], 0
    loop: start=0, step=1, limit=4
    $region2: #{tpu_custom_call.1} parent=1 // loop_pre_header
      _
    $region3: #{tpu_custom_call.1} parent=1 // loop_header
      %s33 = sphi 0, %s37
      %p34 = scmp.ge.s32.totalorder %s33, 4
      %s41 = sphi 0, %s41
      %s43 = sphi 0, %s41
      %s44 = sphi 0, %s43
      %s58 = sphi 0, %s44
      %s62 = sphi 0, %s62
      %s64 = sphi 0, %s62
      %s65 = sphi 0, %s64
      %s79 = sphi 0, %s65
      %s83 = sphi 0, %s83
      %s85 = sphi 0, %s83
      %s86 = sphi 0, %s85
      %s100 = sphi 0, %s86
      %s104 = sphi 0, %s104
      %s106 = sphi 0, %s104
      %s107 = sphi 0, %s106
      %s121 = sphi 0, %s107
      %s125 = sphi 0, %s125
      %s127 = sphi 0, %s125
      %s128 = sphi 0, %s127
      %s142 = sphi 0, %s128
      %s146 = sphi 0, %s146
      %s148 = sphi 0, %s146
      %s149 = sphi 0, %s148
      %s163 = sphi 0, %s149
      %s169 = sphi 0, %s171
      %s172 = sphi 0, %s169
      %s173 = sphi 0, %s172
      %s189 = sphi 0, %s173
      %s195 = sphi 0, %s197
      %s198 = sphi 0, %s195
      %s199 = sphi 0, %s198
      %s215 = sphi 0, %s199
      %s221 = sphi 0, %s223
      %s224 = sphi 0, %s221
      %s225 = sphi 0, %s224
      %s241 = sphi 0, %s225
      %s247 = sphi 0, %s249
      %s250 = sphi 0, %s247
      %s251 = sphi 0, %s250
      %s267 = sphi 0, %s251
      %s273 = sphi 0, %s275
      %s276 = sphi 0, %s273
      %s277 = sphi 0, %s276
      %s293 = sphi 0, %s277
      %s299 = sphi 0, %s301
      %s302 = sphi 0, %s299
      %s303 = sphi 0, %s302
      %s319 = sphi 0, %s303
      %s325 = sphi 0, %s327
      %s328 = sphi 0, %s325
      %s329 = sphi 0, %s328
      %s345 = sphi 0, %s329
      %s351 = sphi 0, %s353
      %s354 = sphi 0, %s351
      %s355 = sphi 0, %s354
      %s371 = sphi 0, %s355
      %s377 = sphi 0, %s379
      %s380 = sphi 0, %s377
      %s381 = sphi 0, %s380
      %s397 = sphi 0, %s381
      %s401 = sphi 0, %s401
      %s403 = sphi 0, %s401
      %s404 = sphi 0, %s403
      %s418 = sphi 0, %s404
      %s422 = sphi 0, %s422
      %s424 = sphi 0, %s422
      %s425 = sphi 0, %s424
      %s439 = sphi 0, %s425
      %s443 = sphi 0, %s443
      %s445 = sphi 0, %s443
      %s446 = sphi 0, %s445
      %s460 = sphi 0, %s446
      %s464 = sphi 0, %s464
      %s466 = sphi 0, %s464
      %s467 = sphi 0, %s466
      %s481 = sphi 0, %s467
    $region4: #{tpu_custom_call.1} parent=1 // loop_header_branch
      %36 = sbr.rel (%p34) target = $region8
    $region5: #{tpu_custom_call.1} parent=1 // loop_body
      %s38 = ssub.s32 %s33, 1
      %s39 = ssub.s32 %s33, 2
      %s40 = sadd.s32 %s33, 1
      %s42 = sadd.s32 %s41, 1
      %p45 = scmp.eq.s32.totalorder %s33, 1
      %p46 = scmp.ne.s32.totalorder %s41, %s43
      %p47 = scmp.eq.s32.totalorder %s33, 0
      %p48 = por %p46, %p47
      %p49 = scmp.ne.s32.totalorder %s41, %s43
      %p50 = scmp.eq.s32.totalorder %s38, 1
      %p51 = por %p49, %p50
      %p52 = scmp.ne.s32.totalorder %s43, %s44
      %p53 = scmp.eq.s32.totalorder %s38, 0
      %p54 = por %p52, %p53
      %p55 = scmp.ne.s32.totalorder %s43, %s44
      %p56 = scmp.eq.s32.totalorder %s39, 1
      %p57 = por %p55, %p56
      %p59 = scmp.ne.s32.totalorder %s44, %s58
      %p60 = scmp.eq.s32.totalorder %s39, 0
      %p61 = por %p59, %p60
      %s63 = sadd.s32 %s62, 1
      %p66 = scmp.eq.s32.totalorder %s33, 1
      %p67 = scmp.ne.s32.totalorder %s62, %s64
      %p68 = scmp.eq.s32.totalorder %s33, 0
      %p69 = por %p67, %p68
      %p70 = scmp.ne.s32.totalorder %s62, %s64
      %p71 = scmp.eq.s32.totalorder %s38, 1
      %p72 = por %p70, %p71
      %p73 = scmp.ne.s32.totalorder %s64, %s65
      %p74 = scmp.eq.s32.totalorder %s38, 0
      %p75 = por %p73, %p74
      %p76 = scmp.ne.s32.totalorder %s64, %s65
      %p77 = scmp.eq.s32.totalorder %s39, 1
      %p78 = por %p76, %p77
      %p80 = scmp.ne.s32.totalorder %s65, %s79
      %p81 = scmp.eq.s32.totalorder %s39, 0
      %p82 = por %p80, %p81
      %s84 = sadd.s32 %s83, 1
      %p87 = scmp.eq.s32.totalorder %s33, 1
      %p88 = scmp.ne.s32.totalorder %s83, %s85
      %p89 = scmp.eq.s32.totalorder %s33, 0
      %p90 = por %p88, %p89
      %p91 = scmp.ne.s32.totalorder %s83, %s85
      %p92 = scmp.eq.s32.totalorder %s38, 1
      %p93 = por %p91, %p92
      %p94 = scmp.ne.s32.totalorder %s85, %s86
      %p95 = scmp.eq.s32.totalorder %s38, 0
      %p96 = por %p94, %p95
      %p97 = scmp.ne.s32.totalorder %s85, %s86
      %p98 = scmp.eq.s32.totalorder %s39, 1
      %p99 = por %p97, %p98
      %p101 = scmp.ne.s32.totalorder %s86, %s100
      %p102 = scmp.eq.s32.totalorder %s39, 0
      %p103 = por %p101, %p102
      %s105 = sadd.s32 %s104, 1
      %p108 = scmp.eq.s32.totalorder %s33, 1
      %p109 = scmp.ne.s32.totalorder %s104, %s106
      %p110 = scmp.eq.s32.totalorder %s33, 0
      %p111 = por %p109, %p110
      %p112 = scmp.ne.s32.totalorder %s104, %s106
      %p113 = scmp.eq.s32.totalorder %s38, 1
      %p114 = por %p112, %p113
      %p115 = scmp.ne.s32.totalorder %s106, %s107
      %p116 = scmp.eq.s32.totalorder %s38, 0
      %p117 = por %p115, %p116
      %p118 = scmp.ne.s32.totalorder %s106, %s107
      %p119 = scmp.eq.s32.totalorder %s39, 1
      %p120 = por %p118, %p119
      %p122 = scmp.ne.s32.totalorder %s107, %s121
      %p123 = scmp.eq.s32.totalorder %s39, 0
      %p124 = por %p122, %p123
      %s126 = sadd.s32 %s125, 1
      %p129 = scmp.eq.s32.totalorder %s33, 1
      %p130 = scmp.ne.s32.totalorder %s125, %s127
      %p131 = scmp.eq.s32.totalorder %s33, 0
      %p132 = por %p130, %p131
      %p133 = scmp.ne.s32.totalorder %s125, %s127
      %p134 = scmp.eq.s32.totalorder %s38, 1
      %p135 = por %p133, %p134
      %p136 = scmp.ne.s32.totalorder %s127, %s128
      %p137 = scmp.eq.s32.totalorder %s38, 0
      %p138 = por %p136, %p137
      %p139 = scmp.ne.s32.totalorder %s127, %s128
      %p140 = scmp.eq.s32.totalorder %s39, 1
      %p141 = por %p139, %p140
      %p143 = scmp.ne.s32.totalorder %s128, %s142
      %p144 = scmp.eq.s32.totalorder %s39, 0
      %p145 = por %p143, %p144
      %s147 = sadd.s32 %s146, 1
      %p150 = scmp.eq.s32.totalorder %s33, 1
      %p151 = scmp.ne.s32.totalorder %s146, %s148
      %p152 = scmp.eq.s32.totalorder %s33, 0
      %p153 = por %p151, %p152
      %p154 = scmp.ne.s32.totalorder %s146, %s148
      %p155 = scmp.eq.s32.totalorder %s38, 1
      %p156 = por %p154, %p155
      %p157 = scmp.ne.s32.totalorder %s148, %s149
      %p158 = scmp.eq.s32.totalorder %s38, 0
      %p159 = por %p157, %p158
      %p160 = scmp.ne.s32.totalorder %s148, %s149
      %p161 = scmp.eq.s32.totalorder %s39, 1
      %p162 = por %p160, %p161
      %p164 = scmp.ne.s32.totalorder %s149, %s163
      %p165 = scmp.eq.s32.totalorder %s39, 0
      %p166 = por %p164, %p165
      %s167 = ssub.s32 %s33, %s40
      %p168 = scmp.eq.s32.totalorder %s167, 0
      %s170 = sadd.s32 %s169, 1
      %s171 = scalar_select %p168, %s169, %s170
      %p174 = pneg %p168
      %p175 = scmp.eq.s32.totalorder %s33, 1
      %p176 = por %p174, %p175
      %p177 = scmp.ne.s32.totalorder %s169, %s172
      %p178 = scmp.eq.s32.totalorder %s33, 0
      %p179 = por %p177, %p178
      %p180 = scmp.ne.s32.totalorder %s169, %s172
      %p181 = scmp.eq.s32.totalorder %s38, 1
      %p182 = por %p180, %p181
      %p183 = scmp.ne.s32.totalorder %s172, %s173
      %p184 = scmp.eq.s32.totalorder %s38, 0
      %p185 = por %p183, %p184
      %p186 = scmp.ne.s32.totalorder %s172, %s173
      %p187 = scmp.eq.s32.totalorder %s39, 1
      %p188 = por %p186, %p187
      %p190 = scmp.ne.s32.totalorder %s173, %s189
      %p191 = scmp.eq.s32.totalorder %s39, 0
      %p192 = por %p190, %p191
      %s193 = ssub.s32 %s33, %s40
      %p194 = scmp.eq.s32.totalorder %s193, 0
      %s196 = sadd.s32 %s195, 1
      %s197 = scalar_select %p194, %s195, %s196
      %p200 = pneg %p194
      %p201 = scmp.eq.s32.totalorder %s33, 1
      %p202 = por %p200, %p201
      %p203 = scmp.ne.s32.totalorder %s195, %s198
      %p204 = scmp.eq.s32.totalorder %s33, 0
      %p205 = por %p203, %p204
      %p206 = scmp.ne.s32.totalorder %s195, %s198
      %p207 = scmp.eq.s32.totalorder %s38, 1
      %p208 = por %p206, %p207
      %p209 = scmp.ne.s32.totalorder %s198, %s199
      %p210 = scmp.eq.s32.totalorder %s38, 0
      %p211 = por %p209, %p210
      %p212 = scmp.ne.s32.totalorder %s198, %s199
      %p213 = scmp.eq.s32.totalorder %s39, 1
      %p214 = por %p212, %p213
      %p216 = scmp.ne.s32.totalorder %s199, %s215
      %p217 = scmp.eq.s32.totalorder %s39, 0
      %p218 = por %p216, %p217
      %s219 = ssub.s32 %s33, %s40
      %p220 = scmp.eq.s32.totalorder %s219, 0
      %s222 = sadd.s32 %s221, 1
      %s223 = scalar_select %p220, %s221, %s222
      %p226 = pneg %p220
      %p227 = scmp.eq.s32.totalorder %s33, 1
      %p228 = por %p226, %p227
      %p229 = scmp.ne.s32.totalorder %s221, %s224
      %p230 = scmp.eq.s32.totalorder %s33, 0
      %p231 = por %p229, %p230
      %p232 = scmp.ne.s32.totalorder %s221, %s224
      %p233 = scmp.eq.s32.totalorder %s38, 1
      %p234 = por %p232, %p233
      %p235 = scmp.ne.s32.totalorder %s224, %s225
      %p236 = scmp.eq.s32.totalorder %s38, 0
      %p237 = por %p235, %p236
      %p238 = scmp.ne.s32.totalorder %s224, %s225
      %p239 = scmp.eq.s32.totalorder %s39, 1
      %p240 = por %p238, %p239
      %p242 = scmp.ne.s32.totalorder %s225, %s241
      %p243 = scmp.eq.s32.totalorder %s39, 0
      %p244 = por %p242, %p243
      %s245 = ssub.s32 %s33, %s40
      %p246 = scmp.eq.s32.totalorder %s245, 0
      %s248 = sadd.s32 %s247, 1
      %s249 = scalar_select %p246, %s247, %s248
      %p252 = pneg %p246
      %p253 = scmp.eq.s32.totalorder %s33, 1
      %p254 = por %p252, %p253
      %p255 = scmp.ne.s32.totalorder %s247, %s250
      %p256 = scmp.eq.s32.totalorder %s33, 0
      %p257 = por %p255, %p256
      %p258 = scmp.ne.s32.totalorder %s247, %s250
      %p259 = scmp.eq.s32.totalorder %s38, 1
      %p260 = por %p258, %p259
      %p261 = scmp.ne.s32.totalorder %s250, %s251
      %p262 = scmp.eq.s32.totalorder %s38, 0
      %p263 = por %p261, %p262
      %p264 = scmp.ne.s32.totalorder %s250, %s251
      %p265 = scmp.eq.s32.totalorder %s39, 1
      %p266 = por %p264, %p265
      %p268 = scmp.ne.s32.totalorder %s251, %s267
      %p269 = scmp.eq.s32.totalorder %s39, 0
      %p270 = por %p268, %p269
      %s271 = ssub.s32 %s33, %s40
      %p272 = scmp.eq.s32.totalorder %s271, 0
      %s274 = sadd.s32 %s273, 1
      %s275 = scalar_select %p272, %s273, %s274
      %p278 = pneg %p272
      %p279 = scmp.eq.s32.totalorder %s33, 1
      %p280 = por %p278, %p279
      %p281 = scmp.ne.s32.totalorder %s273, %s276
      %p282 = scmp.eq.s32.totalorder %s33, 0
      %p283 = por %p281, %p282
      %p284 = scmp.ne.s32.totalorder %s273, %s276
      %p285 = scmp.eq.s32.totalorder %s38, 1
      %p286 = por %p284, %p285
      %p287 = scmp.ne.s32.totalorder %s276, %s277
      %p288 = scmp.eq.s32.totalorder %s38, 0
      %p289 = por %p287, %p288
      %p290 = scmp.ne.s32.totalorder %s276, %s277
      %p291 = scmp.eq.s32.totalorder %s39, 1
      %p292 = por %p290, %p291
      %p294 = scmp.ne.s32.totalorder %s277, %s293
      %p295 = scmp.eq.s32.totalorder %s39, 0
      %p296 = por %p294, %p295
      %s297 = ssub.s32 %s33, %s40
      %p298 = scmp.eq.s32.totalorder %s297, 0
      %s300 = sadd.s32 %s299, 1
      %s301 = scalar_select %p298, %s299, %s300
      %p304 = pneg %p298
      %p305 = scmp.eq.s32.totalorder %s33, 1
      %p306 = por %p304, %p305
      %p307 = scmp.ne.s32.totalorder %s299, %s302
      %p308 = scmp.eq.s32.totalorder %s33, 0
      %p309 = por %p307, %p308
      %p310 = scmp.ne.s32.totalorder %s299, %s302
      %p311 = scmp.eq.s32.totalorder %s38, 1
      %p312 = por %p310, %p311
      %p313 = scmp.ne.s32.totalorder %s302, %s303
      %p314 = scmp.eq.s32.totalorder %s38, 0
      %p315 = por %p313, %p314
      %p316 = scmp.ne.s32.totalorder %s302, %s303
      %p317 = scmp.eq.s32.totalorder %s39, 1
      %p318 = por %p316, %p317
      %p320 = scmp.ne.s32.totalorder %s303, %s319
      %p321 = scmp.eq.s32.totalorder %s39, 0
      %p322 = por %p320, %p321
      %s323 = ssub.s32 %s33, %s40
      %p324 = scmp.eq.s32.totalorder %s323, 0
      %s326 = sadd.s32 %s325, 1
      %s327 = scalar_select %p324, %s325, %s326
      %p330 = pneg %p324
      %p331 = scmp.eq.s32.totalorder %s33, 1
      %p332 = por %p330, %p331
      %p333 = scmp.ne.s32.totalorder %s325, %s328
      %p334 = scmp.eq.s32.totalorder %s33, 0
      %p335 = por %p333, %p334
      %p336 = scmp.ne.s32.totalorder %s325, %s328
      %p337 = scmp.eq.s32.totalorder %s38, 1
      %p338 = por %p336, %p337
      %p339 = scmp.ne.s32.totalorder %s328, %s329
      %p340 = scmp.eq.s32.totalorder %s38, 0
      %p341 = por %p339, %p340
      %p342 = scmp.ne.s32.totalorder %s328, %s329
      %p343 = scmp.eq.s32.totalorder %s39, 1
      %p344 = por %p342, %p343
      %p346 = scmp.ne.s32.totalorder %s329, %s345
      %p347 = scmp.eq.s32.totalorder %s39, 0
      %p348 = por %p346, %p347
      %s349 = ssub.s32 %s33, %s40
      %p350 = scmp.eq.s32.totalorder %s349, 0
      %s352 = sadd.s32 %s351, 1
      %s353 = scalar_select %p350, %s351, %s352
      %p356 = pneg %p350
      %p357 = scmp.eq.s32.totalorder %s33, 1
      %p358 = por %p356, %p357
      %p359 = scmp.ne.s32.totalorder %s351, %s354
      %p360 = scmp.eq.s32.totalorder %s33, 0
      %p361 = por %p359, %p360
      %p362 = scmp.ne.s32.totalorder %s351, %s354
      %p363 = scmp.eq.s32.totalorder %s38, 1
      %p364 = por %p362, %p363
      %p365 = scmp.ne.s32.totalorder %s354, %s355
      %p366 = scmp.eq.s32.totalorder %s38, 0
      %p367 = por %p365, %p366
      %p368 = scmp.ne.s32.totalorder %s354, %s355
      %p369 = scmp.eq.s32.totalorder %s39, 1
      %p370 = por %p368, %p369
      %p372 = scmp.ne.s32.totalorder %s355, %s371
      %p373 = scmp.eq.s32.totalorder %s39, 0
      %p374 = por %p372, %p373
      %s375 = ssub.s32 %s33, %s40
      %p376 = scmp.eq.s32.totalorder %s375, 0
      %s378 = sadd.s32 %s377, 1
      %s379 = scalar_select %p376, %s377, %s378
      %p382 = pneg %p376
      %p383 = scmp.eq.s32.totalorder %s33, 1
      %p384 = por %p382, %p383
      %p385 = scmp.ne.s32.totalorder %s377, %s380
      %p386 = scmp.eq.s32.totalorder %s33, 0
      %p387 = por %p385, %p386
      %p388 = scmp.ne.s32.totalorder %s377, %s380
      %p389 = scmp.eq.s32.totalorder %s38, 1
      %p390 = por %p388, %p389
      %p391 = scmp.ne.s32.totalorder %s380, %s381
      %p392 = scmp.eq.s32.totalorder %s38, 0
      %p393 = por %p391, %p392
      %p394 = scmp.ne.s32.totalorder %s380, %s381
      %p395 = scmp.eq.s32.totalorder %s39, 1
      %p396 = por %p394, %p395
      %p398 = scmp.ne.s32.totalorder %s381, %s397
      %p399 = scmp.eq.s32.totalorder %s39, 0
      %p400 = por %p398, %p399
      %s402 = sadd.s32 %s401, 1
      %p405 = scmp.eq.s32.totalorder %s33, 1
      %p406 = scmp.ne.s32.totalorder %s401, %s403
      %p407 = scmp.eq.s32.totalorder %s33, 0
      %p408 = por %p406, %p407
      %p409 = scmp.ne.s32.totalorder %s401, %s403
      %p410 = scmp.eq.s32.totalorder %s38, 1
      %p411 = por %p409, %p410
      %p412 = scmp.ne.s32.totalorder %s403, %s404
      %p413 = scmp.eq.s32.totalorder %s38, 0
      %p414 = por %p412, %p413
      %p415 = scmp.ne.s32.totalorder %s403, %s404
      %p416 = scmp.eq.s32.totalorder %s39, 1
      %p417 = por %p415, %p416
      %p419 = scmp.ne.s32.totalorder %s404, %s418
      %p420 = scmp.eq.s32.totalorder %s39, 0
      %p421 = por %p419, %p420
      %s423 = sadd.s32 %s422, 1
      %p426 = scmp.eq.s32.totalorder %s33, 1
      %p427 = scmp.ne.s32.totalorder %s422, %s424
      %p428 = scmp.eq.s32.totalorder %s33, 0
      %p429 = por %p427, %p428
      %p430 = scmp.ne.s32.totalorder %s422, %s424
      %p431 = scmp.eq.s32.totalorder %s38, 1
      %p432 = por %p430, %p431
      %p433 = scmp.ne.s32.totalorder %s424, %s425
      %p434 = scmp.eq.s32.totalorder %s38, 0
      %p435 = por %p433, %p434
      %p436 = scmp.ne.s32.totalorder %s424, %s425
      %p437 = scmp.eq.s32.totalorder %s39, 1
      %p438 = por %p436, %p437
      %p440 = scmp.ne.s32.totalorder %s425, %s439
      %p441 = scmp.eq.s32.totalorder %s39, 0
      %p442 = por %p440, %p441
      %s444 = sadd.s32 %s443, 1
      %p447 = scmp.eq.s32.totalorder %s33, 1
      %p448 = scmp.ne.s32.totalorder %s443, %s445
      %p449 = scmp.eq.s32.totalorder %s33, 0
      %p450 = por %p448, %p449
      %p451 = scmp.ne.s32.totalorder %s443, %s445
      %p452 = scmp.eq.s32.totalorder %s38, 1
      %p453 = por %p451, %p452
      %p454 = scmp.ne.s32.totalorder %s445, %s446
      %p455 = scmp.eq.s32.totalorder %s38, 0
      %p456 = por %p454, %p455
      %p457 = scmp.ne.s32.totalorder %s445, %s446
      %p458 = scmp.eq.s32.totalorder %s39, 1
      %p459 = por %p457, %p458
      %p461 = scmp.ne.s32.totalorder %s446, %s460
      %p462 = scmp.eq.s32.totalorder %s39, 0
      %p463 = por %p461, %p462
      %s465 = sadd.s32 %s464, 1
      %p468 = scmp.eq.s32.totalorder %s33, 1
      %p469 = scmp.ne.s32.totalorder %s464, %s466
      %p470 = scmp.eq.s32.totalorder %s33, 0
      %p471 = por %p469, %p470
      %p472 = scmp.ne.s32.totalorder %s464, %s466
      %p473 = scmp.eq.s32.totalorder %s38, 1
      %p474 = por %p472, %p473
      %p475 = scmp.ne.s32.totalorder %s466, %s467
      %p476 = scmp.eq.s32.totalorder %s38, 0
      %p477 = por %p475, %p476
      %p478 = scmp.ne.s32.totalorder %s466, %s467
      %p479 = scmp.eq.s32.totalorder %s39, 1
      %p480 = por %p478, %p479
      %p482 = scmp.ne.s32.totalorder %s467, %s481
      %p483 = scmp.eq.s32.totalorder %s39, 0
      %p484 = por %p482, %p483
      %p485 = scmp.le.s32.totalorder 1, %s33
      %p486 = scmp.lt.s32.totalorder %s33, 3
      %p487 = pnand %p485, %p486
      %p488 = pneg %p487
      // Predicated region
      $region9: #{tpu_custom_call.1} parent=5 // pred_check
        _
      $region10: #{tpu_custom_call.1} parent=5 // pred_check_branch
        %490 = sbr.rel (%p487) target = $region12
      $region11: #{tpu_custom_call.1} parent=5 // pred_region
        %s491 = ssub.s32 %s33, 1
        // Predicated region
        $region13: #{tpu_custom_call.1} parent=11 // pred_check
          %p492 = pneg %p54
        $region14: #{tpu_custom_call.1} parent=11 // pred_check_branch
          %494 = sbr.rel (%p492) target = $region16
        $region15: #{tpu_custom_call.1} parent=11 // pred_region
          _
        $region16: #{tpu_custom_call.1} parent=11 // pred_fallthru
          _
        // Predicated region
        $region17: #{tpu_custom_call.1} parent=11 // pred_check
          %p495 = pneg %p75
        $region18: #{tpu_custom_call.1} parent=11 // pred_check_branch
          %497 = sbr.rel (%p495) target = $region20
        $region19: #{tpu_custom_call.1} parent=11 // pred_region
          %s499 = ssub.s32 16, 16
          %500 = vsyncadd [#allocation4], %s499
          %s502 = sshll.u32 [#allocation3], 4
          %s503 = int_to_ptr.vmem [resolvable:$true] %s502
          %505 = dma.hbm_to_vmem [thread:$0]  %s1, 16, %s503, [#allocation4]
        $region20: #{tpu_custom_call.1} parent=11 // pred_fallthru
          _
        // Predicated region
        $region21: #{tpu_custom_call.1} parent=11 // pred_check
          %p506 = pneg %p96
        $region22: #{tpu_custom_call.1} parent=11 // pred_check_branch
          %508 = sbr.rel (%p506) target = $region24
        $region23: #{tpu_custom_call.1} parent=11 // pred_region
          %s510 = ssub.s32 16, 16
          %511 = vsyncadd [#allocation7], %s510
          %s513 = sshll.u32 [#allocation6], 4
          %s514 = int_to_ptr.vmem [resolvable:$true] %s513
          %516 = dma.hbm_to_vmem [thread:$0]  %s2, 16, %s514, [#allocation7]
        $region24: #{tpu_custom_call.1} parent=11 // pred_fallthru
          _
        // Predicated region
        $region25: #{tpu_custom_call.1} parent=11 // pred_check
          %p517 = pneg %p117
        $region26: #{tpu_custom_call.1} parent=11 // pred_check_branch
          %519 = sbr.rel (%p517) target = $region28
        $region27: #{tpu_custom_call.1} parent=11 // pred_region
          _
        $region28: #{tpu_custom_call.1} parent=11 // pred_fallthru
          _
        // Predicated region
        $region29: #{tpu_custom_call.1} parent=11 // pred_check
          %p520 = pneg %p138
        $region30: #{tpu_custom_call.1} parent=11 // pred_check_branch
          %522 = sbr.rel (%p520) target = $region32
        $region31: #{tpu_custom_call.1} parent=11 // pred_region
          %s524 = ssub.s32 16, 16
          %525 = vsyncadd [#allocation7], %s524
          %s527 = sshll.u32 [#allocation8], 4
          %s528 = int_to_ptr.vmem [resolvable:$true] %s527
          %530 = dma.hbm_to_vmem [thread:$0]  %s4, 16, %s528, [#allocation7]
        $region32: #{tpu_custom_call.1} parent=11 // pred_fallthru
          _
        // Predicated region
        $region33: #{tpu_custom_call.1} parent=11 // pred_check
          %p531 = pneg %p159
        $region34: #{tpu_custom_call.1} parent=11 // pred_check_branch
          %533 = sbr.rel (%p531) target = $region36
        $region35: #{tpu_custom_call.1} parent=11 // pred_region
          _
        $region36: #{tpu_custom_call.1} parent=11 // pred_fallthru
          _
        // Predicated region
        $region37: #{tpu_custom_call.1} parent=11 // pred_check
          %p534 = pneg %p414
        $region38: #{tpu_custom_call.1} parent=11 // pred_check_branch
          %536 = sbr.rel (%p534) target = $region40
        $region39: #{tpu_custom_call.1} parent=11 // pred_region
          _
        $region40: #{tpu_custom_call.1} parent=11 // pred_fallthru
          _
        // Predicated region
        $region41: #{tpu_custom_call.1} parent=11 // pred_check
          %p537 = pneg %p435
        $region42: #{tpu_custom_call.1} parent=11 // pred_check_branch
          %539 = sbr.rel (%p537) target = $region44
        $region43: #{tpu_custom_call.1} parent=11 // pred_region
          _
        $region44: #{tpu_custom_call.1} parent=11 // pred_fallthru
          _
        // Predicated region
        $region45: #{tpu_custom_call.1} parent=11 // pred_check
          %p540 = pneg %p456
        $region46: #{tpu_custom_call.1} parent=11 // pred_check_branch
          %542 = sbr.rel (%p540) target = $region48
        $region47: #{tpu_custom_call.1} parent=11 // pred_region
          _
        $region48: #{tpu_custom_call.1} parent=11 // pred_fallthru
          _
      $region12: #{tpu_custom_call.1} parent=5 // pred_fallthru
        _
      %p543 = scmp.lt.s32.totalorder %s33, 2
      // Predicated region
      $region49: #{tpu_custom_call.1} parent=5 // pred_check
        %p544 = pneg %p543
      $region50: #{tpu_custom_call.1} parent=5 // pred_check_branch
        %546 = sbr.rel (%p544) target = $region52
      $region51: #{tpu_custom_call.1} parent=5 // pred_region
        // Predicated region
        $region53: #{tpu_custom_call.1} parent=51 // pred_check
          %p547 = pneg %p179
        $region54: #{tpu_custom_call.1} parent=51 // pred_check_branch
          %549 = sbr.rel (%p547) target = $region56
        $region55: #{tpu_custom_call.1} parent=51 // pred_region
          %p550 = scmp.lt.s32.totalorder %s33, 1
          %s551 = scalar_select %p550, %s33, 1
          %s552 = smul.addr %s551, 8
          %s553 = scalar_lea.vmem %s6, %s552
        $region56: #{tpu_custom_call.1} parent=51 // pred_fallthru
          _
        // Predicated region
        $region57: #{tpu_custom_call.1} parent=51 // pred_check
          %p554 = pneg %p205
        $region58: #{tpu_custom_call.1} parent=51 // pred_check_branch
          %556 = sbr.rel (%p554) target = $region60
        $region59: #{tpu_custom_call.1} parent=51 // pred_region
          %s557 = sand.u32 %s33, 1
          %s558 = scalar_lea.sflag [#allocation10], %s557
          %s559 = sand.u32 %s195, 1
          %s560 = scalar_lea.vmem [#allocation9], %s559
          %s562 = ssub.s32 16, 16
          %563 = vsyncadd %s558, %s562
          %s564 = smul.addr %s33, 16
          %s565 = scalar_lea.hbm %s7, %s564
          %s567 = sshll.u32 %s560, 4
          %s568 = int_to_ptr.vmem [resolvable:$true] %s567
          %570 = dma.hbm_to_vmem [thread:$0]  %s565, 16, %s568, %s558
        $region60: #{tpu_custom_call.1} parent=51 // pred_fallthru
          _
        // Predicated region
        $region61: #{tpu_custom_call.1} parent=51 // pred_check
          %p571 = pneg %p231
        $region62: #{tpu_custom_call.1} parent=51 // pred_check_branch
          %573 = sbr.rel (%p571) target = $region64
        $region63: #{tpu_custom_call.1} parent=51 // pred_region
          %p574 = scmp.lt.s32.totalorder %s33, 1
          %s575 = scalar_select %p574, %s33, 1
          %s576 = smul.addr %s575, 8
          %s577 = scalar_lea.vmem %s8, %s576
        $region64: #{tpu_custom_call.1} parent=51 // pred_fallthru
          _
        // Predicated region
        $region65: #{tpu_custom_call.1} parent=51 // pred_check
          %p578 = pneg %p257
        $region66: #{tpu_custom_call.1} parent=51 // pred_check_branch
          %580 = sbr.rel (%p578) target = $region68
        $region67: #{tpu_custom_call.1} parent=51 // pred_region
          %s581 = sand.u32 %s33, 1
          %s582 = scalar_lea.sflag [#allocation10], %s581
          %s583 = sand.u32 %s247, 1
          %s584 = scalar_lea.vmem [#allocation11], %s583
          %s586 = ssub.s32 16, 16
          %587 = vsyncadd %s582, %s586
          %s588 = smul.addr %s33, 16
          %s589 = scalar_lea.hbm %s9, %s588
          %s591 = sshll.u32 %s584, 4
          %s592 = int_to_ptr.vmem [resolvable:$true] %s591
          %594 = dma.hbm_to_vmem [thread:$0]  %s589, 16, %s592, %s582
        $region68: #{tpu_custom_call.1} parent=51 // pred_fallthru
          _
        // Predicated region
        $region69: #{tpu_custom_call.1} parent=51 // pred_check
          %p595 = pneg %p283
        $region70: #{tpu_custom_call.1} parent=51 // pred_check_branch
          %597 = sbr.rel (%p595) target = $region72
        $region71: #{tpu_custom_call.1} parent=51 // pred_region
          %p598 = scmp.lt.s32.totalorder %s33, 1
          %s599 = scalar_select %p598, %s33, 1
          %s600 = smul.addr %s599, 8
          %s601 = scalar_lea.vmem %s10, %s600
        $region72: #{tpu_custom_call.1} parent=51 // pred_fallthru
          _
        // Predicated region
        $region73: #{tpu_custom_call.1} parent=51 // pred_check
          %p602 = pneg %p309
        $region74: #{tpu_custom_call.1} parent=51 // pred_check_branch
          %604 = sbr.rel (%p602) target = $region76
        $region75: #{tpu_custom_call.1} parent=51 // pred_region
          %s605 = sand.u32 %s33, 1
          %s606 = scalar_lea.sflag [#allocation13], %s605
          %s607 = sand.u32 %s299, 1
          %s608 = scalar_lea.vmem [#allocation12], %s607
          %s610 = ssub.s32 16, 16
          %611 = vsyncadd %s606, %s610
          %s612 = smul.addr %s33, 16
          %s613 = scalar_lea.hbm %s11, %s612
          %s615 = sshll.u32 %s608, 4
          %s616 = int_to_ptr.vmem [resolvable:$true] %s615
          %618 = dma.hbm_to_vmem [thread:$0]  %s613, 16, %s616, %s606
        $region76: #{tpu_custom_call.1} parent=51 // pred_fallthru
          _
        // Predicated region
        $region77: #{tpu_custom_call.1} parent=51 // pred_check
          %p619 = pneg %p335
        $region78: #{tpu_custom_call.1} parent=51 // pred_check_branch
          %621 = sbr.rel (%p619) target = $region80
        $region79: #{tpu_custom_call.1} parent=51 // pred_region
          %p622 = scmp.lt.s32.totalorder %s33, 1
          %s623 = scalar_select %p622, %s33, 1
          %s624 = smul.addr %s623, 2
          %s625 = smul.addr %s624, 8
          %s626 = scalar_lea.vmem %s12, %s625
        $region80: #{tpu_custom_call.1} parent=51 // pred_fallthru
          _
        // Predicated region
        $region81: #{tpu_custom_call.1} parent=51 // pred_check
          %p627 = pneg %p361
        $region82: #{tpu_custom_call.1} parent=51 // pred_check_branch
          %629 = sbr.rel (%p627) target = $region84
        $region83: #{tpu_custom_call.1} parent=51 // pred_region
          %s630 = sand.u32 %s33, 1
          %s631 = scalar_lea.sflag [#allocation13], %s630
          %s632 = sand.u32 %s351, 1
          %s633 = scalar_lea.vmem [#allocation14], %s632
          %s635 = ssub.s32 16, 16
          %636 = vsyncadd %s631, %s635
          %s637 = smul.addr %s33, 16
          %s638 = scalar_lea.hbm %s13, %s637
          %s640 = sshll.u32 %s633, 4
          %s641 = int_to_ptr.vmem [resolvable:$true] %s640
          %643 = dma.hbm_to_vmem [thread:$0]  %s638, 16, %s641, %s631
        $region84: #{tpu_custom_call.1} parent=51 // pred_fallthru
          _
        // Predicated region
        $region85: #{tpu_custom_call.1} parent=51 // pred_check
          %p644 = pneg %p387
        $region86: #{tpu_custom_call.1} parent=51 // pred_check_branch
          %646 = sbr.rel (%p644) target = $region88
        $region87: #{tpu_custom_call.1} parent=51 // pred_region
          %p647 = scmp.lt.s32.totalorder %s33, 1
          %s648 = scalar_select %p647, %s33, 1
          %s649 = smul.addr %s648, 8
          %s650 = scalar_lea.vmem %s14, %s649
        $region88: #{tpu_custom_call.1} parent=51 // pred_fallthru
          _
      $region52: #{tpu_custom_call.1} parent=5 // pred_fallthru
        _
      %p651 = scmp.le.s32.totalorder 1, %s33
      %p652 = scmp.lt.s32.totalorder %s33, 3
      %p653 = pnand %p651, %p652
      %p654 = pneg %p653
      // Predicated region
      $region89: #{tpu_custom_call.1} parent=5 // pred_check
        _
      $region90: #{tpu_custom_call.1} parent=5 // pred_check_branch
        %656 = sbr.rel (%p653) target = $region92
      $region91: #{tpu_custom_call.1} parent=5 // pred_region
        %s657 = ssub.s32 %s33, 1
        // Predicated region
        $region93: #{tpu_custom_call.1} parent=91 // pred_check
          %p658 = pneg %p75
        $region94: #{tpu_custom_call.1} parent=91 // pred_check_branch
          %660 = sbr.rel (%p658) target = $region96
        $region95: #{tpu_custom_call.1} parent=91 // pred_region
          %661 = dma.done [#allocation4], 16
        $region96: #{tpu_custom_call.1} parent=91 // pred_fallthru
          _
        // Predicated region
        $region97: #{tpu_custom_call.1} parent=91 // pred_check
          %p662 = pneg %p96
        $region98: #{tpu_custom_call.1} parent=91 // pred_check_branch
          %664 = sbr.rel (%p662) target = $region100
        $region99: #{tpu_custom_call.1} parent=91 // pred_region
          %665 = dma.done [#allocation7], 16
        $region100: #{tpu_custom_call.1} parent=91 // pred_fallthru
          _
        // Predicated region
        $region101: #{tpu_custom_call.1} parent=91 // pred_check
          %p666 = pneg %p138
        $region102: #{tpu_custom_call.1} parent=91 // pred_check_branch
          %668 = sbr.rel (%p666) target = $region104
        $region103: #{tpu_custom_call.1} parent=91 // pred_region
          %669 = dma.done [#allocation7], 16
        $region104: #{tpu_custom_call.1} parent=91 // pred_fallthru
          _
        %s670 = sand.u32 %s38, 1
        %s671 = scalar_lea.sflag [#allocation10], %s670
        %s672 = sand.u32 %s198, 1
        %s673 = scalar_lea.vmem [#allocation9], %s672
        // Predicated region
        $region105: #{tpu_custom_call.1} parent=91 // pred_check
          %p674 = pneg %p211
        $region106: #{tpu_custom_call.1} parent=91 // pred_check_branch
          %676 = sbr.rel (%p674) target = $region108
        $region107: #{tpu_custom_call.1} parent=91 // pred_region
          %677 = dma.done %s671, 16
        $region108: #{tpu_custom_call.1} parent=91 // pred_fallthru
          _
        %s678 = sand.u32 %s38, 1
        %s679 = scalar_lea.sflag [#allocation10], %s678
        %s680 = sand.u32 %s250, 1
        %s681 = scalar_lea.vmem [#allocation11], %s680
        // Predicated region
        $region109: #{tpu_custom_call.1} parent=91 // pred_check
          %p682 = pneg %p263
        $region110: #{tpu_custom_call.1} parent=91 // pred_check_branch
          %684 = sbr.rel (%p682) target = $region112
        $region111: #{tpu_custom_call.1} parent=91 // pred_region
          %685 = dma.done %s679, 16
        $region112: #{tpu_custom_call.1} parent=91 // pred_fallthru
          _
        %s686 = sand.u32 %s38, 1
        %s687 = scalar_lea.sflag [#allocation13], %s686
        %s688 = sand.u32 %s302, 1
        %s689 = scalar_lea.vmem [#allocation12], %s688
        // Predicated region
        $region113: #{tpu_custom_call.1} parent=91 // pred_check
          %p690 = pneg %p315
        $region114: #{tpu_custom_call.1} parent=91 // pred_check_branch
          %692 = sbr.rel (%p690) target = $region116
        $region115: #{tpu_custom_call.1} parent=91 // pred_region
          %693 = dma.done %s687, 16
        $region116: #{tpu_custom_call.1} parent=91 // pred_fallthru
          _
        %s694 = sand.u32 %s38, 1
        %s695 = scalar_lea.sflag [#allocation13], %s694
        %s696 = sand.u32 %s354, 1
        %s697 = scalar_lea.vmem [#allocation14], %s696
        // Predicated region
        $region117: #{tpu_custom_call.1} parent=91 // pred_check
          %p698 = pneg %p367
        $region118: #{tpu_custom_call.1} parent=91 // pred_check_branch
          %700 = sbr.rel (%p698) target = $region120
        $region119: #{tpu_custom_call.1} parent=91 // pred_region
          %701 = dma.done %s695, 16
        $region120: #{tpu_custom_call.1} parent=91 // pred_fallthru
          _
        %p702 = pneg %p54
        %p703 = pneg %p51
        %p704 = pneg %p75
        %p705 = pneg %p72
        %p706 = pneg %p96
        %p707 = pneg %p93
        %p708 = pneg %p117
        %p709 = pneg %p114
        %p710 = pneg %p138
        %p711 = pneg %p135
        %p712 = pneg %p159
        %p713 = pneg %p156
        %p714 = scmp.lt.s32.totalorder %s38, 1
        %s715 = scalar_select %p714, %s38, 1
        %s716 = smul.addr %s715, 8
        %s717 = scalar_lea.vmem %s6, %s716
        %p718 = pneg %p185
        %p719 = pneg %p182
        %s720 = sand.u32 %s38, 1
        %s721 = scalar_lea.sflag [#allocation10], %s720
        %s722 = sand.u32 %s198, 1
        %s723 = scalar_lea.vmem [#allocation9], %s722
        %p724 = pneg %p211
        %p725 = pneg %p208
        %p726 = scmp.lt.s32.totalorder %s38, 1
        %s727 = scalar_select %p726, %s38, 1
        %s728 = smul.addr %s727, 8
        %s729 = scalar_lea.vmem %s8, %s728
        %p730 = pneg %p237
        %p731 = pneg %p234
        %s732 = sand.u32 %s38, 1
        %s733 = scalar_lea.sflag [#allocation10], %s732
        %s734 = sand.u32 %s250, 1
        %s735 = scalar_lea.vmem [#allocation11], %s734
        %p736 = pneg %p263
        %p737 = pneg %p260
        %p738 = scmp.lt.s32.totalorder %s38, 1
        %s739 = scalar_select %p738, %s38, 1
        %s740 = smul.addr %s739, 8
        %s741 = scalar_lea.vmem %s10, %s740
        %p742 = pneg %p289
        %p743 = pneg %p286
        %s744 = sand.u32 %s38, 1
        %s745 = scalar_lea.sflag [#allocation13], %s744
        %s746 = sand.u32 %s302, 1
        %s747 = scalar_lea.vmem [#allocation12], %s746
        %p748 = pneg %p315
        %p749 = pneg %p312
        %p750 = scmp.lt.s32.totalorder %s38, 1
        %s751 = scalar_select %p750, %s38, 1
        %s752 = smul.addr %s751, 2
        %s753 = smul.addr %s752, 8
        %s754 = scalar_lea.vmem %s12, %s753
        %p755 = pneg %p341
        %p756 = pneg %p338
        %s757 = sand.u32 %s38, 1
        %s758 = scalar_lea.sflag [#allocation13], %s757
        %s759 = sand.u32 %s354, 1
        %s760 = scalar_lea.vmem [#allocation14], %s759
        %p761 = pneg %p367
        %p762 = pneg %p364
        %p763 = scmp.lt.s32.totalorder %s38, 1
        %s764 = scalar_select %p763, %s38, 1
        %s765 = smul.addr %s764, 8
        %s766 = scalar_lea.vmem %s14, %s765
        %p767 = pneg %p393
        %p768 = pneg %p390
        %p769 = pneg %p414
        %p770 = pneg %p411
        %p771 = pneg %p435
        %p772 = pneg %p432
        %p773 = pneg %p456
        %p774 = pneg %p453
        %p775 = pneg %p477
        %p776 = pneg %p474
        %p777 = scmp.lt.s32.totalorder %s38, 1
        %s778 = scalar_select %p777, %s38, 1
        %s779 = smul.addr %s778, 8
        %s780 = scalar_lea.vmem %s6, %s779
        %p781 = scmp.lt.s32.totalorder %s38, 1
        %s782 = scalar_select %p781, %s38, 1
        %s783 = smul.addr %s782, 8
        %s784 = scalar_lea.vmem %s8, %s783
        %p785 = scmp.lt.s32.totalorder %s38, 1
        %s786 = scalar_select %p785, %s38, 1
        %s787 = smul.addr %s786, 8
        %s788 = scalar_lea.vmem %s10, %s787
        %p789 = scmp.lt.s32.totalorder %s38, 1
        %s790 = scalar_select %p789, %s38, 1
        %s791 = smul.addr %s790, 2
        %s792 = smul.addr %s791, 8
        %s793 = scalar_lea.vmem %s12, %s792
        %p794 = scmp.lt.s32.totalorder %s38, 1
        %s795 = scalar_select %p794, %s38, 1
        %s796 = smul.addr %s795, 8
        %s797 = scalar_lea.vmem %s14, %s796
        %p799 = scmp.eq.s32.totalorder %s38, 0
        // Predicated region
        $region121: #{tpu_custom_call.1} parent=91 // pred_check
          %p800 = pneg %p799
        $region122: #{tpu_custom_call.1} parent=91 // pred_check_branch
          %802 = sbr.rel (%p800) target = $region124
        $region123: #{tpu_custom_call.1} parent=91 // pred_region
          %v803 = vld [vmem:[%s0] sm:$0xff]
          %v804 = vld [vmem:[%s0 + $0x8] sm:$0xff]
          %v805 = vld [vmem:[#allocation3] sm:$0x1]
          %v806 = vld [vmem:[#allocation6] sm:$0x1]
          %v807 = vld [vmem:[%s3] sm:$0xff]
          %v808 = vld [vmem:[%s3 + $0x8] sm:$0xff]
          %v809 = vld [vmem:[#allocation8] sm:$0x1]
          %811 = vset.pattern.permute.xlu0 0
          %812 = vperm.xlu0 %811, %v803
          %v813 = vpop.permute.xlu0 %812
          %816 = vset.pattern.permute.xlu0 0
          %817 = vperm.xlu0 %816, %v804
          %v818 = vpop.permute.xlu0 %817
          %v821 = vlaneseq
          %v822 = vshrl.u32 %v821, 7
          %v823 = vsub.s32 0, %v822
          %v824 = vrot.slane %v805, %v823
          %v826 = vmul.f32 %v813, %v824
          %v827 = vmul.f32 %v818, %v824
          %v829 = vlaneseq
          %v830 = vshrl.u32 %v829, 7
          %v831 = vsub.s32 0, %v830
          %v832 = vrot.slane %v806, %v831
          %v834 = vadd.f32 %v826, %v832
          %v835 = vadd.f32 %v827, %v832
          %vm836 = vcmp.gt.f32.partialorder %v834, 0.0
          %vm837 = vcmp.gt.f32.partialorder %v835, 0.0
          %v838 = vmin.f32 %v834, 0.0
          %v839 = vmin.f32 %v835, 0.0
          %v840 = vmul.f32 %v838, 1.442695
          %v841 = vpow.pop %v840
          %v842 = vmul.f32 %v839, 1.442695
          %v843 = vpow.pop %v842
          %v844 = vsub.f32 %v841, 1.0
          %v845 = vsub.f32 %v843, 1.0
          %v846 = vsel %vm836, %v834, %v844
          %v847 = vsel %vm837, %v835, %v845
          %v848 = vpack.c.bf16 %v847, %v846
          %v849 = vpack.c.bf16 %v808, %v807
          %v851 = vlaneseq
          %v852 = vshrl.u32 %v851, 7
          %v853 = vsub.s32 0, %v852
          %v854 = vrot.slane %v809, %v853
          %vm856 = vcmask 130048
          %v858 = vsel %vm856, %v848, 0
          %860 = vmatprep.subr.bf16.mxu0 0
          %861 = vmatpush1.bf16.msra.mxu0 0
          %862 = vmatprep.subr.bf16.mxu0 0
          %863 = vmatpush1.bf16.msra.mxu0 0
          %864 = vmatprep.subr.bf16.mxu0 0
          %865 = vmatpush1.bf16.msra.mxu0 0
          %866 = vmatprep.subr.bf16.mxu0 0
          %867 = vmatpush1.bf16.msra.mxu0 0
          %868 = vmatprep.subr.bf16.mxu0 0
          %869 = vmatpush1.bf16.msra.mxu0 0
          %870 = vmatprep.subr.bf16.mxu0 0
          %871 = vmatpush1.bf16.msra.mxu0 0
          %872 = vmatprep.subr.bf16.mxu0 0
          %873 = vmatpush1.bf16.msra.mxu0 0
          %874 = vmatprep.subr.bf16.mxu0 0
          %875 = vmatpush1.bf16.msra.mxu0 %v849
          %876 = vmatprep.subr.bf16.mxu0 0
          %877 = vmatpush2.bf16.msra.mxu0 0
          %878 = vmatprep.subr.bf16.mxu0 0
          %879 = vmatpush2.bf16.msra.mxu0 0
          %880 = vmatprep.subr.bf16.mxu0 0
          %881 = vmatpush2.bf16.msra.mxu0 0
          %882 = vmatprep.subr.bf16.mxu0 0
          %883 = vmatpush2.bf16.msra.mxu0 0
          %884 = vmatprep.subr.bf16.mxu0 0
          %885 = vmatpush2.bf16.msra.mxu0 0
          %886 = vmatprep.subr.bf16.mxu0 0
          %887 = vmatpush2.bf16.msra.mxu0 0
          %888 = vmatprep.subr.bf16.mxu0 0
          %889 = vmatpush2.bf16.msra.mxu0 0
          %890 = vmatprep.subr.bf16.mxu0 0
          %891 = vmatpush2.bf16.msra.mxu0 0
          %892 = vmatprep.mubr.bf16.mxu0 0
          %893 = vmatmul.mubr.bf16.gmra.mxu0 %v858
          %v894 = vpop.f32.mrf.mxu0
          %v895 = vadd.f32 %v854, %v894
          %v896 = vpop.f32.mrf.mxu0
          %v897 = vpop.f32.mrf.mxu0
          %v898 = vadd.f32 %v854, %v897
          %v899 = vpop.f32.mrf.mxu0
          %900 = vdwg.mxu0
          %v901 = vld [vmem:[%s5] sm:$0xff]
          %v902 = vadd.f32 %v895, %v901
          %v903 = vadd.f32 %v898, %v901
          %vm904 = vcmask 64512
          %905 = vst.msk [vmem:[#allocation2] sm:$0xff] %vm904, %v902
          %906 = vst.msk [vmem:[#allocation2 + $0x8] sm:$0xff] %vm904, %v903
        $region124: #{tpu_custom_call.1} parent=91 // pred_fallthru
          _
        %v907 = vld [vmem:[#allocation2] sm:$0xff]
        %v908 = vld [vmem:[#allocation2 + $0x8] sm:$0xff]
        %v909 = vld [vmem:[%s780] sm:$0xff]
        %v910 = vld [vmem:[%s673] sm:$0x1]
        %v911 = vld [vmem:[%s784] sm:$0xff]
        %v912 = vld [vmem:[%s681] sm:$0x1]
        %v913 = vld [vmem:[%s788] sm:$0xff]
        %v914 = vld [vmem:[%s689] sm:$0x1]
        %v915 = vld [vmem:[%s793] sm:$0xff]
        %v916 = vld [vmem:[%s793 + $0x8] sm:$0xff]
        %v917 = vld [vmem:[%s697] sm:$0x1]
        %v918 = vld [vmem:[%s797] sm:$0xff]
        %v919 = vld [vmem:[%s15] sm:$0xf]
        %v920 = vld [vmem:[%s16] sm:$0xf]
        %v921 = vld [vmem:[%s17] sm:$0xff]
        %v922 = vpack.c.bf16 %v908, %v907
        %v923 = vpack.c.bf16 %v909, %v909
        %v925 = vlaneseq
        %v926 = vshrl.u32 %v925, 7
        %v927 = vsub.s32 0, %v926
        %v928 = vrot.slane %v910, %v927
        %vm930 = vcmask 64512
        %v932 = vsel %vm930, %v922, 0
        %vm934 = vcmask 1043456
        %v936 = vsel %vm934, %v923, 0
        %938 = vmatprep.subr.bf16.mxu0 0
        %939 = vmatpush1.bf16.msra.mxu0 0
        %940 = vmatprep.subr.bf16.mxu0 0
        %941 = vmatpush1.bf16.msra.mxu0 0
        %942 = vmatprep.subr.bf16.mxu0 0
        %943 = vmatpush1.bf16.msra.mxu0 0
        %944 = vmatprep.subr.bf16.mxu0 0
        %945 = vmatpush1.bf16.msra.mxu0 0
        %946 = vmatprep.subr.bf16.mxu0 0
        %947 = vmatpush1.bf16.msra.mxu0 0
        %948 = vmatprep.subr.bf16.mxu0 0
        %949 = vmatpush1.bf16.msra.mxu0 0
        %950 = vmatprep.subr.bf16.mxu0 0
        %951 = vmatpush1.bf16.msra.mxu0 0
        %952 = vmatprep.subr.bf16.mxu0 0
        %953 = vmatpush1.bf16.msra.mxu0 %v936
        %954 = vmatprep.subr.bf16.mxu0 0
        %955 = vmatpush2.bf16.msra.mxu0 0
        %956 = vmatprep.subr.bf16.mxu0 0
        %957 = vmatpush2.bf16.msra.mxu0 0
        %958 = vmatprep.subr.bf16.mxu0 0
        %959 = vmatpush2.bf16.msra.mxu0 0
        %960 = vmatprep.subr.bf16.mxu0 0
        %961 = vmatpush2.bf16.msra.mxu0 0
        %962 = vmatprep.subr.bf16.mxu0 0
        %963 = vmatpush2.bf16.msra.mxu0 0
        %964 = vmatprep.subr.bf16.mxu0 0
        %965 = vmatpush2.bf16.msra.mxu0 0
        %966 = vmatprep.subr.bf16.mxu0 0
        %967 = vmatpush2.bf16.msra.mxu0 0
        %968 = vmatprep.subr.bf16.mxu0 0
        %969 = vmatpush2.bf16.msra.mxu0 0
        %970 = vmatprep.mubr.bf16.mxu0 0
        %971 = vmatmul.mubr.bf16.gmra.mxu0 %v932
        %v972 = vpop.f32.mrf.mxu0
        %v973 = vadd.f32 %v928, %v972
        %v974 = vpop.f32.mrf.mxu0
        %v975 = vpop.f32.mrf.mxu0
        %v976 = vadd.f32 %v928, %v975
        %v977 = vpop.f32.mrf.mxu0
        %978 = vdwg.mxu0
        %vm979 = vcmask 31744
        %v981 = vsel %vm979, %v973, 0
        %v984 = vsel %vm979, %v976, 0
        %v987 = vsel %vm934, %v919, 0
        %989 = vmatprep.subr.mxu0 0.0
        %990 = vmatpush1.msra.mxu0 0.0
        %991 = vmatprep.subr.mxu0 0.0
        %992 = vmatpush1.msra.mxu0 0.0
        %993 = vmatprep.subr.mxu0 0.0
        %994 = vmatpush1.msra.mxu0 0.0
        %995 = vmatprep.subr.mxu0 0.0
        %996 = vmatpush1.msra.mxu0 0.0
        %997 = vmatprep.subr.mxu0 0.0
        %998 = vmatpush1.msra.mxu0 0.0
        %999 = vmatprep.subr.mxu0 0.0
        %1000 = vmatpush1.msra.mxu0 0.0
        %1001 = vmatprep.subr.mxu0 0.0
        %1002 = vmatpush1.msra.mxu0 0.0
        %1003 = vmatprep.subr.mxu0 0.0
        %1004 = vmatpush1.msra.mxu0 0.0
        %1005 = vmatprep.subr.mxu0 0.0
        %1006 = vmatpush1.msra.mxu0 0.0
        %1007 = vmatprep.subr.mxu0 0.0
        %1008 = vmatpush1.msra.mxu0 0.0
        %1009 = vmatprep.subr.mxu0 0.0
        %1010 = vmatpush1.msra.mxu0 0.0
        %1011 = vmatprep.subr.mxu0 0.0
        %1012 = vmatpush1.msra.mxu0 0.0
        %1013 = vmatprep.subr.mxu0 0.0
        %1014 = vmatpush1.msra.mxu0 0.0
        %1015 = vmatprep.subr.mxu0 0.0
        %1016 = vmatpush1.msra.mxu0 0.0
        %1017 = vmatprep.subr.mxu0 0.0
        %1018 = vmatpush1.msra.mxu0 0.0
        %1019 = vmatprep.subr.mxu0 0.0
        %1020 = vmatpush1.msra.mxu0 %v987
        %1021 = vmatprep.subr.mxu0 0.0
        %1022 = vmatpush2.msra.mxu0 0.0
        %1023 = vmatprep.subr.mxu0 0.0
        %1024 = vmatpush2.msra.mxu0 0.0
        %1025 = vmatprep.subr.mxu0 0.0
        %1026 = vmatpush2.msra.mxu0 0.0
        %1027 = vmatprep.subr.mxu0 0.0
        %1028 = vmatpush2.msra.mxu0 0.0
        %1029 = vmatprep.subr.mxu0 0.0
        %1030 = vmatpush2.msra.mxu0 0.0
        %1031 = vmatprep.subr.mxu0 0.0
        %1032 = vmatpush2.msra.mxu0 0.0
        %1033 = vmatprep.subr.mxu0 0.0
        %1034 = vmatpush2.msra.mxu0 0.0
        %1035 = vmatprep.subr.mxu0 0.0
        %1036 = vmatpush2.msra.mxu0 0.0
        %1037 = vmatprep.subr.mxu0 0.0
        %1038 = vmatpush2.msra.mxu0 0.0
        %1039 = vmatprep.subr.mxu0 0.0
        %1040 = vmatpush2.msra.mxu0 0.0
        %1041 = vmatprep.subr.mxu0 0.0
        %1042 = vmatpush2.msra.mxu0 0.0
        %1043 = vmatprep.subr.mxu0 0.0
        %1044 = vmatpush2.msra.mxu0 0.0
        %1045 = vmatprep.subr.mxu0 0.0
        %1046 = vmatpush2.msra.mxu0 0.0
        %1047 = vmatprep.subr.mxu0 0.0
        %1048 = vmatpush2.msra.mxu0 0.0
        %1049 = vmatprep.subr.mxu0 0.0
        %1050 = vmatpush2.msra.mxu0 0.0
        %1051 = vmatprep.subr.mxu0 0.0
        %1052 = vmatpush2.msra.mxu0 0.0
        %1053 = vmatprep.mubr.f32.mxu0 0.0
        %1054 = vmatmul.mubr.f32.gmra.mxu0 %v981
        %v1055 = vpop.f32.mrf.mxu0
        %v1056 = vadd.f32 0.0, %v1055
        %v1057 = vpop.f32.mrf.mxu0
        %1058 = vmatprep.mubr.f32.mxu0 0.0
        %1059 = vmatmul.mubr.f32.gmra.mxu0 %v984
        %v1060 = vpop.f32.mrf.mxu0
        %v1061 = vadd.f32 0.0, %v1060
        %v1062 = vpop.f32.mrf.mxu0
        %1063 = vdwg.mxu0
        %1064 = vrot.lane.b32.xlu0 %v973, 120
        %v1065 = vpop.permute.xlu0 %1064
        %1066 = vrot.lane.b32.xlu0 %v976, 120
        %v1067 = vpop.permute.xlu0 %1066
        %v1068 = vsel %vm979, %v1065, 0
        %v1070 = vsel %vm979, %v1067, 0
        %v1073 = vsel %vm934, %v920, 0
        %1075 = vmatprep.subr.mxu0 0.0
        %1076 = vmatpush1.msra.mxu0 0.0
        %1077 = vmatprep.subr.mxu0 0.0
        %1078 = vmatpush1.msra.mxu0 0.0
        %1079 = vmatprep.subr.mxu0 0.0
        %1080 = vmatpush1.msra.mxu0 0.0
        %1081 = vmatprep.subr.mxu0 0.0
        %1082 = vmatpush1.msra.mxu0 0.0
        %1083 = vmatprep.subr.mxu0 0.0
        %1084 = vmatpush1.msra.mxu0 0.0
        %1085 = vmatprep.subr.mxu0 0.0
        %1086 = vmatpush1.msra.mxu0 0.0
        %1087 = vmatprep.subr.mxu0 0.0
        %1088 = vmatpush1.msra.mxu0 0.0
        %1089 = vmatprep.subr.mxu0 0.0
        %1090 = vmatpush1.msra.mxu0 0.0
        %1091 = vmatprep.subr.mxu0 0.0
        %1092 = vmatpush1.msra.mxu0 0.0
        %1093 = vmatprep.subr.mxu0 0.0
        %1094 = vmatpush1.msra.mxu0 0.0
        %1095 = vmatprep.subr.mxu0 0.0
        %1096 = vmatpush1.msra.mxu0 0.0
        %1097 = vmatprep.subr.mxu0 0.0
        %1098 = vmatpush1.msra.mxu0 0.0
        %1099 = vmatprep.subr.mxu0 0.0
        %1100 = vmatpush1.msra.mxu0 0.0
        %1101 = vmatprep.subr.mxu0 0.0
        %1102 = vmatpush1.msra.mxu0 0.0
        %1103 = vmatprep.subr.mxu0 0.0
        %1104 = vmatpush1.msra.mxu0 0.0
        %1105 = vmatprep.subr.mxu0 0.0
        %1106 = vmatpush1.msra.mxu0 %v1073
        %1107 = vmatprep.subr.mxu0 0.0
        %1108 = vmatpush2.msra.mxu0 0.0
        %1109 = vmatprep.subr.mxu0 0.0
        %1110 = vmatpush2.msra.mxu0 0.0
        %1111 = vmatprep.subr.mxu0 0.0
        %1112 = vmatpush2.msra.mxu0 0.0
        %1113 = vmatprep.subr.mxu0 0.0
        %1114 = vmatpush2.msra.mxu0 0.0
        %1115 = vmatprep.subr.mxu0 0.0
        %1116 = vmatpush2.msra.mxu0 0.0
        %1117 = vmatprep.subr.mxu0 0.0
        %1118 = vmatpush2.msra.mxu0 0.0
        %1119 = vmatprep.subr.mxu0 0.0
        %1120 = vmatpush2.msra.mxu0 0.0
        %1121 = vmatprep.subr.mxu0 0.0
        %1122 = vmatpush2.msra.mxu0 0.0
        %1123 = vmatprep.subr.mxu0 0.0
        %1124 = vmatpush2.msra.mxu0 0.0
        %1125 = vmatprep.subr.mxu0 0.0
        %1126 = vmatpush2.msra.mxu0 0.0
        %1127 = vmatprep.subr.mxu0 0.0
        %1128 = vmatpush2.msra.mxu0 0.0
        %1129 = vmatprep.subr.mxu0 0.0
        %1130 = vmatpush2.msra.mxu0 0.0
        %1131 = vmatprep.subr.mxu0 0.0
        %1132 = vmatpush2.msra.mxu0 0.0
        %1133 = vmatprep.subr.mxu0 0.0
        %1134 = vmatpush2.msra.mxu0 0.0
        %1135 = vmatprep.subr.mxu0 0.0
        %1136 = vmatpush2.msra.mxu0 0.0
        %1137 = vmatprep.subr.mxu0 0.0
        %1138 = vmatpush2.msra.mxu0 0.0
        %1139 = vmatprep.mubr.f32.mxu0 0.0
        %1140 = vmatmul.mubr.f32.gmra.mxu0 %v1068
        %v1141 = vpop.f32.mrf.mxu0
        %v1142 = vadd.f32 0.0, %v1141
        %v1143 = vpop.f32.mrf.mxu0
        %1144 = vmatprep.mubr.f32.mxu0 0.0
        %1145 = vmatmul.mubr.f32.gmra.mxu0 %v1070
        %v1146 = vpop.f32.mrf.mxu0
        %v1147 = vadd.f32 0.0, %v1146
        %v1148 = vpop.f32.mrf.mxu0
        %1149 = vdwg.mxu0
        %1152 = vrot.lane.b32.xlu0 %v1056, 120
        %v1153 = vpop.permute.xlu0 %1152
        %1154 = vrot.lane.b32.xlu0 %v1061, 120
        %v1155 = vpop.permute.xlu0 %1154
        %1160 = vrot.lane.b32.xlu0 %v1142, 124
        %v1161 = vpop.permute.xlu0 %1160
        %1162 = vrot.lane.b32.xlu0 %v1147, 124
        %v1163 = vpop.permute.xlu0 %1162
        %1166 = vxpose.xlu0.b32.start [1/16] %v1142, 128
        %1167 = vxpose.xlu0.b32.cont [2/16] %v1161, 128
        %1168 = vxpose.xlu0.b32.cont [3/16] 0.0, 128
        %1169 = vxpose.xlu0.b32.cont [4/16] 0.0, 128
        %1170 = vxpose.xlu0.b32.cont [5/16] 0.0, 128
        %1171 = vxpose.xlu0.b32.cont [6/16] 0.0, 128
        %1172 = vxpose.xlu0.b32.cont [7/16] 0.0, 128
        %1173 = vxpose.xlu0.b32.cont [8/16] 0.0, 128
        %1174 = vxpose.xlu0.b32.cont [9/16] 0.0, 128
        %1175 = vxpose.xlu0.b32.cont [10/16] 0.0, 128
        %1176 = vxpose.xlu0.b32.cont [11/16] 0.0, 128
        %1177 = vxpose.xlu0.b32.cont [12/16] 0.0, 128
        %1178 = vxpose.xlu0.b32.cont [13/16] 0.0, 128
        %1179 = vxpose.xlu0.b32.cont [14/16] 0.0, 128
        %1180 = vxpose.xlu0.b32.cont [15/16] 0.0, 128
        %1181 = vxpose.xlu0.b32.end [16/16] 0.0, 128
        %v1182 = vpop.trf.xlu0
        %v1183 = vpop.trf.xlu0
        %v1184 = vpop.trf.xlu0
        %v1185 = vpop.trf.xlu0
        %v1186 = vpop.trf.xlu0
        %v1187 = vpop.trf.xlu0
        %v1188 = vpop.trf.xlu0
        %v1189 = vpop.trf.xlu0
        %v1190 = vpop.trf.xlu0
        %v1191 = vpop.trf.xlu0
        %v1192 = vpop.trf.xlu0
        %v1193 = vpop.trf.xlu0
        %v1194 = vpop.trf.xlu0
        %v1195 = vpop.trf.xlu0
        %v1196 = vpop.trf.xlu0
        %v1197 = vpop.trf.xlu0
        %vm1198 = vcmask 130048
        %v1200 = vsel %vm1198, %v1182, 0
        %1202 = vmatprep.subr.mxu0 0.0
        %1203 = vmatpush1.msra.mxu0 0.0
        %1204 = vmatprep.subr.mxu0 0.0
        %1205 = vmatpush1.msra.mxu0 0.0
        %1206 = vmatprep.subr.mxu0 0.0
        %1207 = vmatpush1.msra.mxu0 0.0
        %1208 = vmatprep.subr.mxu0 0.0
        %1209 = vmatpush1.msra.mxu0 0.0
        %1210 = vmatprep.subr.mxu0 0.0
        %1211 = vmatpush1.msra.mxu0 0.0
        %1212 = vmatprep.subr.mxu0 0.0
        %1213 = vmatpush1.msra.mxu0 0.0
        %1214 = vmatprep.subr.mxu0 0.0
        %1215 = vmatpush1.msra.mxu0 0.0
        %1216 = vmatprep.subr.mxu0 0.0
        %1217 = vmatpush1.msra.mxu0 0.0
        %1218 = vmatprep.subr.mxu0 0.0
        %1219 = vmatpush1.msra.mxu0 0.0
        %1220 = vmatprep.subr.mxu0 0.0
        %1221 = vmatpush1.msra.mxu0 0.0
        %1222 = vmatprep.subr.mxu0 0.0
        %1223 = vmatpush1.msra.mxu0 0.0
        %1224 = vmatprep.subr.mxu0 0.0
        %1225 = vmatpush1.msra.mxu0 0.0
        %1226 = vmatprep.subr.mxu0 0.0
        %1227 = vmatpush1.msra.mxu0 0.0
        %1228 = vmatprep.subr.mxu0 0.0
        %1229 = vmatpush1.msra.mxu0 0.0
        %1230 = vmatprep.subr.mxu0 0.0
        %1231 = vmatpush1.msra.mxu0 %v1153
        %1232 = vmatprep.subr.mxu0 0.0
        %1233 = vmatpush1.msra.mxu0 %v1056
        %1234 = vmatprep.subr.mxu0 0.0
        %1235 = vmatpush2.msra.mxu0 0.0
        %1236 = vmatprep.subr.mxu0 0.0
        %1237 = vmatpush2.msra.mxu0 0.0
        %1238 = vmatprep.subr.mxu0 0.0
        %1239 = vmatpush2.msra.mxu0 0.0
        %1240 = vmatprep.subr.mxu0 0.0
        %1241 = vmatpush2.msra.mxu0 0.0
        %1242 = vmatprep.subr.mxu0 0.0
        %1243 = vmatpush2.msra.mxu0 0.0
        %1244 = vmatprep.subr.mxu0 0.0
        %1245 = vmatpush2.msra.mxu0 0.0
        %1246 = vmatprep.subr.mxu0 0.0
        %1247 = vmatpush2.msra.mxu0 0.0
        %1248 = vmatprep.subr.mxu0 0.0
        %1249 = vmatpush2.msra.mxu0 0.0
        %1250 = vmatprep.subr.mxu0 0.0
        %1251 = vmatpush2.msra.mxu0 0.0
        %1252 = vmatprep.subr.mxu0 0.0
        %1253 = vmatpush2.msra.mxu0 0.0
        %1254 = vmatprep.subr.mxu0 0.0
        %1255 = vmatpush2.msra.mxu0 0.0
        %1256 = vmatprep.subr.mxu0 0.0
        %1257 = vmatpush2.msra.mxu0 0.0
        %1258 = vmatprep.subr.mxu0 0.0
        %1259 = vmatpush2.msra.mxu0 0.0
        %1260 = vmatprep.subr.mxu0 0.0
        %1261 = vmatpush2.msra.mxu0 0.0
        %1262 = vmatprep.subr.mxu0 0.0
        %1263 = vmatpush2.msra.mxu0 0.0
        %1264 = vmatprep.subr.mxu0 0.0
        %1265 = vmatpush2.msra.mxu0 0.0
        %1266 = vmatprep.mubr.f32.mxu0 0.0
        %1267 = vmatmul.mubr.f32.gmra.mxu0 %v1200
        %v1268 = vpop.f32.mrf.mxu0
        %v1269 = vadd.f32 0.0, %v1268
        %v1270 = vpop.f32.mrf.mxu0
        %1271 = vdwg.mxu0
        %1272 = vxpose.xlu0.b32.start [1/16] %v1147, 128
        %1273 = vxpose.xlu0.b32.cont [2/16] %v1163, 128
        %1274 = vxpose.xlu0.b32.cont [3/16] 0.0, 128
        %1275 = vxpose.xlu0.b32.cont [4/16] 0.0, 128
        %1276 = vxpose.xlu0.b32.cont [5/16] 0.0, 128
        %1277 = vxpose.xlu0.b32.cont [6/16] 0.0, 128
        %1278 = vxpose.xlu0.b32.cont [7/16] 0.0, 128
        %1279 = vxpose.xlu0.b32.cont [8/16] 0.0, 128
        %1280 = vxpose.xlu0.b32.cont [9/16] 0.0, 128
        %1281 = vxpose.xlu0.b32.cont [10/16] 0.0, 128
        %1282 = vxpose.xlu0.b32.cont [11/16] 0.0, 128
        %1283 = vxpose.xlu0.b32.cont [12/16] 0.0, 128
        %1284 = vxpose.xlu0.b32.cont [13/16] 0.0, 128
        %1285 = vxpose.xlu0.b32.cont [14/16] 0.0, 128
        %1286 = vxpose.xlu0.b32.cont [15/16] 0.0, 128
        %1287 = vxpose.xlu0.b32.end [16/16] 0.0, 128
        %v1288 = vpop.trf.xlu0
        %v1289 = vpop.trf.xlu0
        %v1290 = vpop.trf.xlu0
        %v1291 = vpop.trf.xlu0
        %v1292 = vpop.trf.xlu0
        %v1293 = vpop.trf.xlu0
        %v1294 = vpop.trf.xlu0
        %v1295 = vpop.trf.xlu0
        %v1296 = vpop.trf.xlu0
        %v1297 = vpop.trf.xlu0
        %v1298 = vpop.trf.xlu0
        %v1299 = vpop.trf.xlu0
        %v1300 = vpop.trf.xlu0
        %v1301 = vpop.trf.xlu0
        %v1302 = vpop.trf.xlu0
        %v1303 = vpop.trf.xlu0
        %v1305 = vsel %vm1198, %v1288, 0
        %1307 = vmatprep.subr.mxu0 0.0
        %1308 = vmatpush1.msra.mxu0 0.0
        %1309 = vmatprep.subr.mxu0 0.0
        %1310 = vmatpush1.msra.mxu0 0.0
        %1311 = vmatprep.subr.mxu0 0.0
        %1312 = vmatpush1.msra.mxu0 0.0
        %1313 = vmatprep.subr.mxu0 0.0
        %1314 = vmatpush1.msra.mxu0 0.0
        %1315 = vmatprep.subr.mxu0 0.0
        %1316 = vmatpush1.msra.mxu0 0.0
        %1317 = vmatprep.subr.mxu0 0.0
        %1318 = vmatpush1.msra.mxu0 0.0
        %1319 = vmatprep.subr.mxu0 0.0
        %1320 = vmatpush1.msra.mxu0 0.0
        %1321 = vmatprep.subr.mxu0 0.0
        %1322 = vmatpush1.msra.mxu0 0.0
        %1323 = vmatprep.subr.mxu0 0.0
        %1324 = vmatpush1.msra.mxu0 0.0
        %1325 = vmatprep.subr.mxu0 0.0
        %1326 = vmatpush1.msra.mxu0 0.0
        %1327 = vmatprep.subr.mxu0 0.0
        %1328 = vmatpush1.msra.mxu0 0.0
        %1329 = vmatprep.subr.mxu0 0.0
        %1330 = vmatpush1.msra.mxu0 0.0
        %1331 = vmatprep.subr.mxu0 0.0
        %1332 = vmatpush1.msra.mxu0 0.0
        %1333 = vmatprep.subr.mxu0 0.0
        %1334 = vmatpush1.msra.mxu0 0.0
        %1335 = vmatprep.subr.mxu0 0.0
        %1336 = vmatpush1.msra.mxu0 %v1155
        %1337 = vmatprep.subr.mxu0 0.0
        %1338 = vmatpush1.msra.mxu0 %v1061
        %1339 = vmatprep.subr.mxu0 0.0
        %1340 = vmatpush2.msra.mxu0 0.0
        %1341 = vmatprep.subr.mxu0 0.0
        %1342 = vmatpush2.msra.mxu0 0.0
        %1343 = vmatprep.subr.mxu0 0.0
        %1344 = vmatpush2.msra.mxu0 0.0
        %1345 = vmatprep.subr.mxu0 0.0
        %1346 = vmatpush2.msra.mxu0 0.0
        %1347 = vmatprep.subr.mxu0 0.0
        %1348 = vmatpush2.msra.mxu0 0.0
        %1349 = vmatprep.subr.mxu0 0.0
        %1350 = vmatpush2.msra.mxu0 0.0
        %1351 = vmatprep.subr.mxu0 0.0
        %1352 = vmatpush2.msra.mxu0 0.0
        %1353 = vmatprep.subr.mxu0 0.0
        %1354 = vmatpush2.msra.mxu0 0.0
        %1355 = vmatprep.subr.mxu0 0.0
        %1356 = vmatpush2.msra.mxu0 0.0
        %1357 = vmatprep.subr.mxu0 0.0
        %1358 = vmatpush2.msra.mxu0 0.0
        %1359 = vmatprep.subr.mxu0 0.0
        %1360 = vmatpush2.msra.mxu0 0.0
        %1361 = vmatprep.subr.mxu0 0.0
        %1362 = vmatpush2.msra.mxu0 0.0
        %1363 = vmatprep.subr.mxu0 0.0
        %1364 = vmatpush2.msra.mxu0 0.0
        %1365 = vmatprep.subr.mxu0 0.0
        %1366 = vmatpush2.msra.mxu0 0.0
        %1367 = vmatprep.subr.mxu0 0.0
        %1368 = vmatpush2.msra.mxu0 0.0
        %1369 = vmatprep.subr.mxu0 0.0
        %1370 = vmatpush2.msra.mxu0 0.0
        %1371 = vmatprep.mubr.f32.mxu0 0.0
        %1372 = vmatmul.mubr.f32.gmra.mxu0 %v1305
        %v1373 = vpop.f32.mrf.mxu0
        %v1374 = vadd.f32 0.0, %v1373
        %v1375 = vpop.f32.mrf.mxu0
        %1376 = vdwg.mxu0
        %v1379 = vcombine.low %v1269, %v1374
        %v1380 = vsel %vm930, %v1379, 0
        %1382 = vmatprep.subr.mxu0 0.0
        %1383 = vmatpush1.msra.mxu0 0.0
        %1384 = vmatprep.subr.mxu0 0.0
        %1385 = vmatpush1.msra.mxu0 0.0
        %1386 = vmatprep.subr.mxu0 0.0
        %1387 = vmatpush1.msra.mxu0 0.0
        %1388 = vmatprep.subr.mxu0 0.0
        %1389 = vmatpush1.msra.mxu0 0.0
        %1390 = vmatprep.subr.mxu0 0.0
        %1391 = vmatpush1.msra.mxu0 0.0
        %1392 = vmatprep.subr.mxu0 0.0
        %1393 = vmatpush1.msra.mxu0 0.0
        %1394 = vmatprep.subr.mxu0 0.0
        %1395 = vmatpush1.msra.mxu0 0.0
        %1396 = vmatprep.subr.mxu0 0.0
        %1397 = vmatpush1.msra.mxu0 0.0
        %1398 = vmatprep.subr.mxu0 0.0
        %1399 = vmatpush1.msra.mxu0 0.0
        %1400 = vmatprep.subr.mxu0 0.0
        %1401 = vmatpush1.msra.mxu0 0.0
        %1402 = vmatprep.subr.mxu0 0.0
        %1403 = vmatpush1.msra.mxu0 0.0
        %1404 = vmatprep.subr.mxu0 0.0
        %1405 = vmatpush1.msra.mxu0 0.0
        %1406 = vmatprep.subr.mxu0 0.0
        %1407 = vmatpush1.msra.mxu0 0.0
        %1408 = vmatprep.subr.mxu0 0.0
        %1409 = vmatpush1.msra.mxu0 0.0
        %1410 = vmatprep.subr.mxu0 0.0
        %1411 = vmatpush1.msra.mxu0 0.0
        %1412 = vmatprep.subr.mxu0 0.0
        %1413 = vmatpush1.msra.mxu0 %v921
        %1414 = vmatprep.subr.mxu0 0.0
        %1415 = vmatpush2.msra.mxu0 0.0
        %1416 = vmatprep.subr.mxu0 0.0
        %1417 = vmatpush2.msra.mxu0 0.0
        %1418 = vmatprep.subr.mxu0 0.0
        %1419 = vmatpush2.msra.mxu0 0.0
        %1420 = vmatprep.subr.mxu0 0.0
        %1421 = vmatpush2.msra.mxu0 0.0
        %1422 = vmatprep.subr.mxu0 0.0
        %1423 = vmatpush2.msra.mxu0 0.0
        %1424 = vmatprep.subr.mxu0 0.0
        %1425 = vmatpush2.msra.mxu0 0.0
        %1426 = vmatprep.subr.mxu0 0.0
        %1427 = vmatpush2.msra.mxu0 0.0
        %1428 = vmatprep.subr.mxu0 0.0
        %1429 = vmatpush2.msra.mxu0 0.0
        %1430 = vmatprep.subr.mxu0 0.0
        %1431 = vmatpush2.msra.mxu0 0.0
        %1432 = vmatprep.subr.mxu0 0.0
        %1433 = vmatpush2.msra.mxu0 0.0
        %1434 = vmatprep.subr.mxu0 0.0
        %1435 = vmatpush2.msra.mxu0 0.0
        %1436 = vmatprep.subr.mxu0 0.0
        %1437 = vmatpush2.msra.mxu0 0.0
        %1438 = vmatprep.subr.mxu0 0.0
        %1439 = vmatpush2.msra.mxu0 0.0
        %1440 = vmatprep.subr.mxu0 0.0
        %1441 = vmatpush2.msra.mxu0 0.0
        %1442 = vmatprep.subr.mxu0 0.0
        %1443 = vmatpush2.msra.mxu0 0.0
        %1444 = vmatprep.subr.mxu0 0.0
        %1445 = vmatpush2.msra.mxu0 0.0
        %1446 = vmatprep.mubr.f32.mxu0 0.0
        %1447 = vmatmul.mubr.f32.gmra.mxu0 %v1380
        %v1448 = vpop.f32.mrf.mxu0
        %v1449 = vadd.f32 0.0, %v1448
        %v1450 = vpop.f32.mrf.mxu0
        %1451 = vdwg.mxu0
        %v1453 = vcombine.high %v1449, %v1449
        %v1455 = vmul.f32 %v1449, %v1449
        %v1456 = vmul.f32 %v1453, %v1453
        %1459 = vrot.lane.b32.xlu0 %v1455, 124
        %v1460 = vpop.permute.xlu0 %1459
        %1461 = vrot.lane.b32.xlu0 %v1456, 124
        %v1462 = vpop.permute.xlu0 %1461
        %v1465 = vadd.f32 %v1455, %v1460
        %v1466 = vadd.f32 %v1456, %v1462
        %v1467 = vrsqrt.pop %v1465
        %v1468 = vmul.f32 %v1465, %v1467
        %vm1469 = vcmp.eq.f32.partialorder %v1465, inf
        %v1470 = vsel %vm1469, %v1465, %v1468
        %vm1471 = vcmp.eq.f32.partialorder %v1465, 0.0
        %v1472 = vand.u32 %v1465, 2147483648
        %v1473 = vsel %vm1471, %v1472, %v1470
        %v1474 = vrsqrt.pop %v1466
        %v1475 = vmul.f32 %v1466, %v1474
        %vm1476 = vcmp.eq.f32.partialorder %v1466, inf
        %v1477 = vsel %vm1476, %v1466, %v1475
        %vm1478 = vcmp.eq.f32.partialorder %v1466, 0.0
        %v1479 = vand.u32 %v1466, 2147483648
        %v1480 = vsel %vm1478, %v1479, %v1477
        %v1481 = vpack.c.bf16 %v973, %v973
        %v1482 = vpack.c.bf16 %v976, %v976
        %v1483 = vpack.c.bf16 %v1473, %v1473
        %v1484 = vpack.c.bf16 %v1480, %v1480
        %1486 = vrot.lane.b32.xlu0 %v1481, 112
        %v1487 = vpop.permute.xlu0 %1486
        %v1489 = vsel %vm979, %v1487, 0
        %vm1491 = vcmask 1041408
        %v1493 = vsel %vm1491, %v1483, 0
        %1495 = vmatprep.subr.bf16.mxu0 0
        %1496 = vmatpush1.bf16.msra.mxu0 0
        %1497 = vmatprep.subr.bf16.mxu0 0
        %1498 = vmatpush1.bf16.msra.mxu0 0
        %1499 = vmatprep.subr.bf16.mxu0 0
        %1500 = vmatpush1.bf16.msra.mxu0 0
        %1501 = vmatprep.subr.bf16.mxu0 0
        %1502 = vmatpush1.bf16.msra.mxu0 0
        %1503 = vmatprep.subr.bf16.mxu0 0
        %1504 = vmatpush1.bf16.msra.mxu0 0
        %1505 = vmatprep.subr.bf16.mxu0 0
        %1506 = vmatpush1.bf16.msra.mxu0 0
        %1507 = vmatprep.subr.bf16.mxu0 0
        %1508 = vmatpush1.bf16.msra.mxu0 0
        %1509 = vmatprep.subr.bf16.mxu0 0
        %1510 = vmatpush1.bf16.msra.mxu0 %v1493
        %1511 = vmatprep.subr.bf16.mxu0 0
        %1512 = vmatpush2.bf16.msra.mxu0 0
        %1513 = vmatprep.subr.bf16.mxu0 0
        %1514 = vmatpush2.bf16.msra.mxu0 0
        %1515 = vmatprep.subr.bf16.mxu0 0
        %1516 = vmatpush2.bf16.msra.mxu0 0
        %1517 = vmatprep.subr.bf16.mxu0 0
        %1518 = vmatpush2.bf16.msra.mxu0 0
        %1519 = vmatprep.subr.bf16.mxu0 0
        %1520 = vmatpush2.bf16.msra.mxu0 0
        %1521 = vmatprep.subr.bf16.mxu0 0
        %1522 = vmatpush2.bf16.msra.mxu0 0
        %1523 = vmatprep.subr.bf16.mxu0 0
        %1524 = vmatpush2.bf16.msra.mxu0 0
        %1525 = vmatprep.subr.bf16.mxu0 0
        %1526 = vmatpush2.bf16.msra.mxu0 0
        %1527 = vmatprep.mubr.bf16.mxu0 0
        %1528 = vmatmul.mubr.bf16.gmra.mxu0 %v1489
        %v1529 = vpop.f32.mrf.mxu0
        %v1530 = vadd.f32 0.0, %v1529
        %v1531 = vpop.f32.mrf.mxu0
        %v1532 = vpop.f32.mrf.mxu0
        %v1533 = vpop.f32.mrf.mxu0
        %1534 = vdwg.mxu0
        %1536 = vrot.lane.b32.xlu0 %v1482, 112
        %v1537 = vpop.permute.xlu0 %1536
        %v1539 = vsel %vm979, %v1537, 0
        %v1542 = vsel %vm1491, %v1484, 0
        %1544 = vmatprep.subr.bf16.mxu0 0
        %1545 = vmatpush1.bf16.msra.mxu0 0
        %1546 = vmatprep.subr.bf16.mxu0 0
        %1547 = vmatpush1.bf16.msra.mxu0 0
        %1548 = vmatprep.subr.bf16.mxu0 0
        %1549 = vmatpush1.bf16.msra.mxu0 0
        %1550 = vmatprep.subr.bf16.mxu0 0
        %1551 = vmatpush1.bf16.msra.mxu0 0
        %1552 = vmatprep.subr.bf16.mxu0 0
        %1553 = vmatpush1.bf16.msra.mxu0 0
        %1554 = vmatprep.subr.bf16.mxu0 0
        %1555 = vmatpush1.bf16.msra.mxu0 0
        %1556 = vmatprep.subr.bf16.mxu0 0
        %1557 = vmatpush1.bf16.msra.mxu0 0
        %1558 = vmatprep.subr.bf16.mxu0 0
        %1559 = vmatpush1.bf16.msra.mxu0 %v1542
        %1560 = vmatprep.subr.bf16.mxu0 0
        %1561 = vmatpush2.bf16.msra.mxu0 0
        %1562 = vmatprep.subr.bf16.mxu0 0
        %1563 = vmatpush2.bf16.msra.mxu0 0
        %1564 = vmatprep.subr.bf16.mxu0 0
        %1565 = vmatpush2.bf16.msra.mxu0 0
        %1566 = vmatprep.subr.bf16.mxu0 0
        %1567 = vmatpush2.bf16.msra.mxu0 0
        %1568 = vmatprep.subr.bf16.mxu0 0
        %1569 = vmatpush2.bf16.msra.mxu0 0
        %1570 = vmatprep.subr.bf16.mxu0 0
        %1571 = vmatpush2.bf16.msra.mxu0 0
        %1572 = vmatprep.subr.bf16.mxu0 0
        %1573 = vmatpush2.bf16.msra.mxu0 0
        %1574 = vmatprep.subr.bf16.mxu0 0
        %1575 = vmatpush2.bf16.msra.mxu0 0
        %1576 = vmatprep.mubr.bf16.mxu0 0
        %1577 = vmatmul.mubr.bf16.gmra.mxu0 %v1539
        %v1578 = vpop.f32.mrf.mxu0
        %v1579 = vadd.f32 0.0, %v1578
        %v1580 = vpop.f32.mrf.mxu0
        %v1581 = vpop.f32.mrf.mxu0
        %v1582 = vpop.f32.mrf.mxu0
        %1583 = vdwg.mxu0
        %v1584 = vpack.c.bf16 %v1579, %v1530
        %v1585 = vpack.c.bf16 %v911, %v911
        %1586 = vrot.lane.b32.xlu0 %v973, 124
        %v1587 = vpop.permute.xlu0 %1586
        %1588 = vrot.lane.b32.xlu0 %v976, 124
        %v1589 = vpop.permute.xlu0 %1588
        %v1590 = vsel %vm979, %v1587, 0
        %v1592 = vsel %vm979, %v1589, 0
        %1594 = vmatprep.subr.mxu0 0.0
        %1595 = vmatpush1.msra.mxu0 0.0
        %1596 = vmatprep.subr.mxu0 0.0
        %1597 = vmatpush1.msra.mxu0 0.0
        %1598 = vmatprep.subr.mxu0 0.0
        %1599 = vmatpush1.msra.mxu0 0.0
        %1600 = vmatprep.subr.mxu0 0.0
        %1601 = vmatpush1.msra.mxu0 0.0
        %1602 = vmatprep.subr.mxu0 0.0
        %1603 = vmatpush1.msra.mxu0 0.0
        %1604 = vmatprep.subr.mxu0 0.0
        %1605 = vmatpush1.msra.mxu0 0.0
        %1606 = vmatprep.subr.mxu0 0.0
        %1607 = vmatpush1.msra.mxu0 0.0
        %1608 = vmatprep.subr.mxu0 0.0
        %1609 = vmatpush1.msra.mxu0 0.0
        %1610 = vmatprep.subr.mxu0 0.0
        %1611 = vmatpush1.msra.mxu0 0.0
        %1612 = vmatprep.subr.mxu0 0.0
        %1613 = vmatpush1.msra.mxu0 0.0
        %1614 = vmatprep.subr.mxu0 0.0
        %1615 = vmatpush1.msra.mxu0 0.0
        %1616 = vmatprep.subr.mxu0 0.0
        %1617 = vmatpush1.msra.mxu0 0.0
        %1618 = vmatprep.subr.mxu0 0.0
        %1619 = vmatpush1.msra.mxu0 0.0
        %1620 = vmatprep.subr.mxu0 0.0
        %1621 = vmatpush1.msra.mxu0 0.0
        %1622 = vmatprep.subr.mxu0 0.0
        %1623 = vmatpush1.msra.mxu0 0.0
        %1624 = vmatprep.subr.mxu0 0.0
        %1625 = vmatpush1.msra.mxu0 %v987
        %1626 = vmatprep.subr.mxu0 0.0
        %1627 = vmatpush2.msra.mxu0 0.0
        %1628 = vmatprep.subr.mxu0 0.0
        %1629 = vmatpush2.msra.mxu0 0.0
        %1630 = vmatprep.subr.mxu0 0.0
        %1631 = vmatpush2.msra.mxu0 0.0
        %1632 = vmatprep.subr.mxu0 0.0
        %1633 = vmatpush2.msra.mxu0 0.0
        %1634 = vmatprep.subr.mxu0 0.0
        %1635 = vmatpush2.msra.mxu0 0.0
        %1636 = vmatprep.subr.mxu0 0.0
        %1637 = vmatpush2.msra.mxu0 0.0
        %1638 = vmatprep.subr.mxu0 0.0
        %1639 = vmatpush2.msra.mxu0 0.0
        %1640 = vmatprep.subr.mxu0 0.0
        %1641 = vmatpush2.msra.mxu0 0.0
        %1642 = vmatprep.subr.mxu0 0.0
        %1643 = vmatpush2.msra.mxu0 0.0
        %1644 = vmatprep.subr.mxu0 0.0
        %1645 = vmatpush2.msra.mxu0 0.0
        %1646 = vmatprep.subr.mxu0 0.0
        %1647 = vmatpush2.msra.mxu0 0.0
        %1648 = vmatprep.subr.mxu0 0.0
        %1649 = vmatpush2.msra.mxu0 0.0
        %1650 = vmatprep.subr.mxu0 0.0
        %1651 = vmatpush2.msra.mxu0 0.0
        %1652 = vmatprep.subr.mxu0 0.0
        %1653 = vmatpush2.msra.mxu0 0.0
        %1654 = vmatprep.subr.mxu0 0.0
        %1655 = vmatpush2.msra.mxu0 0.0
        %1656 = vmatprep.subr.mxu0 0.0
        %1657 = vmatpush2.msra.mxu0 0.0
        %1658 = vmatprep.mubr.f32.mxu0 0.0
        %1659 = vmatmul.mubr.f32.gmra.mxu0 %v1590
        %v1660 = vpop.f32.mrf.mxu0
        %v1661 = vadd.f32 0.0, %v1660
        %v1662 = vpop.f32.mrf.mxu0
        %1663 = vmatprep.mubr.f32.mxu0 0.0
        %1664 = vmatmul.mubr.f32.gmra.mxu0 %v1592
        %v1665 = vpop.f32.mrf.mxu0
        %v1666 = vadd.f32 0.0, %v1665
        %v1667 = vpop.f32.mrf.mxu0
        %1668 = vdwg.mxu0
        %1669 = vrot.lane.b32.xlu0 %v973, 116
        %v1670 = vpop.permute.xlu0 %1669
        %1671 = vrot.lane.b32.xlu0 %v976, 116
        %v1672 = vpop.permute.xlu0 %1671
        %v1673 = vsel %vm979, %v1670, 0
        %v1675 = vsel %vm979, %v1672, 0
        %1677 = vmatprep.subr.mxu0 0.0
        %1678 = vmatpush1.msra.mxu0 0.0
        %1679 = vmatprep.subr.mxu0 0.0
        %1680 = vmatpush1.msra.mxu0 0.0
        %1681 = vmatprep.subr.mxu0 0.0
        %1682 = vmatpush1.msra.mxu0 0.0
        %1683 = vmatprep.subr.mxu0 0.0
        %1684 = vmatpush1.msra.mxu0 0.0
        %1685 = vmatprep.subr.mxu0 0.0
        %1686 = vmatpush1.msra.mxu0 0.0
        %1687 = vmatprep.subr.mxu0 0.0
        %1688 = vmatpush1.msra.mxu0 0.0
        %1689 = vmatprep.subr.mxu0 0.0
        %1690 = vmatpush1.msra.mxu0 0.0
        %1691 = vmatprep.subr.mxu0 0.0
        %1692 = vmatpush1.msra.mxu0 0.0
        %1693 = vmatprep.subr.mxu0 0.0
        %1694 = vmatpush1.msra.mxu0 0.0
        %1695 = vmatprep.subr.mxu0 0.0
        %1696 = vmatpush1.msra.mxu0 0.0
        %1697 = vmatprep.subr.mxu0 0.0
        %1698 = vmatpush1.msra.mxu0 0.0
        %1699 = vmatprep.subr.mxu0 0.0
        %1700 = vmatpush1.msra.mxu0 0.0
        %1701 = vmatprep.subr.mxu0 0.0
        %1702 = vmatpush1.msra.mxu0 0.0
        %1703 = vmatprep.subr.mxu0 0.0
        %1704 = vmatpush1.msra.mxu0 0.0
        %1705 = vmatprep.subr.mxu0 0.0
        %1706 = vmatpush1.msra.mxu0 0.0
        %1707 = vmatprep.subr.mxu0 0.0
        %1708 = vmatpush1.msra.mxu0 %v1073
        %1709 = vmatprep.subr.mxu0 0.0
        %1710 = vmatpush2.msra.mxu0 0.0
        %1711 = vmatprep.subr.mxu0 0.0
        %1712 = vmatpush2.msra.mxu0 0.0
        %1713 = vmatprep.subr.mxu0 0.0
        %1714 = vmatpush2.msra.mxu0 0.0
        %1715 = vmatprep.subr.mxu0 0.0
        %1716 = vmatpush2.msra.mxu0 0.0
        %1717 = vmatprep.subr.mxu0 0.0
        %1718 = vmatpush2.msra.mxu0 0.0
        %1719 = vmatprep.subr.mxu0 0.0
        %1720 = vmatpush2.msra.mxu0 0.0
        %1721 = vmatprep.subr.mxu0 0.0
        %1722 = vmatpush2.msra.mxu0 0.0
        %1723 = vmatprep.subr.mxu0 0.0
        %1724 = vmatpush2.msra.mxu0 0.0
        %1725 = vmatprep.subr.mxu0 0.0
        %1726 = vmatpush2.msra.mxu0 0.0
        %1727 = vmatprep.subr.mxu0 0.0
        %1728 = vmatpush2.msra.mxu0 0.0
        %1729 = vmatprep.subr.mxu0 0.0
        %1730 = vmatpush2.msra.mxu0 0.0
        %1731 = vmatprep.subr.mxu0 0.0
        %1732 = vmatpush2.msra.mxu0 0.0
        %1733 = vmatprep.subr.mxu0 0.0
        %1734 = vmatpush2.msra.mxu0 0.0
        %1735 = vmatprep.subr.mxu0 0.0
        %1736 = vmatpush2.msra.mxu0 0.0
        %1737 = vmatprep.subr.mxu0 0.0
        %1738 = vmatpush2.msra.mxu0 0.0
        %1739 = vmatprep.subr.mxu0 0.0
        %1740 = vmatpush2.msra.mxu0 0.0
        %1741 = vmatprep.mubr.f32.mxu0 0.0
        %1742 = vmatmul.mubr.f32.gmra.mxu0 %v1673
        %v1743 = vpop.f32.mrf.mxu0
        %v1744 = vadd.f32 0.0, %v1743
        %v1745 = vpop.f32.mrf.mxu0
        %1746 = vmatprep.mubr.f32.mxu0 0.0
        %1747 = vmatmul.mubr.f32.gmra.mxu0 %v1675
        %v1748 = vpop.f32.mrf.mxu0
        %v1749 = vadd.f32 0.0, %v1748
        %v1750 = vpop.f32.mrf.mxu0
        %1751 = vdwg.mxu0
        %1754 = vrot.lane.b32.xlu0 %v1661, 120
        %v1755 = vpop.permute.xlu0 %1754
        %1756 = vrot.lane.b32.xlu0 %v1666, 120
        %v1757 = vpop.permute.xlu0 %1756
        %1762 = vrot.lane.b32.xlu0 %v1744, 124
        %v1763 = vpop.permute.xlu0 %1762
        %1764 = vrot.lane.b32.xlu0 %v1749, 124
        %v1765 = vpop.permute.xlu0 %1764
        %1768 = vxpose.xlu0.b32.start [1/16] %v1744, 128
        %1769 = vxpose.xlu0.b32.cont [2/16] %v1763, 128
        %1770 = vxpose.xlu0.b32.cont [3/16] 0.0, 128
        %1771 = vxpose.xlu0.b32.cont [4/16] 0.0, 128
        %1772 = vxpose.xlu0.b32.cont [5/16] 0.0, 128
        %1773 = vxpose.xlu0.b32.cont [6/16] 0.0, 128
        %1774 = vxpose.xlu0.b32.cont [7/16] 0.0, 128
        %1775 = vxpose.xlu0.b32.cont [8/16] 0.0, 128
        %1776 = vxpose.xlu0.b32.cont [9/16] 0.0, 128
        %1777 = vxpose.xlu0.b32.cont [10/16] 0.0, 128
        %1778 = vxpose.xlu0.b32.cont [11/16] 0.0, 128
        %1779 = vxpose.xlu0.b32.cont [12/16] 0.0, 128
        %1780 = vxpose.xlu0.b32.cont [13/16] 0.0, 128
        %1781 = vxpose.xlu0.b32.cont [14/16] 0.0, 128
        %1782 = vxpose.xlu0.b32.cont [15/16] 0.0, 128
        %1783 = vxpose.xlu0.b32.end [16/16] 0.0, 128
        %v1784 = vpop.trf.xlu0
        %v1785 = vpop.trf.xlu0
        %v1786 = vpop.trf.xlu0
        %v1787 = vpop.trf.xlu0
        %v1788 = vpop.trf.xlu0
        %v1789 = vpop.trf.xlu0
        %v1790 = vpop.trf.xlu0
        %v1791 = vpop.trf.xlu0
        %v1792 = vpop.trf.xlu0
        %v1793 = vpop.trf.xlu0
        %v1794 = vpop.trf.xlu0
        %v1795 = vpop.trf.xlu0
        %v1796 = vpop.trf.xlu0
        %v1797 = vpop.trf.xlu0
        %v1798 = vpop.trf.xlu0
        %v1799 = vpop.trf.xlu0
        %v1801 = vsel %vm1198, %v1784, 0
        %1803 = vmatprep.subr.mxu0 0.0
        %1804 = vmatpush1.msra.mxu0 0.0
        %1805 = vmatprep.subr.mxu0 0.0
        %1806 = vmatpush1.msra.mxu0 0.0
        %1807 = vmatprep.subr.mxu0 0.0
        %1808 = vmatpush1.msra.mxu0 0.0
        %1809 = vmatprep.subr.mxu0 0.0
        %1810 = vmatpush1.msra.mxu0 0.0
        %1811 = vmatprep.subr.mxu0 0.0
        %1812 = vmatpush1.msra.mxu0 0.0
        %1813 = vmatprep.subr.mxu0 0.0
        %1814 = vmatpush1.msra.mxu0 0.0
        %1815 = vmatprep.subr.mxu0 0.0
        %1816 = vmatpush1.msra.mxu0 0.0
        %1817 = vmatprep.subr.mxu0 0.0
        %1818 = vmatpush1.msra.mxu0 0.0
        %1819 = vmatprep.subr.mxu0 0.0
        %1820 = vmatpush1.msra.mxu0 0.0
        %1821 = vmatprep.subr.mxu0 0.0
        %1822 = vmatpush1.msra.mxu0 0.0
        %1823 = vmatprep.subr.mxu0 0.0
        %1824 = vmatpush1.msra.mxu0 0.0
        %1825 = vmatprep.subr.mxu0 0.0
        %1826 = vmatpush1.msra.mxu0 0.0
        %1827 = vmatprep.subr.mxu0 0.0
        %1828 = vmatpush1.msra.mxu0 0.0
        %1829 = vmatprep.subr.mxu0 0.0
        %1830 = vmatpush1.msra.mxu0 0.0
        %1831 = vmatprep.subr.mxu0 0.0
        %1832 = vmatpush1.msra.mxu0 %v1755
        %1833 = vmatprep.subr.mxu0 0.0
        %1834 = vmatpush1.msra.mxu0 %v1661
        %1835 = vmatprep.subr.mxu0 0.0
        %1836 = vmatpush2.msra.mxu0 0.0
        %1837 = vmatprep.subr.mxu0 0.0
        %1838 = vmatpush2.msra.mxu0 0.0
        %1839 = vmatprep.subr.mxu0 0.0
        %1840 = vmatpush2.msra.mxu0 0.0
        %1841 = vmatprep.subr.mxu0 0.0
        %1842 = vmatpush2.msra.mxu0 0.0
        %1843 = vmatprep.subr.mxu0 0.0
        %1844 = vmatpush2.msra.mxu0 0.0
        %1845 = vmatprep.subr.mxu0 0.0
        %1846 = vmatpush2.msra.mxu0 0.0
        %1847 = vmatprep.subr.mxu0 0.0
        %1848 = vmatpush2.msra.mxu0 0.0
        %1849 = vmatprep.subr.mxu0 0.0
        %1850 = vmatpush2.msra.mxu0 0.0
        %1851 = vmatprep.subr.mxu0 0.0
        %1852 = vmatpush2.msra.mxu0 0.0
        %1853 = vmatprep.subr.mxu0 0.0
        %1854 = vmatpush2.msra.mxu0 0.0
        %1855 = vmatprep.subr.mxu0 0.0
        %1856 = vmatpush2.msra.mxu0 0.0
        %1857 = vmatprep.subr.mxu0 0.0
        %1858 = vmatpush2.msra.mxu0 0.0
        %1859 = vmatprep.subr.mxu0 0.0
        %1860 = vmatpush2.msra.mxu0 0.0
        %1861 = vmatprep.subr.mxu0 0.0
        %1862 = vmatpush2.msra.mxu0 0.0
        %1863 = vmatprep.subr.mxu0 0.0
        %1864 = vmatpush2.msra.mxu0 0.0
        %1865 = vmatprep.subr.mxu0 0.0
        %1866 = vmatpush2.msra.mxu0 0.0
        %1867 = vmatprep.mubr.f32.mxu0 0.0
        %1868 = vmatmul.mubr.f32.gmra.mxu0 %v1801
        %v1869 = vpop.f32.mrf.mxu0
        %v1870 = vadd.f32 0.0, %v1869
        %v1871 = vpop.f32.mrf.mxu0
        %1872 = vdwg.mxu0
        %1873 = vxpose.xlu0.b32.start [1/16] %v1749, 128
        %1874 = vxpose.xlu0.b32.cont [2/16] %v1765, 128
        %1875 = vxpose.xlu0.b32.cont [3/16] 0.0, 128
        %1876 = vxpose.xlu0.b32.cont [4/16] 0.0, 128
        %1877 = vxpose.xlu0.b32.cont [5/16] 0.0, 128
        %1878 = vxpose.xlu0.b32.cont [6/16] 0.0, 128
        %1879 = vxpose.xlu0.b32.cont [7/16] 0.0, 128
        %1880 = vxpose.xlu0.b32.cont [8/16] 0.0, 128
        %1881 = vxpose.xlu0.b32.cont [9/16] 0.0, 128
        %1882 = vxpose.xlu0.b32.cont [10/16] 0.0, 128
        %1883 = vxpose.xlu0.b32.cont [11/16] 0.0, 128
        %1884 = vxpose.xlu0.b32.cont [12/16] 0.0, 128
        %1885 = vxpose.xlu0.b32.cont [13/16] 0.0, 128
        %1886 = vxpose.xlu0.b32.cont [14/16] 0.0, 128
        %1887 = vxpose.xlu0.b32.cont [15/16] 0.0, 128
        %1888 = vxpose.xlu0.b32.end [16/16] 0.0, 128
        %v1889 = vpop.trf.xlu0
        %v1890 = vpop.trf.xlu0
        %v1891 = vpop.trf.xlu0
        %v1892 = vpop.trf.xlu0
        %v1893 = vpop.trf.xlu0
        %v1894 = vpop.trf.xlu0
        %v1895 = vpop.trf.xlu0
        %v1896 = vpop.trf.xlu0
        %v1897 = vpop.trf.xlu0
        %v1898 = vpop.trf.xlu0
        %v1899 = vpop.trf.xlu0
        %v1900 = vpop.trf.xlu0
        %v1901 = vpop.trf.xlu0
        %v1902 = vpop.trf.xlu0
        %v1903 = vpop.trf.xlu0
        %v1904 = vpop.trf.xlu0
        %v1906 = vsel %vm1198, %v1889, 0
        %1908 = vmatprep.subr.mxu0 0.0
        %1909 = vmatpush1.msra.mxu0 0.0
        %1910 = vmatprep.subr.mxu0 0.0
        %1911 = vmatpush1.msra.mxu0 0.0
        %1912 = vmatprep.subr.mxu0 0.0
        %1913 = vmatpush1.msra.mxu0 0.0
        %1914 = vmatprep.subr.mxu0 0.0
        %1915 = vmatpush1.msra.mxu0 0.0
        %1916 = vmatprep.subr.mxu0 0.0
        %1917 = vmatpush1.msra.mxu0 0.0
        %1918 = vmatprep.subr.mxu0 0.0
        %1919 = vmatpush1.msra.mxu0 0.0
        %1920 = vmatprep.subr.mxu0 0.0
        %1921 = vmatpush1.msra.mxu0 0.0
        %1922 = vmatprep.subr.mxu0 0.0
        %1923 = vmatpush1.msra.mxu0 0.0
        %1924 = vmatprep.subr.mxu0 0.0
        %1925 = vmatpush1.msra.mxu0 0.0
        %1926 = vmatprep.subr.mxu0 0.0
        %1927 = vmatpush1.msra.mxu0 0.0
        %1928 = vmatprep.subr.mxu0 0.0
        %1929 = vmatpush1.msra.mxu0 0.0
        %1930 = vmatprep.subr.mxu0 0.0
        %1931 = vmatpush1.msra.mxu0 0.0
        %1932 = vmatprep.subr.mxu0 0.0
        %1933 = vmatpush1.msra.mxu0 0.0
        %1934 = vmatprep.subr.mxu0 0.0
        %1935 = vmatpush1.msra.mxu0 0.0
        %1936 = vmatprep.subr.mxu0 0.0
        %1937 = vmatpush1.msra.mxu0 %v1757
        %1938 = vmatprep.subr.mxu0 0.0
        %1939 = vmatpush1.msra.mxu0 %v1666
        %1940 = vmatprep.subr.mxu0 0.0
        %1941 = vmatpush2.msra.mxu0 0.0
        %1942 = vmatprep.subr.mxu0 0.0
        %1943 = vmatpush2.msra.mxu0 0.0
        %1944 = vmatprep.subr.mxu0 0.0
        %1945 = vmatpush2.msra.mxu0 0.0
        %1946 = vmatprep.subr.mxu0 0.0
        %1947 = vmatpush2.msra.mxu0 0.0
        %1948 = vmatprep.subr.mxu0 0.0
        %1949 = vmatpush2.msra.mxu0 0.0
        %1950 = vmatprep.subr.mxu0 0.0
        %1951 = vmatpush2.msra.mxu0 0.0
        %1952 = vmatprep.subr.mxu0 0.0
        %1953 = vmatpush2.msra.mxu0 0.0
        %1954 = vmatprep.subr.mxu0 0.0
        %1955 = vmatpush2.msra.mxu0 0.0
        %1956 = vmatprep.subr.mxu0 0.0
        %1957 = vmatpush2.msra.mxu0 0.0
        %1958 = vmatprep.subr.mxu0 0.0
        %1959 = vmatpush2.msra.mxu0 0.0
        %1960 = vmatprep.subr.mxu0 0.0
        %1961 = vmatpush2.msra.mxu0 0.0
        %1962 = vmatprep.subr.mxu0 0.0
        %1963 = vmatpush2.msra.mxu0 0.0
        %1964 = vmatprep.subr.mxu0 0.0
        %1965 = vmatpush2.msra.mxu0 0.0
        %1966 = vmatprep.subr.mxu0 0.0
        %1967 = vmatpush2.msra.mxu0 0.0
        %1968 = vmatprep.subr.mxu0 0.0
        %1969 = vmatpush2.msra.mxu0 0.0
        %1970 = vmatprep.subr.mxu0 0.0
        %1971 = vmatpush2.msra.mxu0 0.0
        %1972 = vmatprep.mubr.f32.mxu0 0.0
        %1973 = vmatmul.mubr.f32.gmra.mxu0 %v1906
        %v1974 = vpop.f32.mrf.mxu0
        %v1975 = vadd.f32 0.0, %v1974
        %v1976 = vpop.f32.mrf.mxu0
        %1977 = vdwg.mxu0
        %v1980 = vcombine.low %v1870, %v1975
        %v1981 = vsel %vm930, %v1980, 0
        %1983 = vmatprep.subr.mxu0 0.0
        %1984 = vmatpush1.msra.mxu0 0.0
        %1985 = vmatprep.subr.mxu0 0.0
        %1986 = vmatpush1.msra.mxu0 0.0
        %1987 = vmatprep.subr.mxu0 0.0
        %1988 = vmatpush1.msra.mxu0 0.0
        %1989 = vmatprep.subr.mxu0 0.0
        %1990 = vmatpush1.msra.mxu0 0.0
        %1991 = vmatprep.subr.mxu0 0.0
        %1992 = vmatpush1.msra.mxu0 0.0
        %1993 = vmatprep.subr.mxu0 0.0
        %1994 = vmatpush1.msra.mxu0 0.0
        %1995 = vmatprep.subr.mxu0 0.0
        %1996 = vmatpush1.msra.mxu0 0.0
        %1997 = vmatprep.subr.mxu0 0.0
        %1998 = vmatpush1.msra.mxu0 0.0
        %1999 = vmatprep.subr.mxu0 0.0
        %2000 = vmatpush1.msra.mxu0 0.0
        %2001 = vmatprep.subr.mxu0 0.0
        %2002 = vmatpush1.msra.mxu0 0.0
        %2003 = vmatprep.subr.mxu0 0.0
        %2004 = vmatpush1.msra.mxu0 0.0
        %2005 = vmatprep.subr.mxu0 0.0
        %2006 = vmatpush1.msra.mxu0 0.0
        %2007 = vmatprep.subr.mxu0 0.0
        %2008 = vmatpush1.msra.mxu0 0.0
        %2009 = vmatprep.subr.mxu0 0.0
        %2010 = vmatpush1.msra.mxu0 0.0
        %2011 = vmatprep.subr.mxu0 0.0
        %2012 = vmatpush1.msra.mxu0 0.0
        %2013 = vmatprep.subr.mxu0 0.0
        %2014 = vmatpush1.msra.mxu0 %v921
        %2015 = vmatprep.subr.mxu0 0.0
        %2016 = vmatpush2.msra.mxu0 0.0
        %2017 = vmatprep.subr.mxu0 0.0
        %2018 = vmatpush2.msra.mxu0 0.0
        %2019 = vmatprep.subr.mxu0 0.0
        %2020 = vmatpush2.msra.mxu0 0.0
        %2021 = vmatprep.subr.mxu0 0.0
        %2022 = vmatpush2.msra.mxu0 0.0
        %2023 = vmatprep.subr.mxu0 0.0
        %2024 = vmatpush2.msra.mxu0 0.0
        %2025 = vmatprep.subr.mxu0 0.0
        %2026 = vmatpush2.msra.mxu0 0.0
        %2027 = vmatprep.subr.mxu0 0.0
        %2028 = vmatpush2.msra.mxu0 0.0
        %2029 = vmatprep.subr.mxu0 0.0
        %2030 = vmatpush2.msra.mxu0 0.0
        %2031 = vmatprep.subr.mxu0 0.0
        %2032 = vmatpush2.msra.mxu0 0.0
        %2033 = vmatprep.subr.mxu0 0.0
        %2034 = vmatpush2.msra.mxu0 0.0
        %2035 = vmatprep.subr.mxu0 0.0
        %2036 = vmatpush2.msra.mxu0 0.0
        %2037 = vmatprep.subr.mxu0 0.0
        %2038 = vmatpush2.msra.mxu0 0.0
        %2039 = vmatprep.subr.mxu0 0.0
        %2040 = vmatpush2.msra.mxu0 0.0
        %2041 = vmatprep.subr.mxu0 0.0
        %2042 = vmatpush2.msra.mxu0 0.0
        %2043 = vmatprep.subr.mxu0 0.0
        %2044 = vmatpush2.msra.mxu0 0.0
        %2045 = vmatprep.subr.mxu0 0.0
        %2046 = vmatpush2.msra.mxu0 0.0
        %2047 = vmatprep.mubr.f32.mxu0 0.0
        %2048 = vmatmul.mubr.f32.gmra.mxu0 %v1981
        %v2049 = vpop.f32.mrf.mxu0
        %v2050 = vadd.f32 0.0, %v2049
        %v2051 = vpop.f32.mrf.mxu0
        %2052 = vdwg.mxu0
        %v2054 = vcombine.high %v2050, %v2050
        %v2056 = vmul.f32 %v2050, %v2050
        %v2057 = vmul.f32 %v2054, %v2054
        %2060 = vrot.lane.b32.xlu0 %v2056, 124
        %v2061 = vpop.permute.xlu0 %2060
        %2062 = vrot.lane.b32.xlu0 %v2057, 124
        %v2063 = vpop.permute.xlu0 %2062
        %v2066 = vadd.f32 %v2056, %v2061
        %v2067 = vadd.f32 %v2057, %v2063
        %v2068 = vrsqrt.pop %v2066
        %v2069 = vmul.f32 %v2066, %v2068
        %vm2070 = vcmp.eq.f32.partialorder %v2066, inf
        %v2071 = vsel %vm2070, %v2066, %v2069
        %vm2072 = vcmp.eq.f32.partialorder %v2066, 0.0
        %v2073 = vand.u32 %v2066, 2147483648
        %v2074 = vsel %vm2072, %v2073, %v2071
        %v2075 = vrsqrt.pop %v2067
        %v2076 = vmul.f32 %v2067, %v2075
        %vm2077 = vcmp.eq.f32.partialorder %v2067, inf
        %v2078 = vsel %vm2077, %v2067, %v2076
        %vm2079 = vcmp.eq.f32.partialorder %v2067, 0.0
        %v2080 = vand.u32 %v2067, 2147483648
        %v2081 = vsel %vm2079, %v2080, %v2078
        %v2082 = vpack.c.bf16 %v2074, %v2074
        %v2083 = vpack.c.bf16 %v2081, %v2081
        %2084 = vrot.lane.b32.xlu0 %v1481, 108
        %v2085 = vpop.permute.xlu0 %2084
        %v2087 = vsel %vm979, %v2085, 0
        %v2090 = vsel %vm1491, %v2082, 0
        %2092 = vmatprep.subr.bf16.mxu0 0
        %2093 = vmatpush1.bf16.msra.mxu0 0
        %2094 = vmatprep.subr.bf16.mxu0 0
        %2095 = vmatpush1.bf16.msra.mxu0 0
        %2096 = vmatprep.subr.bf16.mxu0 0
        %2097 = vmatpush1.bf16.msra.mxu0 0
        %2098 = vmatprep.subr.bf16.mxu0 0
        %2099 = vmatpush1.bf16.msra.mxu0 0
        %2100 = vmatprep.subr.bf16.mxu0 0
        %2101 = vmatpush1.bf16.msra.mxu0 0
        %2102 = vmatprep.subr.bf16.mxu0 0
        %2103 = vmatpush1.bf16.msra.mxu0 0
        %2104 = vmatprep.subr.bf16.mxu0 0
        %2105 = vmatpush1.bf16.msra.mxu0 0
        %2106 = vmatprep.subr.bf16.mxu0 0
        %2107 = vmatpush1.bf16.msra.mxu0 %v2090
        %2108 = vmatprep.subr.bf16.mxu0 0
        %2109 = vmatpush2.bf16.msra.mxu0 0
        %2110 = vmatprep.subr.bf16.mxu0 0
        %2111 = vmatpush2.bf16.msra.mxu0 0
        %2112 = vmatprep.subr.bf16.mxu0 0
        %2113 = vmatpush2.bf16.msra.mxu0 0
        %2114 = vmatprep.subr.bf16.mxu0 0
        %2115 = vmatpush2.bf16.msra.mxu0 0
        %2116 = vmatprep.subr.bf16.mxu0 0
        %2117 = vmatpush2.bf16.msra.mxu0 0
        %2118 = vmatprep.subr.bf16.mxu0 0
        %2119 = vmatpush2.bf16.msra.mxu0 0
        %2120 = vmatprep.subr.bf16.mxu0 0
        %2121 = vmatpush2.bf16.msra.mxu0 0
        %2122 = vmatprep.subr.bf16.mxu0 0
        %2123 = vmatpush2.bf16.msra.mxu0 0
        %2124 = vmatprep.mubr.bf16.mxu0 0
        %2125 = vmatmul.mubr.bf16.gmra.mxu0 %v2087
        %v2126 = vpop.f32.mrf.mxu0
        %v2127 = vadd.f32 0.0, %v2126
        %v2128 = vpop.f32.mrf.mxu0
        %v2129 = vpop.f32.mrf.mxu0
        %v2130 = vpop.f32.mrf.mxu0
        %2131 = vdwg.mxu0
        %2132 = vrot.lane.b32.xlu0 %v1482, 108
        %v2133 = vpop.permute.xlu0 %2132
        %v2135 = vsel %vm979, %v2133, 0
        %v2138 = vsel %vm1491, %v2083, 0
        %2140 = vmatprep.subr.bf16.mxu0 0
        %2141 = vmatpush1.bf16.msra.mxu0 0
        %2142 = vmatprep.subr.bf16.mxu0 0
        %2143 = vmatpush1.bf16.msra.mxu0 0
        %2144 = vmatprep.subr.bf16.mxu0 0
        %2145 = vmatpush1.bf16.msra.mxu0 0
        %2146 = vmatprep.subr.bf16.mxu0 0
        %2147 = vmatpush1.bf16.msra.mxu0 0
        %2148 = vmatprep.subr.bf16.mxu0 0
        %2149 = vmatpush1.bf16.msra.mxu0 0
        %2150 = vmatprep.subr.bf16.mxu0 0
        %2151 = vmatpush1.bf16.msra.mxu0 0
        %2152 = vmatprep.subr.bf16.mxu0 0
        %2153 = vmatpush1.bf16.msra.mxu0 0
        %2154 = vmatprep.subr.bf16.mxu0 0
        %2155 = vmatpush1.bf16.msra.mxu0 %v2138
        %2156 = vmatprep.subr.bf16.mxu0 0
        %2157 = vmatpush2.bf16.msra.mxu0 0
        %2158 = vmatprep.subr.bf16.mxu0 0
        %2159 = vmatpush2.bf16.msra.mxu0 0
        %2160 = vmatprep.subr.bf16.mxu0 0
        %2161 = vmatpush2.bf16.msra.mxu0 0
        %2162 = vmatprep.subr.bf16.mxu0 0
        %2163 = vmatpush2.bf16.msra.mxu0 0
        %2164 = vmatprep.subr.bf16.mxu0 0
        %2165 = vmatpush2.bf16.msra.mxu0 0
        %2166 = vmatprep.subr.bf16.mxu0 0
        %2167 = vmatpush2.bf16.msra.mxu0 0
        %2168 = vmatprep.subr.bf16.mxu0 0
        %2169 = vmatpush2.bf16.msra.mxu0 0
        %2170 = vmatprep.subr.bf16.mxu0 0
        %2171 = vmatpush2.bf16.msra.mxu0 0
        %2172 = vmatprep.mubr.bf16.mxu0 0
        %2173 = vmatmul.mubr.bf16.gmra.mxu0 %v2135
        %v2174 = vpop.f32.mrf.mxu0
        %v2175 = vadd.f32 0.0, %v2174
        %v2176 = vpop.f32.mrf.mxu0
        %v2177 = vpop.f32.mrf.mxu0
        %v2178 = vpop.f32.mrf.mxu0
        %2179 = vdwg.mxu0
        %v2180 = vpack.c.bf16 %v2175, %v2127
        %v2182 = vrot.slane %v1585, 2
        %v2184 = vsel %vm979, %v2180, 0
        %v2187 = vsel %vm1491, %v2182, 0
        %2189 = vmatprep.subr.bf16.mxu0 0
        %2190 = vmatpush1.bf16.msra.mxu0 0
        %2191 = vmatprep.subr.bf16.mxu0 0
        %2192 = vmatpush1.bf16.msra.mxu0 0
        %2193 = vmatprep.subr.bf16.mxu0 0
        %2194 = vmatpush1.bf16.msra.mxu0 0
        %2195 = vmatprep.subr.bf16.mxu0 0
        %2196 = vmatpush1.bf16.msra.mxu0 0
        %2197 = vmatprep.subr.bf16.mxu0 0
        %2198 = vmatpush1.bf16.msra.mxu0 0
        %2199 = vmatprep.subr.bf16.mxu0 0
        %2200 = vmatpush1.bf16.msra.mxu0 0
        %2201 = vmatprep.subr.bf16.mxu0 0
        %2202 = vmatpush1.bf16.msra.mxu0 0
        %2203 = vmatprep.subr.bf16.mxu0 0
        %2204 = vmatpush1.bf16.msra.mxu0 %v2187
        %2205 = vmatprep.subr.bf16.mxu0 0
        %2206 = vmatpush2.bf16.msra.mxu0 0
        %2207 = vmatprep.subr.bf16.mxu0 0
        %2208 = vmatpush2.bf16.msra.mxu0 0
        %2209 = vmatprep.subr.bf16.mxu0 0
        %2210 = vmatpush2.bf16.msra.mxu0 0
        %2211 = vmatprep.subr.bf16.mxu0 0
        %2212 = vmatpush2.bf16.msra.mxu0 0
        %2213 = vmatprep.subr.bf16.mxu0 0
        %2214 = vmatpush2.bf16.msra.mxu0 0
        %2215 = vmatprep.subr.bf16.mxu0 0
        %2216 = vmatpush2.bf16.msra.mxu0 0
        %2217 = vmatprep.subr.bf16.mxu0 0
        %2218 = vmatpush2.bf16.msra.mxu0 0
        %2219 = vmatprep.subr.bf16.mxu0 0
        %2220 = vmatpush2.bf16.msra.mxu0 0
        %2221 = vmatprep.mubr.bf16.mxu0 0
        %2222 = vmatmul.mubr.bf16.gmra.mxu0 %v2184
        %v2223 = vpop.f32.mrf.mxu0
        %v2224 = vadd.f32 0.0, %v2223
        %v2225 = vpop.f32.mrf.mxu0
        %v2226 = vpop.f32.mrf.mxu0
        %v2227 = vadd.f32 0.0, %v2226
        %v2228 = vpop.f32.mrf.mxu0
        %2229 = vdwg.mxu0
        %v2231 = vsel %vm979, %v1584, 0
        %v2234 = vsel %vm1491, %v1585, 0
        %2236 = vmatprep.subr.bf16.mxu0 0
        %2237 = vmatpush1.bf16.msra.mxu0 0
        %2238 = vmatprep.subr.bf16.mxu0 0
        %2239 = vmatpush1.bf16.msra.mxu0 0
        %2240 = vmatprep.subr.bf16.mxu0 0
        %2241 = vmatpush1.bf16.msra.mxu0 0
        %2242 = vmatprep.subr.bf16.mxu0 0
        %2243 = vmatpush1.bf16.msra.mxu0 0
        %2244 = vmatprep.subr.bf16.mxu0 0
        %2245 = vmatpush1.bf16.msra.mxu0 0
        %2246 = vmatprep.subr.bf16.mxu0 0
        %2247 = vmatpush1.bf16.msra.mxu0 0
        %2248 = vmatprep.subr.bf16.mxu0 0
        %2249 = vmatpush1.bf16.msra.mxu0 0
        %2250 = vmatprep.subr.bf16.mxu0 0
        %2251 = vmatpush1.bf16.msra.mxu0 %v2234
        %2252 = vmatprep.subr.bf16.mxu0 0
        %2253 = vmatpush2.bf16.msra.mxu0 0
        %2254 = vmatprep.subr.bf16.mxu0 0
        %2255 = vmatpush2.bf16.msra.mxu0 0
        %2256 = vmatprep.subr.bf16.mxu0 0
        %2257 = vmatpush2.bf16.msra.mxu0 0
        %2258 = vmatprep.subr.bf16.mxu0 0
        %2259 = vmatpush2.bf16.msra.mxu0 0
        %2260 = vmatprep.subr.bf16.mxu0 0
        %2261 = vmatpush2.bf16.msra.mxu0 0
        %2262 = vmatprep.subr.bf16.mxu0 0
        %2263 = vmatpush2.bf16.msra.mxu0 0
        %2264 = vmatprep.subr.bf16.mxu0 0
        %2265 = vmatpush2.bf16.msra.mxu0 0
        %2266 = vmatprep.subr.bf16.mxu0 0
        %2267 = vmatpush2.bf16.msra.mxu0 0
        %2268 = vmatprep.mubr.bf16.mxu0 0
        %2269 = vmatmul.mubr.bf16.gmra.mxu0 %v2231
        %v2270 = vpop.f32.mrf.mxu0
        %v2271 = vadd.f32 %v2224, %v2270
        %v2272 = vpop.f32.mrf.mxu0
        %v2273 = vpop.f32.mrf.mxu0
        %v2274 = vadd.f32 %v2227, %v2273
        %v2275 = vpop.f32.mrf.mxu0
        %2276 = vdwg.mxu0
        %v2278 = vlaneseq
        %v2279 = vshrl.u32 %v2278, 7
        %v2280 = vsub.s32 0, %v2279
        %v2281 = vrot.slane %v912, %v2280
        %v2283 = vadd.f32 %v2271, %v2281
        %v2284 = vadd.f32 %v2274, %v2281
        %v2285 = vadd.f32 %v2283, %v907
        %v2286 = vadd.f32 %v2284, %v908
        %v2287 = vsel %vm930, %v2285, 0.0
        %v2288 = vsel %vm930, %v2286, 0.0
        %v2289 = vadd.f32 %v2287, %v2288
        %2290 = vadd.xlane.f32.xlu0 %v2289
        %v2291 = vpop.xlane.xlu0 %2290
        %v2292 = vrot.slane %v2291, 4
        %v2293 = vadd.f32 %v2291, %v2292
        %v2294 = vrot.slane %v2293, 2
        %v2295 = vadd.f32 %v2293, %v2294
        %v2296 = vrot.slane %v2295, 1
        %v2297 = vadd.f32 %v2295, %v2296
        %s2298 = vtos %v2297
        %v2299 = vmul.f32 %v2285, %v2285
        %v2300 = vmul.f32 %v2286, %v2286
        %v2301 = vsel %vm930, %v2299, 0.0
        %v2302 = vsel %vm930, %v2300, 0.0
        %v2303 = vadd.f32 %v2301, %v2302
        %2304 = vadd.xlane.f32.xlu0 %v2303
        %v2305 = vpop.xlane.xlu0 %2304
        %v2306 = vrot.slane %v2305, 4
        %v2307 = vadd.f32 %v2305, %v2306
        %v2308 = vrot.slane %v2307, 2
        %v2309 = vadd.f32 %v2307, %v2308
        %v2310 = vrot.slane %v2309, 1
        %v2311 = vadd.f32 %v2309, %v2310
        %s2312 = vtos %v2311
        %s2313 = smul.f32 %s2298, %s2298
        %v2314 = vrcp.pop 128.0
        %s2315 = vtos %v2314
        %s2316 = smul.f32 %s2313, %s2315
        %s2317 = ssub.f32 %s2312, %s2316
        %v2318 = vrcp.pop 127.0
        %s2319 = vtos %v2318
        %s2320 = smul.f32 %s2317, %s2319
        %v2321 = vstv %s2320
        %v2322 = vrsqrt.pop %v2321
        %v2323 = vmul.f32 %v2321, %v2322
        %vm2324 = vcmp.eq.f32.partialorder %v2321, inf
        %v2325 = vsel %vm2324, %v2321, %v2323
        %vm2326 = vcmp.eq.f32.partialorder %v2321, 0.0
        %v2327 = vand.u32 %v2321, 2147483648
        %v2328 = vsel %vm2326, %v2327, %v2325
        %s2329 = vtos %v2328
        %v2330 = vstv %s2329
        %v2331 = vadd.f32 %v2330, %v918
        %v2333 = vrot.slane %v2331, 2
        %v2335 = vrcp.pop %v2333
        %v2336 = vmul.f32 %v918, %v2335
        %v2337 = vlaneseq
        %v2338 = vshrl.u32 %v2337, 7
        %v2339 = vsub.s32 0, %v2338
        %v2340 = vrot.slane %v2336, %v2339
        %v2341 = vmul.f32 %v2285, %v2340
        %v2342 = vmul.f32 %v2286, %v2340
        %v2343 = vlaneseq
        %v2344 = vshrl.u32 %v2343, 7
        %v2345 = vsub.s32 1, %v2344
        %v2346 = vrot.slane %v918, %v2345
        %v2347 = vadd.f32 %v2341, %v2346
        %v2348 = vadd.f32 %v2342, %v2346
        %v2349 = vpack.c.bf16 %v2348, %v2347
        %v2350 = vpack.c.bf16 %v913, %v913
        %v2352 = vlaneseq
        %v2353 = vshrl.u32 %v2352, 7
        %v2354 = vsub.s32 0, %v2353
        %v2355 = vrot.slane %v914, %v2354
        %v2358 = vsel %vm930, %v2349, 0
        %v2361 = vsel %vm934, %v2350, 0
        %2363 = vmatprep.subr.bf16.mxu0 0
        %2364 = vmatpush1.bf16.msra.mxu0 0
        %2365 = vmatprep.subr.bf16.mxu0 0
        %2366 = vmatpush1.bf16.msra.mxu0 0
        %2367 = vmatprep.subr.bf16.mxu0 0
        %2368 = vmatpush1.bf16.msra.mxu0 0
        %2369 = vmatprep.subr.bf16.mxu0 0
        %2370 = vmatpush1.bf16.msra.mxu0 0
        %2371 = vmatprep.subr.bf16.mxu0 0
        %2372 = vmatpush1.bf16.msra.mxu0 0
        %2373 = vmatprep.subr.bf16.mxu0 0
        %2374 = vmatpush1.bf16.msra.mxu0 0
        %2375 = vmatprep.subr.bf16.mxu0 0
        %2376 = vmatpush1.bf16.msra.mxu0 0
        %2377 = vmatprep.subr.bf16.mxu0 0
        %2378 = vmatpush1.bf16.msra.mxu0 %v2361
        %2379 = vmatprep.subr.bf16.mxu0 0
        %2380 = vmatpush2.bf16.msra.mxu0 0
        %2381 = vmatprep.subr.bf16.mxu0 0
        %2382 = vmatpush2.bf16.msra.mxu0 0
        %2383 = vmatprep.subr.bf16.mxu0 0
        %2384 = vmatpush2.bf16.msra.mxu0 0
        %2385 = vmatprep.subr.bf16.mxu0 0
        %2386 = vmatpush2.bf16.msra.mxu0 0
        %2387 = vmatprep.subr.bf16.mxu0 0
        %2388 = vmatpush2.bf16.msra.mxu0 0
        %2389 = vmatprep.subr.bf16.mxu0 0
        %2390 = vmatpush2.bf16.msra.mxu0 0
        %2391 = vmatprep.subr.bf16.mxu0 0
        %2392 = vmatpush2.bf16.msra.mxu0 0
        %2393 = vmatprep.subr.bf16.mxu0 0
        %2394 = vmatpush2.bf16.msra.mxu0 0
        %2395 = vmatprep.mubr.bf16.mxu0 0
        %2396 = vmatmul.mubr.bf16.gmra.mxu0 %v2358
        %v2397 = vpop.f32.mrf.mxu0
        %v2398 = vadd.f32 %v2355, %v2397
        %v2399 = vpop.f32.mrf.mxu0
        %v2400 = vpop.f32.mrf.mxu0
        %v2401 = vadd.f32 %v2355, %v2400
        %v2402 = vpop.f32.mrf.mxu0
        %2403 = vdwg.mxu0
        %v2404 = vmul.f32 %v2398, 0.5
        %v2405 = vmul.f32 %v2401, 0.5
        %v2406 = vmul.f32 %v2398, 0.70710677
        %v2407 = vmul.f32 %v2401, 0.70710677
        %v2408 = verf.f32.pop %v2406
        %v2409 = verf.f32.pop %v2407
        %v2410 = vadd.f32 %v2408, 1.0
        %v2411 = vadd.f32 %v2409, 1.0
        %v2412 = vmul.f32 %v2404, %v2410
        %v2413 = vmul.f32 %v2405, %v2411
        %v2414 = vpack.c.bf16 %v2413, %v2412
        %v2415 = vpack.c.bf16 %v916, %v915
        %v2417 = vlaneseq
        %v2418 = vshrl.u32 %v2417, 7
        %v2419 = vsub.s32 0, %v2418
        %v2420 = vrot.slane %v917, %v2419
        %v2423 = vsel %vm1198, %v2414, 0
        %2425 = vmatprep.subr.bf16.mxu0 0
        %2426 = vmatpush1.bf16.msra.mxu0 0
        %2427 = vmatprep.subr.bf16.mxu0 0
        %2428 = vmatpush1.bf16.msra.mxu0 0
        %2429 = vmatprep.subr.bf16.mxu0 0
        %2430 = vmatpush1.bf16.msra.mxu0 0
        %2431 = vmatprep.subr.bf16.mxu0 0
        %2432 = vmatpush1.bf16.msra.mxu0 0
        %2433 = vmatprep.subr.bf16.mxu0 0
        %2434 = vmatpush1.bf16.msra.mxu0 0
        %2435 = vmatprep.subr.bf16.mxu0 0
        %2436 = vmatpush1.bf16.msra.mxu0 0
        %2437 = vmatprep.subr.bf16.mxu0 0
        %2438 = vmatpush1.bf16.msra.mxu0 0
        %2439 = vmatprep.subr.bf16.mxu0 0
        %2440 = vmatpush1.bf16.msra.mxu0 %v2415
        %2441 = vmatprep.subr.bf16.mxu0 0
        %2442 = vmatpush2.bf16.msra.mxu0 0
        %2443 = vmatprep.subr.bf16.mxu0 0
        %2444 = vmatpush2.bf16.msra.mxu0 0
        %2445 = vmatprep.subr.bf16.mxu0 0
        %2446 = vmatpush2.bf16.msra.mxu0 0
        %2447 = vmatprep.subr.bf16.mxu0 0
        %2448 = vmatpush2.bf16.msra.mxu0 0
        %2449 = vmatprep.subr.bf16.mxu0 0
        %2450 = vmatpush2.bf16.msra.mxu0 0
        %2451 = vmatprep.subr.bf16.mxu0 0
        %2452 = vmatpush2.bf16.msra.mxu0 0
        %2453 = vmatprep.subr.bf16.mxu0 0
        %2454 = vmatpush2.bf16.msra.mxu0 0
        %2455 = vmatprep.subr.bf16.mxu0 0
        %2456 = vmatpush2.bf16.msra.mxu0 0
        %2457 = vmatprep.mubr.bf16.mxu0 0
        %2458 = vmatmul.mubr.bf16.gmra.mxu0 %v2423
        %v2459 = vpop.f32.mrf.mxu0
        %v2460 = vadd.f32 %v2420, %v2459
        %v2461 = vpop.f32.mrf.mxu0
        %v2462 = vpop.f32.mrf.mxu0
        %v2463 = vadd.f32 %v2420, %v2462
        %v2464 = vpop.f32.mrf.mxu0
        %2465 = vdwg.mxu0
        %v2466 = vadd.f32 %v2460, %v2347
        %v2467 = vadd.f32 %v2463, %v2348
        %v2468 = vsel %vm930, %v2466, 0.0
        %v2469 = vsel %vm930, %v2467, 0.0
        %v2470 = vadd.f32 %v2468, %v2469
        %2471 = vadd.xlane.f32.xlu0 %v2470
        %v2472 = vpop.xlane.xlu0 %2471
        %v2473 = vrot.slane %v2472, 4
        %v2474 = vadd.f32 %v2472, %v2473
        %v2475 = vrot.slane %v2474, 2
        %v2476 = vadd.f32 %v2474, %v2475
        %v2477 = vrot.slane %v2476, 1
        %v2478 = vadd.f32 %v2476, %v2477
        %s2479 = vtos %v2478
        %v2480 = vmul.f32 %v2466, %v2466
        %v2481 = vmul.f32 %v2467, %v2467
        %v2482 = vsel %vm930, %v2480, 0.0
        %v2483 = vsel %vm930, %v2481, 0.0
        %v2484 = vadd.f32 %v2482, %v2483
        %2485 = vadd.xlane.f32.xlu0 %v2484
        %v2486 = vpop.xlane.xlu0 %2485
        %v2487 = vrot.slane %v2486, 4
        %v2488 = vadd.f32 %v2486, %v2487
        %v2489 = vrot.slane %v2488, 2
        %v2490 = vadd.f32 %v2488, %v2489
        %v2491 = vrot.slane %v2490, 1
        %v2492 = vadd.f32 %v2490, %v2491
        %s2493 = vtos %v2492
        %s2494 = smul.f32 %s2479, %s2479
        %v2495 = vrcp.pop 128.0
        %s2496 = vtos %v2495
        %s2497 = smul.f32 %s2494, %s2496
        %s2498 = ssub.f32 %s2493, %s2497
        %v2499 = vrcp.pop 127.0
        %s2500 = vtos %v2499
        %s2501 = smul.f32 %s2498, %s2500
        %v2502 = vstv %s2501
        %v2503 = vrsqrt.pop %v2502
        %v2504 = vmul.f32 %v2502, %v2503
        %vm2505 = vcmp.eq.f32.partialorder %v2502, inf
        %v2506 = vsel %vm2505, %v2502, %v2504
        %vm2507 = vcmp.eq.f32.partialorder %v2502, 0.0
        %v2508 = vand.u32 %v2502, 2147483648
        %v2509 = vsel %vm2507, %v2508, %v2506
        %s2510 = vtos %v2509
        %v2511 = vstv %s2510
        %v2512 = vadd.f32 %v2511, %v918
        %v2514 = vrot.slane %v2512, 2
        %v2516 = vrcp.pop %v2514
        %v2517 = vmul.f32 %v918, %v2516
        %v2518 = vlaneseq
        %v2519 = vshrl.u32 %v2518, 7
        %v2520 = vsub.s32 3, %v2519
        %v2521 = vrot.slane %v2517, %v2520
        %v2522 = vmul.f32 %v2466, %v2521
        %v2523 = vmul.f32 %v2467, %v2521
        %v2524 = vlaneseq
        %v2525 = vshrl.u32 %v2524, 7
        %v2526 = vsub.s32 4, %v2525
        %v2527 = vrot.slane %v918, %v2526
        %v2528 = vadd.f32 %v2522, %v2527
        %v2529 = vadd.f32 %v2523, %v2527
        %2530 = vst.msk [vmem:[#allocation2] sm:$0xff] %vm930, %v2528
        %2531 = vst.msk [vmem:[#allocation2 + $0x8] sm:$0xff] %vm930, %v2529
        %p2532 = scmp.eq.s32.totalorder %s38, 1
        // Predicated region
        $region125: #{tpu_custom_call.1} parent=91 // pred_check
          %p2533 = pneg %p2532
        $region126: #{tpu_custom_call.1} parent=91 // pred_check_branch
          %2535 = sbr.rel (%p2533) target = $region128
        $region127: #{tpu_custom_call.1} parent=91 // pred_region
          %2536 = vst.msk [vmem:[#allocation15] sm:$0xff] %vm930, %v2528
          %2537 = vst.msk [vmem:[#allocation15 + $0x8] sm:$0xff] %vm930, %v2529
        $region128: #{tpu_custom_call.1} parent=91 // pred_fallthru
          _
        // Predicated region
        $region129: #{tpu_custom_call.1} parent=91 // pred_check
          %p2538 = pneg %p474
        $region130: #{tpu_custom_call.1} parent=91 // pred_check_branch
          %2540 = sbr.rel (%p2538) target = $region132
        $region131: #{tpu_custom_call.1} parent=91 // pred_region
          %s2542 = ssub.s32 256, 256
          %2543 = vsyncadd [#allocation5], %s2542
          %s2544 = sshll.u32 [#allocation15], 4
          %s2545 = int_to_ptr.vmem [resolvable:$true] %s2544
          %2550 = dma.vmem_to_hbm [thread:$0]  %s2545, 256, %s18, [#allocation5], 128, 128, 8
        $region132: #{tpu_custom_call.1} parent=91 // pred_fallthru
          _
        // Predicated region
        $region133: #{tpu_custom_call.1} parent=91 // pred_check
          %p2551 = pneg %p474
        $region134: #{tpu_custom_call.1} parent=91 // pred_check_branch
          %2553 = sbr.rel (%p2551) target = $region136
        $region135: #{tpu_custom_call.1} parent=91 // pred_region
          %2554 = dma.done [#allocation5], 256
        $region136: #{tpu_custom_call.1} parent=91 // pred_fallthru
          _
      $region92: #{tpu_custom_call.1} parent=5 // pred_fallthru
        _
      %p2555 = scmp.le.s32.totalorder 2, %s33
      // Predicated region
      $region137: #{tpu_custom_call.1} parent=5 // pred_check
        %p2556 = pneg %p2555
      $region138: #{tpu_custom_call.1} parent=5 // pred_check_branch
        %2558 = sbr.rel (%p2556) target = $region140
      $region139: #{tpu_custom_call.1} parent=5 // pred_region
        %s2559 = ssub.s32 %s33, 2
      $region140: #{tpu_custom_call.1} parent=5 // pred_fallthru
        _
    $region6: #{tpu_custom_call.1} parent=1 // loop_footer
      %s37 = sadd.s32 1, %s33
    $region7: #{tpu_custom_call.1} parent=1 // loop_footer_branch
      %32 = sbr.rel target = $region3
    $region8: #{tpu_custom_call.1} parent=1 // loop_exit
      _
    %2560 = vsyncpa [#allocation4], 1
    %s2561 = scalar_lea.sflag [#allocation4], 1
    %2562 = vsyncpa %s2561, 1
    %2563 = vsyncpa [#allocation7], 1
    %2564 = vsyncpa [#allocation10], 1
    %s2565 = scalar_lea.sflag [#allocation10], 1
    %2566 = vsyncpa %s2565, 1
    %2567 = vsyncpa [#allocation13], 1
    %s2568 = scalar_lea.sflag [#allocation13], 1
    %2569 = vsyncpa %s2568, 1
    %2570 = vsyncpa [#allocation5], 1
    %s2571 = scalar_lea.sflag [#allocation5], 1
    %2572 = vsyncpa %s2571, 1

</llo_original>
